<compile_context>
chip_gen: v7x
topology: tpu7x:2x2x1
jax: 0.10.0
libtpu: 0.0.40
codegen_flags: <defaults>
</compile_context>

<pallas_src>
import functools

import numpy as np
import jax
import jax.numpy as jnp
from jax import lax
from jax.experimental import pallas as pl
from jax.experimental.pallas import tpu as pltpu


# --------------------------------------------------------------------------
# Deterministic parameter init: scipy.ndimage.gaussian_filter applied to a
# delta image is exactly separable: k2d == outer(v, v) with v the 1D pass of a
# 1D delta (reflect boundary).  Reproduce v without scipy.
# --------------------------------------------------------------------------
def gaussian_taps_1d(filter_size: int, sigma: float, truncate: float = 4.0):
    delta = np.zeros(filter_size, dtype=np.float64)
    delta[filter_size // 2] = 1.0

    radius = int(truncate * sigma + 0.5)
    x = np.arange(-radius, radius + 1, dtype=np.float64)
    w = np.exp(-0.5 * (x / sigma) ** 2)
    w /= w.sum()

    # scipy mode='reflect' == numpy 'symmetric' (edge value duplicated)
    padded = np.pad(delta, (radius, radius), mode="symmetric")
    v = np.convolve(padded, w, mode="valid")  # w symmetric -> conv == corr
    return v.astype(np.float32)


def _reflect_index(idx: int, n: int) -> int:
    # torch.nn.ReflectionPad2d semantics: edge sample NOT duplicated.
    if idx < 0:
        idx = -idx
    if idx >= n:
        idx = 2 * (n - 1) - idx
    return idx


def _banded_reflect_matrix(n: int, taps) -> np.ndarray:
    """M (n x n) with M[src, j] = total tap weight of source `src` for output
    position j, i.e. (signal @ M) == reflect-padded 1-D Gaussian pass.  The
    reflection boundary is folded into the first/last `pad` columns."""
    fs = len(taps)
    pad = fs // 2
    m = np.zeros((n, n), dtype=np.float32)
    for j in range(n):
        for d in range(fs):
            src = _reflect_index(j - pad + d, n)
            m[src, j] += taps[d]
    return m


# --------------------------------------------------------------------------
# Pallas kernel: one (G, H, W) block of images per grid step.  Separable
# Gaussian as two MXU matmuls against resident, reflection-folded banded
# matrices; f32 accumulation; no padded intermediates, no cross-lane shifts.
# --------------------------------------------------------------------------
def _gaussian_kernel_body(x_ref, a_ref, b_ref, o_ref, *, G, H, W):
    # ---- W (lane) pass on the MXU: rows are independent, so flatten (G, H).
    # The dtype upcast (e.g. bf16 input) is folded into the matmul.
    x2 = x_ref[...].reshape(G * H, W)
    th = jnp.dot(
        x2, b_ref[...],
        preferred_element_type=jnp.float32,
        precision=lax.Precision.HIGHEST,
    ).reshape(G, H, W)

    # ---- H (sublane) pass: batched matmul  out[g] = A @ th[g].
    out = jnp.einsum(
        "gik,gkw->giw", a_ref[...], th,
        preferred_element_type=jnp.float32,
        precision=lax.Precision.HIGHEST,
    )
    o_ref[...] = out.astype(o_ref.dtype)


def _num_tensorcores() -> int:
    """Best-effort TensorCores-per-chip count (v7x: 2, v5e/v6e: 1)."""
    try:
        info = pltpu.get_tpu_info()
        for attr in ("num_cores", "core_count", "num_tensorcores", "tensorcore_count"):
            v = getattr(info, attr, None)
            if isinstance(v, int) and v > 0:
                return v
    except Exception:
        pass
    return 1


def _pick_group(nc: int, h: int, w: int, itemsize: int, n_cores: int) -> int:
    """Largest per-block image count G under a VMEM budget.  On multi-TC chips
    keep at least `n_cores` grid steps so the 'parallel' axis feeds every core;
    on single-TC chips just take the biggest block (fewer ~0.35us steps)."""
    per_in = h * w * itemsize         # one image of x / y
    per_f32 = h * w * 4               # one f32 intermediate image
    per_a = h * h * 4                 # one batch slice of the resident A matrix
    b_bytes = w * w * 4
    payload_cap = 8 << 20             # x payload per block (amortizes step overhead)
    vmem_cap = 36 << 20               # conservative vs v7x's 64 MiB physical VMEM

    def fits(g: int) -> bool:
        est = (2 * g * per_in         # double-buffered input blocks
               + 2 * g * per_in       # double-buffered output blocks
               + 2 * g * per_a        # resident A (counted double-buffered)
               + 2 * b_bytes          # resident B
               + 4 * g * per_f32)     # f32 intermediates + headroom
        return g * per_in <= payload_cap and est <= vmem_cap

    g = 1
    while g < nc and fits(g + 1):
        g += 1
    if n_cores > 1:                   # v7x: keep both TensorCores busy
        while g > 1 and pl.cdiv(nc, g) < n_cores:
            g -= 1
    return g


def make_gaussian_filter(n_layers: int, filter_size: int, sigma: float):
    fs = filter_size
    assert fs % 2 == 1, "GaussianFilterLayer only makes sense with odd filter_size"
    pad = fs // 2

    v = gaussian_taps_1d(fs, sigma)
    taps = tuple(float(t) for t in v)                      # compile-time constants
    k2d = jnp.asarray(np.outer(v, v).astype(np.float32))   # module-equivalent weights

    def forward(x):
        # x: (N, C, H, W), C == n_layers
        N, C, H, W = x.shape
        assert C == n_layers
        assert H > pad and W > pad, "reflection pad requires pad < spatial dims"

        nc = N * C
        x_flat = x.reshape(nc, H, W)                       # free reshape (no copy)
        G = _pick_group(nc, H, W, x.dtype.itemsize, _num_tensorcores())

        # Banded reflection-folded operators.  _banded_reflect_matrix returns
        # M with (signal @ M) == 1-D pass, so the W (lane) pass uses M directly
        # and the H (sublane) pass uses M^T (out[g] = A @ X[g]).
        b_mat = jnp.asarray(_banded_reflect_matrix(W, taps))            # (W, W)
        a_mat = jnp.asarray(_banded_reflect_matrix(H, taps).T.copy())   # (H, H)
        a_b = jnp.broadcast_to(a_mat, (G, H, H))           # resident batched A

        body = functools.partial(_gaussian_kernel_body, G=G, H=H, W=W)

        # TODO(synk): for single images too large for the VMEM budget, add a
        # second grid axis over H with a 2*pad-row halo (and matching A tiles)
        # so one image never has to be a single block (v7x: 64 MiB VMEM).
        out_flat = pl.pallas_call(
            body,
            out_shape=jax.ShapeDtypeStruct((nc, H, W), x.dtype),
            grid_spec=pltpu.PrefetchScalarGridSpec(
                num_scalar_prefetch=0,
                grid=(pl.cdiv(nc, G),),          # ragged last block is safe
                in_specs=[
                    pl.BlockSpec((G, H, W), lambda i: (i, 0, 0)),
                    pl.BlockSpec((G, H, H), lambda i: (0, 0, 0)),  # resident A
                    pl.BlockSpec((W, W), lambda i: (0, 0)),        # resident B
                ],
                out_specs=pl.BlockSpec((G, H, W), lambda i: (i, 0, 0)),
            ),
            compiler_params=pltpu.CompilerParams(
                dimension_semantics=("parallel",),
                # above the 32 MiB default, still safe on v7x's 64 MiB physical
                vmem_limit_bytes=48 * 1024 * 1024,
            ),
        )(x_flat, a_b, b_mat)

        return out_flat.reshape(N, C, H, W)

    return forward, k2d


# --------------------------------------------------------------------------
# Pure-JAX reference: reflection pad + depthwise 2D conv with outer(v, v).
# --------------------------------------------------------------------------
def reference_forward(x, k2d, n_layers, filter_size):
    pad = filter_size // 2
    xp = jnp.pad(x, ((0, 0), (0, 0), (pad, pad), (pad, pad)), mode="reflect")
    w = jnp.broadcast_to(k2d, (n_layers, 1, filter_size, filter_size))
    return lax.conv_general_dilated(
        xp, w,
        window_strides=(1, 1),
        padding="VALID",
        dimension_numbers=("NCHW", "OIHW", "NCHW"),
        feature_group_count=n_layers,
        precision=lax.Precision.HIGHEST,
    )


if __name__ == "__main__":
    n_layers = 4
    filter_size = 5
    sigma = 1.0

    N, C, H, W = 2, n_layers, 16, 16
    x = jax.random.normal(jax.random.PRNGKey(0), (N, C, H, W), dtype=jnp.float32)

    forward, k2d = make_gaussian_filter(n_layers, filter_size, sigma)

    y = forward(x)
    jax.block_until_ready(y)

    y_ref = reference_forward(x, k2d, n_layers, filter_size)
    assert y.shape == (N, C, H, W)
    assert jnp.allclose(y, y_ref, atol=1e-5, rtol=1e-5)

    print("KERNEL_OK")
</pallas_src>

<mosaic_0001>
module attributes {stable_mosaic.version = 11 : i64} {
  func.func @_gaussian_kernel_body(%arg0: i32, %arg1: memref<8x16x16xf32, #tpu.memory_space<vmem>>, %arg2: memref<8x16x16xf32, #tpu.memory_space<vmem>>, %arg3: memref<16x16xf32, #tpu.memory_space<vmem>>, %arg4: memref<8x16x16xf32, #tpu.memory_space<vmem>>) attributes {dimension_semantics = [#tpu.dimension_semantics<parallel>], iteration_bounds = array<i64: 1>, scalar_prefetch = 0 : i64, scratch_operands = 0 : i64, tpu.core_type = #tpu.core_type<tc>, window_params = [{transform_indices = @transform_0, window_bounds = array<i64: 8, 16, 16>}, {pipeline_mode = #tpu.pipeline_mode<synchronous>, transform_indices = @transform_1, window_bounds = array<i64: 8, 16, 16>}, {pipeline_mode = #tpu.pipeline_mode<synchronous>, transform_indices = @transform_2, window_bounds = array<i64: 16, 16>}, {transform_indices = @transform_3, window_bounds = array<i64: 8, 16, 16>}]} {
    %c0 = arith.constant 0 : index
    %c0_0 = arith.constant 0 : index
    %c0_1 = arith.constant 0 : index
    %0 = vector.load %arg1[%c0, %c0_0, %c0_1] : memref<8x16x16xf32, #tpu.memory_space<vmem>>, vector<8x16x16xf32>
    %1 = vector.shape_cast %0 : vector<8x16x16xf32> to vector<128x16xf32>
    %c0_2 = arith.constant 0 : index
    %c0_3 = arith.constant 0 : index
    %2 = vector.load %arg3[%c0_2, %c0_3] : memref<16x16xf32, #tpu.memory_space<vmem>>, vector<16x16xf32>
    %cst = arith.constant dense<0.000000e+00> : vector<128x16xf32>
    %3 = tpu.matmul %1, %2, %cst {dimension_numbers = #tpu.dot_dimension_numbers<[1], [0], [0], [1], [0, 0, 1, 1], [], []>, precision = #tpu.contract_precision<fp32>} : vector<128x16xf32>, vector<16x16xf32>, vector<128x16xf32> -> vector<128x16xf32>
    %4 = vector.shape_cast %3 : vector<128x16xf32> to vector<8x16x16xf32>
    %c0_4 = arith.constant 0 : index
    %c0_5 = arith.constant 0 : index
    %c0_6 = arith.constant 0 : index
    %5 = vector.load %arg2[%c0_4, %c0_5, %c0_6] : memref<8x16x16xf32, #tpu.memory_space<vmem>>, vector<8x16x16xf32>
    "tpu.trace_start"() <{level = 10 : i32, message = "gik,gkw->giw"}> : () -> ()
    %cst_7 = arith.constant dense<0.000000e+00> : vector<8x16x16xf32>
    %6 = tpu.matmul %5, %4, %cst_7 {dimension_numbers = #tpu.dot_dimension_numbers<[2], [1], [1], [2], [0, 0, 0, 1, 1, 2], [0], [0]>, precision = #tpu.contract_precision<fp32>} : vector<8x16x16xf32>, vector<8x16x16xf32>, vector<8x16x16xf32> -> vector<8x16x16xf32>
    "tpu.trace_stop"() : () -> ()
    %c0_8 = arith.constant 0 : index
    %c0_9 = arith.constant 0 : index
    %c0_10 = arith.constant 0 : index
    %7 = vector.load %arg4[%c0_8, %c0_9, %c0_10] : memref<8x16x16xf32, #tpu.memory_space<vmem>>, vector<8x16x16xf32>
    tpu.vector_store %arg4[%c0_8, %c0_9, %c0_10], %6 {strides = array<i32>} : memref<8x16x16xf32, #tpu.memory_space<vmem>>, vector<8x16x16xf32>,
    return
  }
  func.func @transform_0(%arg0: i32) -> (i32, i32, i32) {
    %c0_i32 = arith.constant 0 : i32
    %c0_i32_0 = arith.constant 0 : i32
    %c0_i32_1 = arith.constant 0 : i32
    return %arg0, %c0_i32, %c0_i32_0 : i32, i32, i32
  }
  func.func @transform_1(%arg0: i32) -> (i32, i32, i32) {
    %c0_i32 = arith.constant 0 : i32
    %c0_i32_0 = arith.constant 0 : i32
    %c0_i32_1 = arith.constant 0 : i32
    %c0_i32_2 = arith.constant 0 : i32
    return %c0_i32, %c0_i32_0, %c0_i32_1 : i32, i32, i32
  }
  func.func @transform_2(%arg0: i32) -> (i32, i32) {
    %c0_i32 = arith.constant 0 : i32
    %c0_i32_0 = arith.constant 0 : i32
    %c0_i32_1 = arith.constant 0 : i32
    return %c0_i32, %c0_i32_0 : i32, i32
  }
  func.func @transform_3(%arg0: i32) -> (i32, i32, i32) {
    %c0_i32 = arith.constant 0 : i32
    %c0_i32_0 = arith.constant 0 : i32
    %c0_i32_1 = arith.constant 0 : i32
    return %arg0, %c0_i32, %c0_i32_0 : i32, i32, i32
  }
}

</mosaic_0001>

<llo_original>
// kernel: tpu_custom_call.1
$region0: #{tpu_custom_call.1}
  #allocation0 [shape = 'u32[]', space=smem, size = 0x4, offset = 0x4, fixed_abs, tag = 'smem constant byte address 0x4 - core index']
  #allocation1 [shape = 'u32[144,128]{1,0:T(1,128)}', space=vmem, size = 0x12000, scoped, tag = 'internal scratch']
  %s0 = inlined_call_operand.hbm [shape: f32[8,16,16], index: 0, kind: input, shape index: {}]
  %s1 = inlined_call_operand.hbm [shape: f32[8,16,16], index: 1, kind: input, shape index: {}]
  %s2 = inlined_call_operand.hbm [shape: f32[16,16], index: 2, kind: input, shape index: {}]
  %s3 = inlined_call_operand.hbm [shape: f32[8,16,16], index: 3, kind: output, shape index: {}]
  %s4 = sld [smem:[#allocation0]]
  $region34: #{tpu_custom_call.1} parent=0
    _
  %s6 = ssub.s32 1, %s4
  %s7 = scalar_select 0, %s6, %s4
  $region1: #{tpu_custom_call.1} parent=0
    #allocation2 [shape = 'u8[65536]{0}', space=vmem, size = 0x10000, scoped, tag = 'input window, operand 0, single buffered']
    #allocation3 [shape = 's32[1]{0}', space=sflag, size = 0x4, scoped, tag = 'scoped memory for tpu_custom_call.1']
    #allocation4 [shape = 's32[1]{0}', space=sflag, size = 0x4, scoped, tag = 'scoped memory for tpu_custom_call.1']
    #allocation5 [shape = 'u8[65536]{0}', space=vmem, size = 0x10000, scoped, tag = 'input window, operand 1, single buffered']
    #allocation6 [shape = 's32[1]{0}', space=sflag, size = 0x4, scoped, tag = 'scoped memory for tpu_custom_call.1']
    #allocation7 [shape = 'u8[8192]{0}', space=vmem, size = 0x2000, scoped, tag = 'input window, operand 2, single buffered']
    #allocation8 [shape = 'u8[65536]{0}', space=vmem, size = 0x10000, scoped, tag = 'output window, operand 0, single buffered']
    %8 = vsyncpa [#allocation3], 0
    %9 = vsyncpa [#allocation6], 0
    %10 = vsyncpa [#allocation4], 0
    // Predicated region
    $region2: #{tpu_custom_call.1} parent=1 // pred_check
      _
    $region3: #{tpu_custom_call.1} parent=1 // pred_check_branch
      %12 = sbr.rel (0) target = $region5
    $region4: #{tpu_custom_call.1} parent=1 // pred_region
      %s14 = ssub.s32 2048, 2048
      %15 = vsyncadd [#allocation3], %s14
      %s16 = sshll.u32 [#allocation2], 4
      %s17 = int_to_ptr.vmem [resolvable:$true] %s16
      %22 = dma.hbm_to_vmem [thread:$0]  %s0, 2048, %s17, [#allocation3], 128, 128, 8
    $region5: #{tpu_custom_call.1} parent=1 // pred_fallthru
      _
    // Predicated region
    $region6: #{tpu_custom_call.1} parent=1 // pred_check
      _
    $region7: #{tpu_custom_call.1} parent=1 // pred_check_branch
      %24 = sbr.rel (0) target = $region9
    $region8: #{tpu_custom_call.1} parent=1 // pred_region
      %s26 = ssub.s32 2048, 2048
      %27 = vsyncadd [#allocation6], %s26
      %s28 = sshll.u32 [#allocation5], 4
      %s29 = int_to_ptr.vmem [resolvable:$true] %s28
      %34 = dma.hbm_to_vmem [thread:$0]  %s1, 2048, %s29, [#allocation6], 128, 128, 8
    $region9: #{tpu_custom_call.1} parent=1 // pred_fallthru
      _
    // Predicated region
    $region10: #{tpu_custom_call.1} parent=1 // pred_check
      _
    $region11: #{tpu_custom_call.1} parent=1 // pred_check_branch
      %36 = sbr.rel (0) target = $region13
    $region12: #{tpu_custom_call.1} parent=1 // pred_region
      %s38 = ssub.s32 256, 256
      %39 = vsyncadd [#allocation6], %s38
      %s40 = sshll.u32 [#allocation7], 4
      %s41 = int_to_ptr.vmem [resolvable:$true] %s40
      %46 = dma.hbm_to_vmem [thread:$0]  %s2, 256, %s41, [#allocation6], 128, 128, 8
    $region13: #{tpu_custom_call.1} parent=1 // pred_fallthru
      _
    // Predicated region
    $region14: #{tpu_custom_call.1} parent=1 // pred_check
      _
    $region15: #{tpu_custom_call.1} parent=1 // pred_check_branch
      %48 = sbr.rel (0) target = $region17
    $region16: #{tpu_custom_call.1} parent=1 // pred_region
      %49 = dma.done [#allocation3], 2048
    $region17: #{tpu_custom_call.1} parent=1 // pred_fallthru
      _
    // Predicated region
    $region18: #{tpu_custom_call.1} parent=1 // pred_check
      _
    $region19: #{tpu_custom_call.1} parent=1 // pred_check_branch
      %51 = sbr.rel (0) target = $region21
    $region20: #{tpu_custom_call.1} parent=1 // pred_region
      %52 = dma.done [#allocation6], 2048
    $region21: #{tpu_custom_call.1} parent=1 // pred_fallthru
      _
    // Predicated region
    $region22: #{tpu_custom_call.1} parent=1 // pred_check
      _
    $region23: #{tpu_custom_call.1} parent=1 // pred_check_branch
      %54 = sbr.rel (0) target = $region25
    $region24: #{tpu_custom_call.1} parent=1 // pred_region
      %55 = dma.done [#allocation6], 256
    $region25: #{tpu_custom_call.1} parent=1 // pred_fallthru
      _
    %v56 = vld [vmem:[#allocation2] sm:$0xff]
    %v57 = vld [vmem:[#allocation2 + $0x8] sm:$0xff]
    %v58 = vld [vmem:[#allocation2 + $0x10] sm:$0xff]
    %v59 = vld [vmem:[#allocation2 + $0x18] sm:$0xff]
    %v60 = vld [vmem:[#allocation2 + $0x20] sm:$0xff]
    %v61 = vld [vmem:[#allocation2 + $0x28] sm:$0xff]
    %v62 = vld [vmem:[#allocation2 + $0x30] sm:$0xff]
    %v63 = vld [vmem:[#allocation2 + $0x38] sm:$0xff]
    %v64 = vld [vmem:[#allocation2 + $0x40] sm:$0xff]
    %v65 = vld [vmem:[#allocation2 + $0x48] sm:$0xff]
    %v66 = vld [vmem:[#allocation2 + $0x50] sm:$0xff]
    %v67 = vld [vmem:[#allocation2 + $0x58] sm:$0xff]
    %v68 = vld [vmem:[#allocation2 + $0x60] sm:$0xff]
    %v69 = vld [vmem:[#allocation2 + $0x68] sm:$0xff]
    %v70 = vld [vmem:[#allocation2 + $0x70] sm:$0xff]
    %v71 = vld [vmem:[#allocation2 + $0x78] sm:$0xff]
    %v72 = vld [vmem:[#allocation7] sm:$0xff]
    %v73 = vld [vmem:[#allocation7 + $0x8] sm:$0xff]
    %vm74 = vcmask 130048
    %v76 = vsel %vm74, %v56, 0
    %v79 = vsel %vm74, %v57, 0
    %v82 = vsel %vm74, %v58, 0
    %v85 = vsel %vm74, %v59, 0
    %v88 = vsel %vm74, %v60, 0
    %v91 = vsel %vm74, %v61, 0
    %v94 = vsel %vm74, %v62, 0
    %v97 = vsel %vm74, %v63, 0
    %v100 = vsel %vm74, %v64, 0
    %v103 = vsel %vm74, %v65, 0
    %v106 = vsel %vm74, %v66, 0
    %v109 = vsel %vm74, %v67, 0
    %v112 = vsel %vm74, %v68, 0
    %v115 = vsel %vm74, %v69, 0
    %v118 = vsel %vm74, %v70, 0
    %v121 = vsel %vm74, %v71, 0
    %123 = vmatprep.subr.mxu0 0.0
    %v124 = vand.u32 %v72, 4294901760
    %125 = vmatpush1.msra.mxu0 %v124
    %126 = vmatprep.subr.mxu0 0.0
    %v127 = vand.u32 %v73, 4294901760
    %128 = vmatpush1.msra.mxu0 %v127
    %129 = vmatprep.subr.mxu0 0.0
    %130 = vmatpush1.msra.mxu0 0.0
    %131 = vmatprep.subr.mxu0 0.0
    %132 = vmatpush1.msra.mxu0 0.0
    %133 = vmatprep.subr.mxu0 0.0
    %134 = vmatpush1.msra.mxu0 0.0
    %135 = vmatprep.subr.mxu0 0.0
    %136 = vmatpush1.msra.mxu0 0.0
    %137 = vmatprep.subr.mxu0 0.0
    %138 = vmatpush1.msra.mxu0 0.0
    %139 = vmatprep.subr.mxu0 0.0
    %140 = vmatpush1.msra.mxu0 0.0
    %141 = vmatprep.subr.mxu0 0.0
    %142 = vmatpush1.msra.mxu0 0.0
    %143 = vmatprep.subr.mxu0 0.0
    %144 = vmatpush1.msra.mxu0 0.0
    %145 = vmatprep.subr.mxu0 0.0
    %146 = vmatpush1.msra.mxu0 0.0
    %147 = vmatprep.subr.mxu0 0.0
    %148 = vmatpush1.msra.mxu0 0.0
    %149 = vmatprep.subr.mxu0 0.0
    %150 = vmatpush1.msra.mxu0 0.0
    %151 = vmatprep.subr.mxu0 0.0
    %152 = vmatpush1.msra.mxu0 0.0
    %153 = vmatprep.subr.mxu0 0.0
    %154 = vmatpush1.msra.mxu0 0.0
    %155 = vmatprep.subr.mxu0 0.0
    %156 = vmatpush1.msra.mxu0 0.0
    %157 = vmatprep.subr.mxu0 0.0
    %158 = vmatpush1.msra.mxu0 0.0
    %159 = vmatprep.subr.mxu0 0.0
    %160 = vmatpush1.msra.mxu0 0.0
    %161 = vmatprep.subr.mxu0 0.0
    %162 = vmatpush1.msra.mxu0 0.0
    %163 = vmatprep.subr.mxu0 0.0
    %164 = vmatpush1.msra.mxu0 0.0
    %165 = vmatprep.subr.mxu0 0.0
    %166 = vmatpush1.msra.mxu0 0.0
    %167 = vmatprep.subr.mxu0 0.0
    %168 = vmatpush1.msra.mxu0 0.0
    %169 = vmatprep.subr.mxu0 0.0
    %170 = vmatpush1.msra.mxu0 0.0
    %171 = vmatprep.subr.mxu0 0.0
    %172 = vmatpush1.msra.mxu0 0.0
    %173 = vmatprep.subr.mxu0 0.0
    %174 = vmatpush1.msra.mxu0 0.0
    %175 = vmatprep.subr.mxu0 0.0
    %176 = vmatpush1.msra.mxu0 0.0
    %177 = vmatprep.subr.mxu0 0.0
    %178 = vmatpush1.msra.mxu0 0.0
    %179 = vmatprep.subr.mxu0 0.0
    %180 = vmatpush1.msra.mxu0 0.0
    %181 = vmatprep.subr.mxu0 0.0
    %182 = vmatpush1.msra.mxu0 0.0
    %183 = vmatprep.subr.mxu0 0.0
    %184 = vmatpush1.msra.mxu0 0.0
    %185 = vmatprep.subr.mxu0 0.0
    %186 = vmatpush1.msra.mxu0 0.0
    %187 = vmatprep.subr.mxu0 0.0
    %188 = vmatpush1.msra.mxu0 0.0
    %189 = vmatprep.mubr.f32.mxu0 0.0
    %v190 = vand.u32 %v76, 4294901760
    %v191 = vsub.f32 %v76, %v190
    %v192 = vand.u32 %v191, 4294901760
    %v193 = vsub.f32 %v191, %v192
    %v194 = vand.u32 %v193, 4294901760
    %195 = vmatmul.mubr.f32.gmra.mrb[0].mxu0 %v194
    %v196 = vpop.f32.mrb[0].mxu0
    %v197 = vadd.f32 0.0, %v196
    %v198 = vpop.f32.mrb[0].mxu0
    %199 = vmatprep.mubr.f32.mxu0 0.0
    %v200 = vand.u32 %v79, 4294901760
    %v201 = vsub.f32 %v79, %v200
    %v202 = vand.u32 %v201, 4294901760
    %v203 = vsub.f32 %v201, %v202
    %v204 = vand.u32 %v203, 4294901760
    %205 = vmatmul.mubr.f32.gmra.mrb[0].mxu0 %v204
    %v206 = vpop.f32.mrb[0].mxu0
    %v207 = vadd.f32 0.0, %v206
    %v208 = vpop.f32.mrb[0].mxu0
    %209 = vmatprep.mubr.f32.mxu0 0.0
    %v210 = vand.u32 %v82, 4294901760
    %v211 = vsub.f32 %v82, %v210
    %v212 = vand.u32 %v211, 4294901760
    %v213 = vsub.f32 %v211, %v212
    %v214 = vand.u32 %v213, 4294901760
    %215 = vmatmul.mubr.f32.gmra.mrb[0].mxu0 %v214
    %v216 = vpop.f32.mrb[0].mxu0
    %v217 = vadd.f32 0.0, %v216
    %v218 = vpop.f32.mrb[0].mxu0
    %219 = vmatprep.mubr.f32.mxu0 0.0
    %v220 = vand.u32 %v85, 4294901760
    %v221 = vsub.f32 %v85, %v220
    %v222 = vand.u32 %v221, 4294901760
    %v223 = vsub.f32 %v221, %v222
    %v224 = vand.u32 %v223, 4294901760
    %225 = vmatmul.mubr.f32.gmra.mrb[0].mxu0 %v224
    %v226 = vpop.f32.mrb[0].mxu0
    %v227 = vadd.f32 0.0, %v226
    %v228 = vpop.f32.mrb[0].mxu0
    %229 = vmatprep.mubr.f32.mxu0 0.0
    %v230 = vand.u32 %v88, 4294901760
    %v231 = vsub.f32 %v88, %v230
    %v232 = vand.u32 %v231, 4294901760
    %v233 = vsub.f32 %v231, %v232
    %v234 = vand.u32 %v233, 4294901760
    %235 = vmatmul.mubr.f32.gmra.mrb[0].mxu0 %v234
    %v236 = vpop.f32.mrb[0].mxu0
    %v237 = vadd.f32 0.0, %v236
    %v238 = vpop.f32.mrb[0].mxu0
    %239 = vmatprep.mubr.f32.mxu0 0.0
    %v240 = vand.u32 %v91, 4294901760
    %v241 = vsub.f32 %v91, %v240
    %v242 = vand.u32 %v241, 4294901760
    %v243 = vsub.f32 %v241, %v242
    %v244 = vand.u32 %v243, 4294901760
    %245 = vmatmul.mubr.f32.gmra.mrb[0].mxu0 %v244
    %v246 = vpop.f32.mrb[0].mxu0
    %v247 = vadd.f32 0.0, %v246
    %v248 = vpop.f32.mrb[0].mxu0
    %249 = vmatprep.mubr.f32.mxu0 0.0
    %v250 = vand.u32 %v94, 4294901760
    %v251 = vsub.f32 %v94, %v250
    %v252 = vand.u32 %v251, 4294901760
    %v253 = vsub.f32 %v251, %v252
    %v254 = vand.u32 %v253, 4294901760
    %255 = vmatmul.mubr.f32.gmra.mrb[0].mxu0 %v254
    %v256 = vpop.f32.mrb[0].mxu0
    %v257 = vadd.f32 0.0, %v256
    %v258 = vpop.f32.mrb[0].mxu0
    %259 = vmatprep.mubr.f32.mxu0 0.0
    %v260 = vand.u32 %v97, 4294901760
    %v261 = vsub.f32 %v97, %v260
    %v262 = vand.u32 %v261, 4294901760
    %v263 = vsub.f32 %v261, %v262
    %v264 = vand.u32 %v263, 4294901760
    %265 = vmatmul.mubr.f32.gmra.mrb[0].mxu0 %v264
    %v266 = vpop.f32.mrb[0].mxu0
    %v267 = vadd.f32 0.0, %v266
    %v268 = vpop.f32.mrb[0].mxu0
    %269 = vmatprep.mubr.f32.mxu0 0.0
    %v270 = vand.u32 %v100, 4294901760
    %v271 = vsub.f32 %v100, %v270
    %v272 = vand.u32 %v271, 4294901760
    %v273 = vsub.f32 %v271, %v272
    %v274 = vand.u32 %v273, 4294901760
    %275 = vmatmul.mubr.f32.gmra.mrb[0].mxu0 %v274
    %v276 = vpop.f32.mrb[0].mxu0
    %v277 = vadd.f32 0.0, %v276
    %v278 = vpop.f32.mrb[0].mxu0
    %279 = vmatprep.mubr.f32.mxu0 0.0
    %v280 = vand.u32 %v103, 4294901760
    %v281 = vsub.f32 %v103, %v280
    %v282 = vand.u32 %v281, 4294901760
    %v283 = vsub.f32 %v281, %v282
    %v284 = vand.u32 %v283, 4294901760
    %285 = vmatmul.mubr.f32.gmra.mrb[0].mxu0 %v284
    %v286 = vpop.f32.mrb[0].mxu0
    %v287 = vadd.f32 0.0, %v286
    %v288 = vpop.f32.mrb[0].mxu0
    %289 = vmatprep.mubr.f32.mxu0 0.0
    %v290 = vand.u32 %v106, 4294901760
    %v291 = vsub.f32 %v106, %v290
    %v292 = vand.u32 %v291, 4294901760
    %v293 = vsub.f32 %v291, %v292
    %v294 = vand.u32 %v293, 4294901760
    %295 = vmatmul.mubr.f32.gmra.mrb[0].mxu0 %v294
    %v296 = vpop.f32.mrb[0].mxu0
    %v297 = vadd.f32 0.0, %v296
    %v298 = vpop.f32.mrb[0].mxu0
    %299 = vmatprep.mubr.f32.mxu0 0.0
    %v300 = vand.u32 %v109, 4294901760
    %v301 = vsub.f32 %v109, %v300
    %v302 = vand.u32 %v301, 4294901760
    %v303 = vsub.f32 %v301, %v302
    %v304 = vand.u32 %v303, 4294901760
    %305 = vmatmul.mubr.f32.gmra.mrb[0].mxu0 %v304
    %v306 = vpop.f32.mrb[0].mxu0
    %v307 = vadd.f32 0.0, %v306
    %v308 = vpop.f32.mrb[0].mxu0
    %309 = vmatprep.mubr.f32.mxu0 0.0
    %v310 = vand.u32 %v112, 4294901760
    %v311 = vsub.f32 %v112, %v310
    %v312 = vand.u32 %v311, 4294901760
    %v313 = vsub.f32 %v311, %v312
    %v314 = vand.u32 %v313, 4294901760
    %315 = vmatmul.mubr.f32.gmra.mrb[0].mxu0 %v314
    %v316 = vpop.f32.mrb[0].mxu0
    %v317 = vadd.f32 0.0, %v316
    %v318 = vpop.f32.mrb[0].mxu0
    %319 = vmatprep.mubr.f32.mxu0 0.0
    %v320 = vand.u32 %v115, 4294901760
    %v321 = vsub.f32 %v115, %v320
    %v322 = vand.u32 %v321, 4294901760
    %v323 = vsub.f32 %v321, %v322
    %v324 = vand.u32 %v323, 4294901760
    %325 = vmatmul.mubr.f32.gmra.mrb[0].mxu0 %v324
    %v326 = vpop.f32.mrb[0].mxu0
    %v327 = vadd.f32 0.0, %v326
    %v328 = vpop.f32.mrb[0].mxu0
    %329 = vmatprep.mubr.f32.mxu0 0.0
    %v330 = vand.u32 %v118, 4294901760
    %v331 = vsub.f32 %v118, %v330
    %v332 = vand.u32 %v331, 4294901760
    %v333 = vsub.f32 %v331, %v332
    %v334 = vand.u32 %v333, 4294901760
    %335 = vmatmul.mubr.f32.gmra.mrb[0].mxu0 %v334
    %v336 = vpop.f32.mrb[0].mxu0
    %v337 = vadd.f32 0.0, %v336
    %v338 = vpop.f32.mrb[0].mxu0
    %339 = vmatprep.mubr.f32.mxu0 0.0
    %v340 = vand.u32 %v121, 4294901760
    %v341 = vsub.f32 %v121, %v340
    %v342 = vand.u32 %v341, 4294901760
    %v343 = vsub.f32 %v341, %v342
    %v344 = vand.u32 %v343, 4294901760
    %345 = vmatmul.mubr.f32.gmra.mrb[0].mxu0 %v344
    %v346 = vpop.f32.mrb[0].mxu0
    %v347 = vadd.f32 0.0, %v346
    %v348 = vpop.f32.mrb[0].mxu0
    %349 = vdwg.mxu0
    %350 = vmatprep.subr.mxu0 0.0
    %v351 = vand.u32 %v72, 4294901760
    %v352 = vsub.f32 %v72, %v351
    %v353 = vand.u32 %v352, 4294901760
    %v354 = vsub.f32 %v352, %v353
    %v355 = vand.u32 %v354, 4294901760
    %356 = vmatpush1.msra.mxu0 %v355
    %357 = vmatprep.subr.mxu0 0.0
    %v358 = vand.u32 %v73, 4294901760
    %v359 = vsub.f32 %v73, %v358
    %v360 = vand.u32 %v359, 4294901760
    %v361 = vsub.f32 %v359, %v360
    %v362 = vand.u32 %v361, 4294901760
    %363 = vmatpush1.msra.mxu0 %v362
    %364 = vmatprep.subr.mxu0 0.0
    %365 = vmatpush1.msra.mxu0 0.0
    %366 = vmatprep.subr.mxu0 0.0
    %367 = vmatpush1.msra.mxu0 0.0
    %368 = vmatprep.subr.mxu0 0.0
    %369 = vmatpush1.msra.mxu0 0.0
    %370 = vmatprep.subr.mxu0 0.0
    %371 = vmatpush1.msra.mxu0 0.0
    %372 = vmatprep.subr.mxu0 0.0
    %373 = vmatpush1.msra.mxu0 0.0
    %374 = vmatprep.subr.mxu0 0.0
    %375 = vmatpush1.msra.mxu0 0.0
    %376 = vmatprep.subr.mxu0 0.0
    %377 = vmatpush1.msra.mxu0 0.0
    %378 = vmatprep.subr.mxu0 0.0
    %379 = vmatpush1.msra.mxu0 0.0
    %380 = vmatprep.subr.mxu0 0.0
    %381 = vmatpush1.msra.mxu0 0.0
    %382 = vmatprep.subr.mxu0 0.0
    %383 = vmatpush1.msra.mxu0 0.0
    %384 = vmatprep.subr.mxu0 0.0
    %385 = vmatpush1.msra.mxu0 0.0
    %386 = vmatprep.subr.mxu0 0.0
    %387 = vmatpush1.msra.mxu0 0.0
    %388 = vmatprep.subr.mxu0 0.0
    %389 = vmatpush1.msra.mxu0 0.0
    %390 = vmatprep.subr.mxu0 0.0
    %391 = vmatpush1.msra.mxu0 0.0
    %392 = vmatprep.subr.mxu0 0.0
    %393 = vmatpush1.msra.mxu0 0.0
    %394 = vmatprep.subr.mxu0 0.0
    %395 = vmatpush1.msra.mxu0 0.0
    %396 = vmatprep.subr.mxu0 0.0
    %397 = vmatpush1.msra.mxu0 0.0
    %398 = vmatprep.subr.mxu0 0.0
    %399 = vmatpush1.msra.mxu0 0.0
    %400 = vmatprep.subr.mxu0 0.0
    %401 = vmatpush1.msra.mxu0 0.0
    %402 = vmatprep.subr.mxu0 0.0
    %403 = vmatpush1.msra.mxu0 0.0
    %404 = vmatprep.subr.mxu0 0.0
    %405 = vmatpush1.msra.mxu0 0.0
    %406 = vmatprep.subr.mxu0 0.0
    %407 = vmatpush1.msra.mxu0 0.0
    %408 = vmatprep.subr.mxu0 0.0
    %409 = vmatpush1.msra.mxu0 0.0
    %410 = vmatprep.subr.mxu0 0.0
    %411 = vmatpush1.msra.mxu0 0.0
    %412 = vmatprep.subr.mxu0 0.0
    %413 = vmatpush1.msra.mxu0 0.0
    %414 = vmatprep.subr.mxu0 0.0
    %415 = vmatpush1.msra.mxu0 0.0
    %416 = vmatprep.subr.mxu0 0.0
    %417 = vmatpush1.msra.mxu0 0.0
    %418 = vmatprep.subr.mxu0 0.0
    %419 = vmatpush1.msra.mxu0 0.0
    %420 = vmatprep.subr.mxu0 0.0
    %421 = vmatpush1.msra.mxu0 0.0
    %422 = vmatprep.subr.mxu0 0.0
    %423 = vmatpush1.msra.mxu0 0.0
    %424 = vmatprep.mubr.f32.mxu0 0.0
    %v425 = vand.u32 %v76, 4294901760
    %426 = vmatmul.mubr.f32.gmra.mrb[0].mxu0 %v425
    %v427 = vpop.f32.mrb[0].mxu0
    %v428 = vadd.f32 %v197, %v427
    %v429 = vpop.f32.mrb[0].mxu0
    %430 = vmatprep.mubr.f32.mxu0 0.0
    %v431 = vand.u32 %v79, 4294901760
    %432 = vmatmul.mubr.f32.gmra.mrb[0].mxu0 %v431
    %v433 = vpop.f32.mrb[0].mxu0
    %v434 = vadd.f32 %v207, %v433
    %v435 = vpop.f32.mrb[0].mxu0
    %436 = vmatprep.mubr.f32.mxu0 0.0
    %v437 = vand.u32 %v82, 4294901760
    %438 = vmatmul.mubr.f32.gmra.mrb[0].mxu0 %v437
    %v439 = vpop.f32.mrb[0].mxu0
    %v440 = vadd.f32 %v217, %v439
    %v441 = vpop.f32.mrb[0].mxu0
    %442 = vmatprep.mubr.f32.mxu0 0.0
    %v443 = vand.u32 %v85, 4294901760
    %444 = vmatmul.mubr.f32.gmra.mrb[0].mxu0 %v443
    %v445 = vpop.f32.mrb[0].mxu0
    %v446 = vadd.f32 %v227, %v445
    %v447 = vpop.f32.mrb[0].mxu0
    %448 = vmatprep.mubr.f32.mxu0 0.0
    %v449 = vand.u32 %v88, 4294901760
    %450 = vmatmul.mubr.f32.gmra.mrb[0].mxu0 %v449
    %v451 = vpop.f32.mrb[0].mxu0
    %v452 = vadd.f32 %v237, %v451
    %v453 = vpop.f32.mrb[0].mxu0
    %454 = vmatprep.mubr.f32.mxu0 0.0
    %v455 = vand.u32 %v91, 4294901760
    %456 = vmatmul.mubr.f32.gmra.mrb[0].mxu0 %v455
    %v457 = vpop.f32.mrb[0].mxu0
    %v458 = vadd.f32 %v247, %v457
    %v459 = vpop.f32.mrb[0].mxu0
    %460 = vmatprep.mubr.f32.mxu0 0.0
    %v461 = vand.u32 %v94, 4294901760
    %462 = vmatmul.mubr.f32.gmra.mrb[0].mxu0 %v461
    %v463 = vpop.f32.mrb[0].mxu0
    %v464 = vadd.f32 %v257, %v463
    %v465 = vpop.f32.mrb[0].mxu0
    %466 = vmatprep.mubr.f32.mxu0 0.0
    %v467 = vand.u32 %v97, 4294901760
    %468 = vmatmul.mubr.f32.gmra.mrb[0].mxu0 %v467
    %v469 = vpop.f32.mrb[0].mxu0
    %v470 = vadd.f32 %v267, %v469
    %v471 = vpop.f32.mrb[0].mxu0
    %472 = vmatprep.mubr.f32.mxu0 0.0
    %v473 = vand.u32 %v100, 4294901760
    %474 = vmatmul.mubr.f32.gmra.mrb[0].mxu0 %v473
    %v475 = vpop.f32.mrb[0].mxu0
    %v476 = vadd.f32 %v277, %v475
    %v477 = vpop.f32.mrb[0].mxu0
    %478 = vmatprep.mubr.f32.mxu0 0.0
    %v479 = vand.u32 %v103, 4294901760
    %480 = vmatmul.mubr.f32.gmra.mrb[0].mxu0 %v479
    %v481 = vpop.f32.mrb[0].mxu0
    %v482 = vadd.f32 %v287, %v481
    %v483 = vpop.f32.mrb[0].mxu0
    %484 = vmatprep.mubr.f32.mxu0 0.0
    %v485 = vand.u32 %v106, 4294901760
    %486 = vmatmul.mubr.f32.gmra.mrb[0].mxu0 %v485
    %v487 = vpop.f32.mrb[0].mxu0
    %v488 = vadd.f32 %v297, %v487
    %v489 = vpop.f32.mrb[0].mxu0
    %490 = vmatprep.mubr.f32.mxu0 0.0
    %v491 = vand.u32 %v109, 4294901760
    %492 = vmatmul.mubr.f32.gmra.mrb[0].mxu0 %v491
    %v493 = vpop.f32.mrb[0].mxu0
    %v494 = vadd.f32 %v307, %v493
    %v495 = vpop.f32.mrb[0].mxu0
    %496 = vmatprep.mubr.f32.mxu0 0.0
    %v497 = vand.u32 %v112, 4294901760
    %498 = vmatmul.mubr.f32.gmra.mrb[0].mxu0 %v497
    %v499 = vpop.f32.mrb[0].mxu0
    %v500 = vadd.f32 %v317, %v499
    %v501 = vpop.f32.mrb[0].mxu0
    %502 = vmatprep.mubr.f32.mxu0 0.0
    %v503 = vand.u32 %v115, 4294901760
    %504 = vmatmul.mubr.f32.gmra.mrb[0].mxu0 %v503
    %v505 = vpop.f32.mrb[0].mxu0
    %v506 = vadd.f32 %v327, %v505
    %v507 = vpop.f32.mrb[0].mxu0
    %508 = vmatprep.mubr.f32.mxu0 0.0
    %v509 = vand.u32 %v118, 4294901760
    %510 = vmatmul.mubr.f32.gmra.mrb[0].mxu0 %v509
    %v511 = vpop.f32.mrb[0].mxu0
    %v512 = vadd.f32 %v337, %v511
    %v513 = vpop.f32.mrb[0].mxu0
    %514 = vmatprep.mubr.f32.mxu0 0.0
    %v515 = vand.u32 %v121, 4294901760
    %516 = vmatmul.mubr.f32.gmra.mrb[0].mxu0 %v515
    %v517 = vpop.f32.mrb[0].mxu0
    %v518 = vadd.f32 %v347, %v517
    %v519 = vpop.f32.mrb[0].mxu0
    %520 = vdwg.mxu0
    %521 = vmatprep.subr.mxu0 0.0
    %v522 = vand.u32 %v72, 4294901760
    %v523 = vsub.f32 %v72, %v522
    %524 = vmatpush1.msra.mxu0 %v523
    %525 = vmatprep.subr.mxu0 0.0
    %v526 = vand.u32 %v73, 4294901760
    %v527 = vsub.f32 %v73, %v526
    %528 = vmatpush1.msra.mxu0 %v527
    %529 = vmatprep.subr.mxu0 0.0
    %530 = vmatpush1.msra.mxu0 0.0
    %531 = vmatprep.subr.mxu0 0.0
    %532 = vmatpush1.msra.mxu0 0.0
    %533 = vmatprep.subr.mxu0 0.0
    %534 = vmatpush1.msra.mxu0 0.0
    %535 = vmatprep.subr.mxu0 0.0
    %536 = vmatpush1.msra.mxu0 0.0
    %537 = vmatprep.subr.mxu0 0.0
    %538 = vmatpush1.msra.mxu0 0.0
    %539 = vmatprep.subr.mxu0 0.0
    %540 = vmatpush1.msra.mxu0 0.0
    %541 = vmatprep.subr.mxu0 0.0
    %542 = vmatpush1.msra.mxu0 0.0
    %543 = vmatprep.subr.mxu0 0.0
    %544 = vmatpush1.msra.mxu0 0.0
    %545 = vmatprep.subr.mxu0 0.0
    %546 = vmatpush1.msra.mxu0 0.0
    %547 = vmatprep.subr.mxu0 0.0
    %548 = vmatpush1.msra.mxu0 0.0
    %549 = vmatprep.subr.mxu0 0.0
    %550 = vmatpush1.msra.mxu0 0.0
    %551 = vmatprep.subr.mxu0 0.0
    %552 = vmatpush1.msra.mxu0 0.0
    %553 = vmatprep.subr.mxu0 0.0
    %554 = vmatpush1.msra.mxu0 0.0
    %555 = vmatprep.subr.mxu0 0.0
    %556 = vmatpush1.msra.mxu0 0.0
    %557 = vmatprep.subr.mxu0 0.0
    %558 = vmatpush1.msra.mxu0 0.0
    %559 = vmatprep.subr.mxu0 0.0
    %560 = vmatpush1.msra.mxu0 0.0
    %561 = vmatprep.subr.mxu0 0.0
    %562 = vmatpush1.msra.mxu0 0.0
    %563 = vmatprep.subr.mxu0 0.0
    %564 = vmatpush1.msra.mxu0 0.0
    %565 = vmatprep.subr.mxu0 0.0
    %566 = vmatpush1.msra.mxu0 0.0
    %567 = vmatprep.subr.mxu0 0.0
    %568 = vmatpush1.msra.mxu0 0.0
    %569 = vmatprep.subr.mxu0 0.0
    %570 = vmatpush1.msra.mxu0 0.0
    %571 = vmatprep.subr.mxu0 0.0
    %572 = vmatpush1.msra.mxu0 0.0
    %573 = vmatprep.subr.mxu0 0.0
    %574 = vmatpush1.msra.mxu0 0.0
    %575 = vmatprep.subr.mxu0 0.0
    %576 = vmatpush1.msra.mxu0 0.0
    %577 = vmatprep.subr.mxu0 0.0
    %578 = vmatpush1.msra.mxu0 0.0
    %579 = vmatprep.subr.mxu0 0.0
    %580 = vmatpush1.msra.mxu0 0.0
    %581 = vmatprep.subr.mxu0 0.0
    %582 = vmatpush1.msra.mxu0 0.0
    %583 = vmatprep.subr.mxu0 0.0
    %584 = vmatpush1.msra.mxu0 0.0
    %585 = vmatprep.subr.mxu0 0.0
    %586 = vmatpush1.msra.mxu0 0.0
    %587 = vmatprep.subr.mxu0 0.0
    %588 = vmatpush1.msra.mxu0 0.0
    %589 = vmatprep.mubr.f32.mxu0 0.0
    %v590 = vand.u32 %v76, 4294901760
    %v591 = vsub.f32 %v76, %v590
    %592 = vmatmul.mubr.f32.gmra.mrb[0].mxu0 %v591
    %v593 = vpop.f32.mrb[0].mxu0
    %v594 = vadd.f32 %v428, %v593
    %v595 = vpop.f32.mrb[0].mxu0
    %596 = vmatprep.mubr.f32.mxu0 0.0
    %v597 = vand.u32 %v79, 4294901760
    %v598 = vsub.f32 %v79, %v597
    %599 = vmatmul.mubr.f32.gmra.mrb[0].mxu0 %v598
    %v600 = vpop.f32.mrb[0].mxu0
    %v601 = vadd.f32 %v434, %v600
    %v602 = vpop.f32.mrb[0].mxu0
    %603 = vmatprep.mubr.f32.mxu0 0.0
    %v604 = vand.u32 %v82, 4294901760
    %v605 = vsub.f32 %v82, %v604
    %606 = vmatmul.mubr.f32.gmra.mrb[0].mxu0 %v605
    %v607 = vpop.f32.mrb[0].mxu0
    %v608 = vadd.f32 %v440, %v607
    %v609 = vpop.f32.mrb[0].mxu0
    %610 = vmatprep.mubr.f32.mxu0 0.0
    %v611 = vand.u32 %v85, 4294901760
    %v612 = vsub.f32 %v85, %v611
    %613 = vmatmul.mubr.f32.gmra.mrb[0].mxu0 %v612
    %v614 = vpop.f32.mrb[0].mxu0
    %v615 = vadd.f32 %v446, %v614
    %v616 = vpop.f32.mrb[0].mxu0
    %617 = vmatprep.mubr.f32.mxu0 0.0
    %v618 = vand.u32 %v88, 4294901760
    %v619 = vsub.f32 %v88, %v618
    %620 = vmatmul.mubr.f32.gmra.mrb[0].mxu0 %v619
    %v621 = vpop.f32.mrb[0].mxu0
    %v622 = vadd.f32 %v452, %v621
    %v623 = vpop.f32.mrb[0].mxu0
    %624 = vmatprep.mubr.f32.mxu0 0.0
    %v625 = vand.u32 %v91, 4294901760
    %v626 = vsub.f32 %v91, %v625
    %627 = vmatmul.mubr.f32.gmra.mrb[0].mxu0 %v626
    %v628 = vpop.f32.mrb[0].mxu0
    %v629 = vadd.f32 %v458, %v628
    %v630 = vpop.f32.mrb[0].mxu0
    %631 = vmatprep.mubr.f32.mxu0 0.0
    %v632 = vand.u32 %v94, 4294901760
    %v633 = vsub.f32 %v94, %v632
    %634 = vmatmul.mubr.f32.gmra.mrb[0].mxu0 %v633
    %v635 = vpop.f32.mrb[0].mxu0
    %v636 = vadd.f32 %v464, %v635
    %v637 = vpop.f32.mrb[0].mxu0
    %638 = vmatprep.mubr.f32.mxu0 0.0
    %v639 = vand.u32 %v97, 4294901760
    %v640 = vsub.f32 %v97, %v639
    %641 = vmatmul.mubr.f32.gmra.mrb[0].mxu0 %v640
    %v642 = vpop.f32.mrb[0].mxu0
    %v643 = vadd.f32 %v470, %v642
    %v644 = vpop.f32.mrb[0].mxu0
    %645 = vmatprep.mubr.f32.mxu0 0.0
    %v646 = vand.u32 %v100, 4294901760
    %v647 = vsub.f32 %v100, %v646
    %648 = vmatmul.mubr.f32.gmra.mrb[0].mxu0 %v647
    %v649 = vpop.f32.mrb[0].mxu0
    %v650 = vadd.f32 %v476, %v649
    %v651 = vpop.f32.mrb[0].mxu0
    %652 = vmatprep.mubr.f32.mxu0 0.0
    %v653 = vand.u32 %v103, 4294901760
    %v654 = vsub.f32 %v103, %v653
    %655 = vmatmul.mubr.f32.gmra.mrb[0].mxu0 %v654
    %v656 = vpop.f32.mrb[0].mxu0
    %v657 = vadd.f32 %v482, %v656
    %v658 = vpop.f32.mrb[0].mxu0
    %659 = vmatprep.mubr.f32.mxu0 0.0
    %v660 = vand.u32 %v106, 4294901760
    %v661 = vsub.f32 %v106, %v660
    %662 = vmatmul.mubr.f32.gmra.mrb[0].mxu0 %v661
    %v663 = vpop.f32.mrb[0].mxu0
    %v664 = vadd.f32 %v488, %v663
    %v665 = vpop.f32.mrb[0].mxu0
    %666 = vmatprep.mubr.f32.mxu0 0.0
    %v667 = vand.u32 %v109, 4294901760
    %v668 = vsub.f32 %v109, %v667
    %669 = vmatmul.mubr.f32.gmra.mrb[0].mxu0 %v668
    %v670 = vpop.f32.mrb[0].mxu0
    %v671 = vadd.f32 %v494, %v670
    %v672 = vpop.f32.mrb[0].mxu0
    %673 = vmatprep.mubr.f32.mxu0 0.0
    %v674 = vand.u32 %v112, 4294901760
    %v675 = vsub.f32 %v112, %v674
    %676 = vmatmul.mubr.f32.gmra.mrb[0].mxu0 %v675
    %v677 = vpop.f32.mrb[0].mxu0
    %v678 = vadd.f32 %v500, %v677
    %v679 = vpop.f32.mrb[0].mxu0
    %680 = vmatprep.mubr.f32.mxu0 0.0
    %v681 = vand.u32 %v115, 4294901760
    %v682 = vsub.f32 %v115, %v681
    %683 = vmatmul.mubr.f32.gmra.mrb[0].mxu0 %v682
    %v684 = vpop.f32.mrb[0].mxu0
    %v685 = vadd.f32 %v506, %v684
    %v686 = vpop.f32.mrb[0].mxu0
    %687 = vmatprep.mubr.f32.mxu0 0.0
    %v688 = vand.u32 %v118, 4294901760
    %v689 = vsub.f32 %v118, %v688
    %690 = vmatmul.mubr.f32.gmra.mrb[0].mxu0 %v689
    %v691 = vpop.f32.mrb[0].mxu0
    %v692 = vadd.f32 %v512, %v691
    %v693 = vpop.f32.mrb[0].mxu0
    %694 = vmatprep.mubr.f32.mxu0 0.0
    %v695 = vand.u32 %v121, 4294901760
    %v696 = vsub.f32 %v121, %v695
    %697 = vmatmul.mubr.f32.gmra.mrb[0].mxu0 %v696
    %v698 = vpop.f32.mrb[0].mxu0
    %v699 = vadd.f32 %v518, %v698
    %v700 = vpop.f32.mrb[0].mxu0
    %701 = vdwg.mxu0
    %702 = vmatprep.subr.mxu0 0.0
    %v703 = vand.u32 %v72, 4294901760
    %704 = vmatpush1.msra.mxu0 %v703
    %705 = vmatprep.subr.mxu0 0.0
    %v706 = vand.u32 %v73, 4294901760
    %707 = vmatpush1.msra.mxu0 %v706
    %708 = vmatprep.subr.mxu0 0.0
    %709 = vmatpush1.msra.mxu0 0.0
    %710 = vmatprep.subr.mxu0 0.0
    %711 = vmatpush1.msra.mxu0 0.0
    %712 = vmatprep.subr.mxu0 0.0
    %713 = vmatpush1.msra.mxu0 0.0
    %714 = vmatprep.subr.mxu0 0.0
    %715 = vmatpush1.msra.mxu0 0.0
    %716 = vmatprep.subr.mxu0 0.0
    %717 = vmatpush1.msra.mxu0 0.0
    %718 = vmatprep.subr.mxu0 0.0
    %719 = vmatpush1.msra.mxu0 0.0
    %720 = vmatprep.subr.mxu0 0.0
    %721 = vmatpush1.msra.mxu0 0.0
    %722 = vmatprep.subr.mxu0 0.0
    %723 = vmatpush1.msra.mxu0 0.0
    %724 = vmatprep.subr.mxu0 0.0
    %725 = vmatpush1.msra.mxu0 0.0
    %726 = vmatprep.subr.mxu0 0.0
    %727 = vmatpush1.msra.mxu0 0.0
    %728 = vmatprep.subr.mxu0 0.0
    %729 = vmatpush1.msra.mxu0 0.0
    %730 = vmatprep.subr.mxu0 0.0
    %731 = vmatpush1.msra.mxu0 0.0
    %732 = vmatprep.subr.mxu0 0.0
    %733 = vmatpush1.msra.mxu0 0.0
    %734 = vmatprep.subr.mxu0 0.0
    %735 = vmatpush1.msra.mxu0 0.0
    %736 = vmatprep.subr.mxu0 0.0
    %737 = vmatpush1.msra.mxu0 0.0
    %738 = vmatprep.subr.mxu0 0.0
    %739 = vmatpush1.msra.mxu0 0.0
    %740 = vmatprep.subr.mxu0 0.0
    %741 = vmatpush1.msra.mxu0 0.0
    %742 = vmatprep.subr.mxu0 0.0
    %743 = vmatpush1.msra.mxu0 0.0
    %744 = vmatprep.subr.mxu0 0.0
    %745 = vmatpush1.msra.mxu0 0.0
    %746 = vmatprep.subr.mxu0 0.0
    %747 = vmatpush1.msra.mxu0 0.0
    %748 = vmatprep.subr.mxu0 0.0
    %749 = vmatpush1.msra.mxu0 0.0
    %750 = vmatprep.subr.mxu0 0.0
    %751 = vmatpush1.msra.mxu0 0.0
    %752 = vmatprep.subr.mxu0 0.0
    %753 = vmatpush1.msra.mxu0 0.0
    %754 = vmatprep.subr.mxu0 0.0
    %755 = vmatpush1.msra.mxu0 0.0
    %756 = vmatprep.subr.mxu0 0.0
    %757 = vmatpush1.msra.mxu0 0.0
    %758 = vmatprep.subr.mxu0 0.0
    %759 = vmatpush1.msra.mxu0 0.0
    %760 = vmatprep.subr.mxu0 0.0
    %761 = vmatpush1.msra.mxu0 0.0
    %762 = vmatprep.subr.mxu0 0.0
    %763 = vmatpush1.msra.mxu0 0.0
    %764 = vmatprep.subr.mxu0 0.0
    %765 = vmatpush1.msra.mxu0 0.0
    %766 = vmatprep.subr.mxu0 0.0
    %767 = vmatpush1.msra.mxu0 0.0
    %768 = vmatprep.mubr.f32.mxu0 0.0
    %v769 = vand.u32 %v76, 4294901760
    %v770 = vsub.f32 %v76, %v769
    %v771 = vand.u32 %v770, 4294901760
    %772 = vmatmul.mubr.f32.gmra.mrb[0].mxu0 %v771
    %v773 = vpop.f32.mrb[0].mxu0
    %v774 = vadd.f32 %v594, %v773
    %v775 = vpop.f32.mrb[0].mxu0
    %776 = vmatprep.mubr.f32.mxu0 0.0
    %v777 = vand.u32 %v79, 4294901760
    %v778 = vsub.f32 %v79, %v777
    %v779 = vand.u32 %v778, 4294901760
    %780 = vmatmul.mubr.f32.gmra.mrb[0].mxu0 %v779
    %v781 = vpop.f32.mrb[0].mxu0
    %v782 = vadd.f32 %v601, %v781
    %v783 = vpop.f32.mrb[0].mxu0
    %784 = vmatprep.mubr.f32.mxu0 0.0
    %v785 = vand.u32 %v82, 4294901760
    %v786 = vsub.f32 %v82, %v785
    %v787 = vand.u32 %v786, 4294901760
    %788 = vmatmul.mubr.f32.gmra.mrb[0].mxu0 %v787
    %v789 = vpop.f32.mrb[0].mxu0
    %v790 = vadd.f32 %v608, %v789
    %v791 = vpop.f32.mrb[0].mxu0
    %792 = vmatprep.mubr.f32.mxu0 0.0
    %v793 = vand.u32 %v85, 4294901760
    %v794 = vsub.f32 %v85, %v793
    %v795 = vand.u32 %v794, 4294901760
    %796 = vmatmul.mubr.f32.gmra.mrb[0].mxu0 %v795
    %v797 = vpop.f32.mrb[0].mxu0
    %v798 = vadd.f32 %v615, %v797
    %v799 = vpop.f32.mrb[0].mxu0
    %800 = vmatprep.mubr.f32.mxu0 0.0
    %v801 = vand.u32 %v88, 4294901760
    %v802 = vsub.f32 %v88, %v801
    %v803 = vand.u32 %v802, 4294901760
    %804 = vmatmul.mubr.f32.gmra.mrb[0].mxu0 %v803
    %v805 = vpop.f32.mrb[0].mxu0
    %v806 = vadd.f32 %v622, %v805
    %v807 = vpop.f32.mrb[0].mxu0
    %808 = vmatprep.mubr.f32.mxu0 0.0
    %v809 = vand.u32 %v91, 4294901760
    %v810 = vsub.f32 %v91, %v809
    %v811 = vand.u32 %v810, 4294901760
    %812 = vmatmul.mubr.f32.gmra.mrb[0].mxu0 %v811
    %v813 = vpop.f32.mrb[0].mxu0
    %v814 = vadd.f32 %v629, %v813
    %v815 = vpop.f32.mrb[0].mxu0
    %816 = vmatprep.mubr.f32.mxu0 0.0
    %v817 = vand.u32 %v94, 4294901760
    %v818 = vsub.f32 %v94, %v817
    %v819 = vand.u32 %v818, 4294901760
    %820 = vmatmul.mubr.f32.gmra.mrb[0].mxu0 %v819
    %v821 = vpop.f32.mrb[0].mxu0
    %v822 = vadd.f32 %v636, %v821
    %v823 = vpop.f32.mrb[0].mxu0
    %824 = vmatprep.mubr.f32.mxu0 0.0
    %v825 = vand.u32 %v97, 4294901760
    %v826 = vsub.f32 %v97, %v825
    %v827 = vand.u32 %v826, 4294901760
    %828 = vmatmul.mubr.f32.gmra.mrb[0].mxu0 %v827
    %v829 = vpop.f32.mrb[0].mxu0
    %v830 = vadd.f32 %v643, %v829
    %v831 = vpop.f32.mrb[0].mxu0
    %832 = vmatprep.mubr.f32.mxu0 0.0
    %v833 = vand.u32 %v100, 4294901760
    %v834 = vsub.f32 %v100, %v833
    %v835 = vand.u32 %v834, 4294901760
    %836 = vmatmul.mubr.f32.gmra.mrb[0].mxu0 %v835
    %v837 = vpop.f32.mrb[0].mxu0
    %v838 = vadd.f32 %v650, %v837
    %v839 = vpop.f32.mrb[0].mxu0
    %840 = vmatprep.mubr.f32.mxu0 0.0
    %v841 = vand.u32 %v103, 4294901760
    %v842 = vsub.f32 %v103, %v841
    %v843 = vand.u32 %v842, 4294901760
    %844 = vmatmul.mubr.f32.gmra.mrb[0].mxu0 %v843
    %v845 = vpop.f32.mrb[0].mxu0
    %v846 = vadd.f32 %v657, %v845
    %v847 = vpop.f32.mrb[0].mxu0
    %848 = vmatprep.mubr.f32.mxu0 0.0
    %v849 = vand.u32 %v106, 4294901760
    %v850 = vsub.f32 %v106, %v849
    %v851 = vand.u32 %v850, 4294901760
    %852 = vmatmul.mubr.f32.gmra.mrb[0].mxu0 %v851
    %v853 = vpop.f32.mrb[0].mxu0
    %v854 = vadd.f32 %v664, %v853
    %v855 = vpop.f32.mrb[0].mxu0
    %856 = vmatprep.mubr.f32.mxu0 0.0
    %v857 = vand.u32 %v109, 4294901760
    %v858 = vsub.f32 %v109, %v857
    %v859 = vand.u32 %v858, 4294901760
    %860 = vmatmul.mubr.f32.gmra.mrb[0].mxu0 %v859
    %v861 = vpop.f32.mrb[0].mxu0
    %v862 = vadd.f32 %v671, %v861
    %v863 = vpop.f32.mrb[0].mxu0
    %864 = vmatprep.mubr.f32.mxu0 0.0
    %v865 = vand.u32 %v112, 4294901760
    %v866 = vsub.f32 %v112, %v865
    %v867 = vand.u32 %v866, 4294901760
    %868 = vmatmul.mubr.f32.gmra.mrb[0].mxu0 %v867
    %v869 = vpop.f32.mrb[0].mxu0
    %v870 = vadd.f32 %v678, %v869
    %v871 = vpop.f32.mrb[0].mxu0
    %872 = vmatprep.mubr.f32.mxu0 0.0
    %v873 = vand.u32 %v115, 4294901760
    %v874 = vsub.f32 %v115, %v873
    %v875 = vand.u32 %v874, 4294901760
    %876 = vmatmul.mubr.f32.gmra.mrb[0].mxu0 %v875
    %v877 = vpop.f32.mrb[0].mxu0
    %v878 = vadd.f32 %v685, %v877
    %v879 = vpop.f32.mrb[0].mxu0
    %880 = vmatprep.mubr.f32.mxu0 0.0
    %v881 = vand.u32 %v118, 4294901760
    %v882 = vsub.f32 %v118, %v881
    %v883 = vand.u32 %v882, 4294901760
    %884 = vmatmul.mubr.f32.gmra.mrb[0].mxu0 %v883
    %v885 = vpop.f32.mrb[0].mxu0
    %v886 = vadd.f32 %v692, %v885
    %v887 = vpop.f32.mrb[0].mxu0
    %888 = vmatprep.mubr.f32.mxu0 0.0
    %v889 = vand.u32 %v121, 4294901760
    %v890 = vsub.f32 %v121, %v889
    %v891 = vand.u32 %v890, 4294901760
    %892 = vmatmul.mubr.f32.gmra.mrb[0].mxu0 %v891
    %v893 = vpop.f32.mrb[0].mxu0
    %v894 = vadd.f32 %v699, %v893
    %v895 = vpop.f32.mrb[0].mxu0
    %896 = vdwg.mxu0
    %897 = vmatprep.subr.mxu0 0.0
    %v898 = vand.u32 %v72, 4294901760
    %v899 = vsub.f32 %v72, %v898
    %v900 = vand.u32 %v899, 4294901760
    %901 = vmatpush1.msra.mxu0 %v900
    %902 = vmatprep.subr.mxu0 0.0
    %v903 = vand.u32 %v73, 4294901760
    %v904 = vsub.f32 %v73, %v903
    %v905 = vand.u32 %v904, 4294901760
    %906 = vmatpush1.msra.mxu0 %v905
    %907 = vmatprep.subr.mxu0 0.0
    %908 = vmatpush1.msra.mxu0 0.0
    %909 = vmatprep.subr.mxu0 0.0
    %910 = vmatpush1.msra.mxu0 0.0
    %911 = vmatprep.subr.mxu0 0.0
    %912 = vmatpush1.msra.mxu0 0.0
    %913 = vmatprep.subr.mxu0 0.0
    %914 = vmatpush1.msra.mxu0 0.0
    %915 = vmatprep.subr.mxu0 0.0
    %916 = vmatpush1.msra.mxu0 0.0
    %917 = vmatprep.subr.mxu0 0.0
    %918 = vmatpush1.msra.mxu0 0.0
    %919 = vmatprep.subr.mxu0 0.0
    %920 = vmatpush1.msra.mxu0 0.0
    %921 = vmatprep.subr.mxu0 0.0
    %922 = vmatpush1.msra.mxu0 0.0
    %923 = vmatprep.subr.mxu0 0.0
    %924 = vmatpush1.msra.mxu0 0.0
    %925 = vmatprep.subr.mxu0 0.0
    %926 = vmatpush1.msra.mxu0 0.0
    %927 = vmatprep.subr.mxu0 0.0
    %928 = vmatpush1.msra.mxu0 0.0
    %929 = vmatprep.subr.mxu0 0.0
    %930 = vmatpush1.msra.mxu0 0.0
    %931 = vmatprep.subr.mxu0 0.0
    %932 = vmatpush1.msra.mxu0 0.0
    %933 = vmatprep.subr.mxu0 0.0
    %934 = vmatpush1.msra.mxu0 0.0
    %935 = vmatprep.subr.mxu0 0.0
    %936 = vmatpush1.msra.mxu0 0.0
    %937 = vmatprep.subr.mxu0 0.0
    %938 = vmatpush1.msra.mxu0 0.0
    %939 = vmatprep.subr.mxu0 0.0
    %940 = vmatpush1.msra.mxu0 0.0
    %941 = vmatprep.subr.mxu0 0.0
    %942 = vmatpush1.msra.mxu0 0.0
    %943 = vmatprep.subr.mxu0 0.0
    %944 = vmatpush1.msra.mxu0 0.0
    %945 = vmatprep.subr.mxu0 0.0
    %946 = vmatpush1.msra.mxu0 0.0
    %947 = vmatprep.subr.mxu0 0.0
    %948 = vmatpush1.msra.mxu0 0.0
    %949 = vmatprep.subr.mxu0 0.0
    %950 = vmatpush1.msra.mxu0 0.0
    %951 = vmatprep.subr.mxu0 0.0
    %952 = vmatpush1.msra.mxu0 0.0
    %953 = vmatprep.subr.mxu0 0.0
    %954 = vmatpush1.msra.mxu0 0.0
    %955 = vmatprep.subr.mxu0 0.0
    %956 = vmatpush1.msra.mxu0 0.0
    %957 = vmatprep.subr.mxu0 0.0
    %958 = vmatpush1.msra.mxu0 0.0
    %959 = vmatprep.subr.mxu0 0.0
    %960 = vmatpush1.msra.mxu0 0.0
    %961 = vmatprep.subr.mxu0 0.0
    %962 = vmatpush1.msra.mxu0 0.0
    %963 = vmatprep.subr.mxu0 0.0
    %964 = vmatpush1.msra.mxu0 0.0
    %965 = vmatprep.subr.mxu0 0.0
    %966 = vmatpush1.msra.mxu0 0.0
    %967 = vmatprep.mubr.f32.mxu0 0.0
    %v968 = vand.u32 %v76, 4294901760
    %969 = vmatmul.mubr.f32.gmra.mrb[0].mxu0 %v968
    %v970 = vpop.f32.mrb[0].mxu0
    %v971 = vadd.f32 %v774, %v970
    %v972 = vpop.f32.mrb[0].mxu0
    %973 = vmatprep.mubr.f32.mxu0 0.0
    %v974 = vand.u32 %v79, 4294901760
    %975 = vmatmul.mubr.f32.gmra.mrb[0].mxu0 %v974
    %v976 = vpop.f32.mrb[0].mxu0
    %v977 = vadd.f32 %v782, %v976
    %v978 = vpop.f32.mrb[0].mxu0
    %979 = vmatprep.mubr.f32.mxu0 0.0
    %v980 = vand.u32 %v82, 4294901760
    %981 = vmatmul.mubr.f32.gmra.mrb[0].mxu0 %v980
    %v982 = vpop.f32.mrb[0].mxu0
    %v983 = vadd.f32 %v790, %v982
    %v984 = vpop.f32.mrb[0].mxu0
    %985 = vmatprep.mubr.f32.mxu0 0.0
    %v986 = vand.u32 %v85, 4294901760
    %987 = vmatmul.mubr.f32.gmra.mrb[0].mxu0 %v986
    %v988 = vpop.f32.mrb[0].mxu0
    %v989 = vadd.f32 %v798, %v988
    %v990 = vpop.f32.mrb[0].mxu0
    %991 = vmatprep.mubr.f32.mxu0 0.0
    %v992 = vand.u32 %v88, 4294901760
    %993 = vmatmul.mubr.f32.gmra.mrb[0].mxu0 %v992
    %v994 = vpop.f32.mrb[0].mxu0
    %v995 = vadd.f32 %v806, %v994
    %v996 = vpop.f32.mrb[0].mxu0
    %997 = vmatprep.mubr.f32.mxu0 0.0
    %v998 = vand.u32 %v91, 4294901760
    %999 = vmatmul.mubr.f32.gmra.mrb[0].mxu0 %v998
    %v1000 = vpop.f32.mrb[0].mxu0
    %v1001 = vadd.f32 %v814, %v1000
    %v1002 = vpop.f32.mrb[0].mxu0
    %1003 = vmatprep.mubr.f32.mxu0 0.0
    %v1004 = vand.u32 %v94, 4294901760
    %1005 = vmatmul.mubr.f32.gmra.mrb[0].mxu0 %v1004
    %v1006 = vpop.f32.mrb[0].mxu0
    %v1007 = vadd.f32 %v822, %v1006
    %v1008 = vpop.f32.mrb[0].mxu0
    %1009 = vmatprep.mubr.f32.mxu0 0.0
    %v1010 = vand.u32 %v97, 4294901760
    %1011 = vmatmul.mubr.f32.gmra.mrb[0].mxu0 %v1010
    %v1012 = vpop.f32.mrb[0].mxu0
    %v1013 = vadd.f32 %v830, %v1012
    %v1014 = vpop.f32.mrb[0].mxu0
    %1015 = vmatprep.mubr.f32.mxu0 0.0
    %v1016 = vand.u32 %v100, 4294901760
    %1017 = vmatmul.mubr.f32.gmra.mrb[0].mxu0 %v1016
    %v1018 = vpop.f32.mrb[0].mxu0
    %v1019 = vadd.f32 %v838, %v1018
    %v1020 = vpop.f32.mrb[0].mxu0
    %1021 = vmatprep.mubr.f32.mxu0 0.0
    %v1022 = vand.u32 %v103, 4294901760
    %1023 = vmatmul.mubr.f32.gmra.mrb[0].mxu0 %v1022
    %v1024 = vpop.f32.mrb[0].mxu0
    %v1025 = vadd.f32 %v846, %v1024
    %v1026 = vpop.f32.mrb[0].mxu0
    %1027 = vmatprep.mubr.f32.mxu0 0.0
    %v1028 = vand.u32 %v106, 4294901760
    %1029 = vmatmul.mubr.f32.gmra.mrb[0].mxu0 %v1028
    %v1030 = vpop.f32.mrb[0].mxu0
    %v1031 = vadd.f32 %v854, %v1030
    %v1032 = vpop.f32.mrb[0].mxu0
    %1033 = vmatprep.mubr.f32.mxu0 0.0
    %v1034 = vand.u32 %v109, 4294901760
    %1035 = vmatmul.mubr.f32.gmra.mrb[0].mxu0 %v1034
    %v1036 = vpop.f32.mrb[0].mxu0
    %v1037 = vadd.f32 %v862, %v1036
    %v1038 = vpop.f32.mrb[0].mxu0
    %1039 = vmatprep.mubr.f32.mxu0 0.0
    %v1040 = vand.u32 %v112, 4294901760
    %1041 = vmatmul.mubr.f32.gmra.mrb[0].mxu0 %v1040
    %v1042 = vpop.f32.mrb[0].mxu0
    %v1043 = vadd.f32 %v870, %v1042
    %v1044 = vpop.f32.mrb[0].mxu0
    %1045 = vmatprep.mubr.f32.mxu0 0.0
    %v1046 = vand.u32 %v115, 4294901760
    %1047 = vmatmul.mubr.f32.gmra.mrb[0].mxu0 %v1046
    %v1048 = vpop.f32.mrb[0].mxu0
    %v1049 = vadd.f32 %v878, %v1048
    %v1050 = vpop.f32.mrb[0].mxu0
    %1051 = vmatprep.mubr.f32.mxu0 0.0
    %v1052 = vand.u32 %v118, 4294901760
    %1053 = vmatmul.mubr.f32.gmra.mrb[0].mxu0 %v1052
    %v1054 = vpop.f32.mrb[0].mxu0
    %v1055 = vadd.f32 %v886, %v1054
    %v1056 = vpop.f32.mrb[0].mxu0
    %1057 = vmatprep.mubr.f32.mxu0 0.0
    %v1058 = vand.u32 %v121, 4294901760
    %1059 = vmatmul.mubr.f32.gmra.mrb[0].mxu0 %v1058
    %v1060 = vpop.f32.mrb[0].mxu0
    %v1061 = vadd.f32 %v894, %v1060
    %v1062 = vpop.f32.mrb[0].mxu0
    %1063 = vdwg.mxu0
    %1064 = vmatprep.subr.mxu0 0.0
    %v1065 = vand.u32 %v72, 4294901760
    %1066 = vmatpush1.msra.mxu0 %v1065
    %1067 = vmatprep.subr.mxu0 0.0
    %v1068 = vand.u32 %v73, 4294901760
    %1069 = vmatpush1.msra.mxu0 %v1068
    %1070 = vmatprep.subr.mxu0 0.0
    %1071 = vmatpush1.msra.mxu0 0.0
    %1072 = vmatprep.subr.mxu0 0.0
    %1073 = vmatpush1.msra.mxu0 0.0
    %1074 = vmatprep.subr.mxu0 0.0
    %1075 = vmatpush1.msra.mxu0 0.0
    %1076 = vmatprep.subr.mxu0 0.0
    %1077 = vmatpush1.msra.mxu0 0.0
    %1078 = vmatprep.subr.mxu0 0.0
    %1079 = vmatpush1.msra.mxu0 0.0
    %1080 = vmatprep.subr.mxu0 0.0
    %1081 = vmatpush1.msra.mxu0 0.0
    %1082 = vmatprep.subr.mxu0 0.0
    %1083 = vmatpush1.msra.mxu0 0.0
    %1084 = vmatprep.subr.mxu0 0.0
    %1085 = vmatpush1.msra.mxu0 0.0
    %1086 = vmatprep.subr.mxu0 0.0
    %1087 = vmatpush1.msra.mxu0 0.0
    %1088 = vmatprep.subr.mxu0 0.0
    %1089 = vmatpush1.msra.mxu0 0.0
    %1090 = vmatprep.subr.mxu0 0.0
    %1091 = vmatpush1.msra.mxu0 0.0
    %1092 = vmatprep.subr.mxu0 0.0
    %1093 = vmatpush1.msra.mxu0 0.0
    %1094 = vmatprep.subr.mxu0 0.0
    %1095 = vmatpush1.msra.mxu0 0.0
    %1096 = vmatprep.subr.mxu0 0.0
    %1097 = vmatpush1.msra.mxu0 0.0
    %1098 = vmatprep.subr.mxu0 0.0
    %1099 = vmatpush1.msra.mxu0 0.0
    %1100 = vmatprep.subr.mxu0 0.0
    %1101 = vmatpush1.msra.mxu0 0.0
    %1102 = vmatprep.subr.mxu0 0.0
    %1103 = vmatpush1.msra.mxu0 0.0
    %1104 = vmatprep.subr.mxu0 0.0
    %1105 = vmatpush1.msra.mxu0 0.0
    %1106 = vmatprep.subr.mxu0 0.0
    %1107 = vmatpush1.msra.mxu0 0.0
    %1108 = vmatprep.subr.mxu0 0.0
    %1109 = vmatpush1.msra.mxu0 0.0
    %1110 = vmatprep.subr.mxu0 0.0
    %1111 = vmatpush1.msra.mxu0 0.0
    %1112 = vmatprep.subr.mxu0 0.0
    %1113 = vmatpush1.msra.mxu0 0.0
    %1114 = vmatprep.subr.mxu0 0.0
    %1115 = vmatpush1.msra.mxu0 0.0
    %1116 = vmatprep.subr.mxu0 0.0
    %1117 = vmatpush1.msra.mxu0 0.0
    %1118 = vmatprep.subr.mxu0 0.0
    %1119 = vmatpush1.msra.mxu0 0.0
    %1120 = vmatprep.subr.mxu0 0.0
    %1121 = vmatpush1.msra.mxu0 0.0
    %1122 = vmatprep.subr.mxu0 0.0
    %1123 = vmatpush1.msra.mxu0 0.0
    %1124 = vmatprep.subr.mxu0 0.0
    %1125 = vmatpush1.msra.mxu0 0.0
    %1126 = vmatprep.subr.mxu0 0.0
    %1127 = vmatpush1.msra.mxu0 0.0
    %1128 = vmatprep.subr.mxu0 0.0
    %1129 = vmatpush1.msra.mxu0 0.0
    %1130 = vmatprep.mubr.f32.mxu0 0.0
    %v1131 = vand.u32 %v76, 4294901760
    %1132 = vmatmul.mubr.f32.gmra.mrb[0].mxu0 %v1131
    %v1133 = vpop.f32.mrb[0].mxu0
    %v1134 = vadd.f32 %v971, %v1133
    %v1135 = vpop.f32.mrb[0].mxu0
    %1136 = vmatprep.mubr.f32.mxu0 0.0
    %v1137 = vand.u32 %v79, 4294901760
    %1138 = vmatmul.mubr.f32.gmra.mrb[0].mxu0 %v1137
    %v1139 = vpop.f32.mrb[0].mxu0
    %v1140 = vadd.f32 %v977, %v1139
    %v1141 = vpop.f32.mrb[0].mxu0
    %1142 = vmatprep.mubr.f32.mxu0 0.0
    %v1143 = vand.u32 %v82, 4294901760
    %1144 = vmatmul.mubr.f32.gmra.mrb[0].mxu0 %v1143
    %v1145 = vpop.f32.mrb[0].mxu0
    %v1146 = vadd.f32 %v983, %v1145
    %v1147 = vpop.f32.mrb[0].mxu0
    %1148 = vmatprep.mubr.f32.mxu0 0.0
    %v1149 = vand.u32 %v85, 4294901760
    %1150 = vmatmul.mubr.f32.gmra.mrb[0].mxu0 %v1149
    %v1151 = vpop.f32.mrb[0].mxu0
    %v1152 = vadd.f32 %v989, %v1151
    %v1153 = vpop.f32.mrb[0].mxu0
    %1154 = vmatprep.mubr.f32.mxu0 0.0
    %v1155 = vand.u32 %v88, 4294901760
    %1156 = vmatmul.mubr.f32.gmra.mrb[0].mxu0 %v1155
    %v1157 = vpop.f32.mrb[0].mxu0
    %v1158 = vadd.f32 %v995, %v1157
    %v1159 = vpop.f32.mrb[0].mxu0
    %1160 = vmatprep.mubr.f32.mxu0 0.0
    %v1161 = vand.u32 %v91, 4294901760
    %1162 = vmatmul.mubr.f32.gmra.mrb[0].mxu0 %v1161
    %v1163 = vpop.f32.mrb[0].mxu0
    %v1164 = vadd.f32 %v1001, %v1163
    %v1165 = vpop.f32.mrb[0].mxu0
    %1166 = vmatprep.mubr.f32.mxu0 0.0
    %v1167 = vand.u32 %v94, 4294901760
    %1168 = vmatmul.mubr.f32.gmra.mrb[0].mxu0 %v1167
    %v1169 = vpop.f32.mrb[0].mxu0
    %v1170 = vadd.f32 %v1007, %v1169
    %v1171 = vpop.f32.mrb[0].mxu0
    %1172 = vmatprep.mubr.f32.mxu0 0.0
    %v1173 = vand.u32 %v97, 4294901760
    %1174 = vmatmul.mubr.f32.gmra.mrb[0].mxu0 %v1173
    %v1175 = vpop.f32.mrb[0].mxu0
    %v1176 = vadd.f32 %v1013, %v1175
    %v1177 = vpop.f32.mrb[0].mxu0
    %1178 = vmatprep.mubr.f32.mxu0 0.0
    %v1179 = vand.u32 %v100, 4294901760
    %1180 = vmatmul.mubr.f32.gmra.mrb[0].mxu0 %v1179
    %v1181 = vpop.f32.mrb[0].mxu0
    %v1182 = vadd.f32 %v1019, %v1181
    %v1183 = vpop.f32.mrb[0].mxu0
    %1184 = vmatprep.mubr.f32.mxu0 0.0
    %v1185 = vand.u32 %v103, 4294901760
    %1186 = vmatmul.mubr.f32.gmra.mrb[0].mxu0 %v1185
    %v1187 = vpop.f32.mrb[0].mxu0
    %v1188 = vadd.f32 %v1025, %v1187
    %v1189 = vpop.f32.mrb[0].mxu0
    %1190 = vmatprep.mubr.f32.mxu0 0.0
    %v1191 = vand.u32 %v106, 4294901760
    %1192 = vmatmul.mubr.f32.gmra.mrb[0].mxu0 %v1191
    %v1193 = vpop.f32.mrb[0].mxu0
    %v1194 = vadd.f32 %v1031, %v1193
    %v1195 = vpop.f32.mrb[0].mxu0
    %1196 = vmatprep.mubr.f32.mxu0 0.0
    %v1197 = vand.u32 %v109, 4294901760
    %1198 = vmatmul.mubr.f32.gmra.mrb[0].mxu0 %v1197
    %v1199 = vpop.f32.mrb[0].mxu0
    %v1200 = vadd.f32 %v1037, %v1199
    %v1201 = vpop.f32.mrb[0].mxu0
    %1202 = vmatprep.mubr.f32.mxu0 0.0
    %v1203 = vand.u32 %v112, 4294901760
    %1204 = vmatmul.mubr.f32.gmra.mrb[0].mxu0 %v1203
    %v1205 = vpop.f32.mrb[0].mxu0
    %v1206 = vadd.f32 %v1043, %v1205
    %v1207 = vpop.f32.mrb[0].mxu0
    %1208 = vmatprep.mubr.f32.mxu0 0.0
    %v1209 = vand.u32 %v115, 4294901760
    %1210 = vmatmul.mubr.f32.gmra.mrb[0].mxu0 %v1209
    %v1211 = vpop.f32.mrb[0].mxu0
    %v1212 = vadd.f32 %v1049, %v1211
    %v1213 = vpop.f32.mrb[0].mxu0
    %1214 = vmatprep.mubr.f32.mxu0 0.0
    %v1215 = vand.u32 %v118, 4294901760
    %1216 = vmatmul.mubr.f32.gmra.mrb[0].mxu0 %v1215
    %v1217 = vpop.f32.mrb[0].mxu0
    %v1218 = vadd.f32 %v1055, %v1217
    %v1219 = vpop.f32.mrb[0].mxu0
    %1220 = vmatprep.mubr.f32.mxu0 0.0
    %v1221 = vand.u32 %v121, 4294901760
    %1222 = vmatmul.mubr.f32.gmra.mrb[0].mxu0 %v1221
    %v1223 = vpop.f32.mrb[0].mxu0
    %v1224 = vadd.f32 %v1061, %v1223
    %v1225 = vpop.f32.mrb[0].mxu0
    %1226 = vdwg.mxu0
    %v1227 = vld [vmem:[#allocation5] sm:$0xff]
    %v1228 = vld [vmem:[#allocation5 + $0x8] sm:$0xff]
    %v1229 = vld [vmem:[#allocation5 + $0x10] sm:$0xff]
    %v1230 = vld [vmem:[#allocation5 + $0x18] sm:$0xff]
    %v1231 = vld [vmem:[#allocation5 + $0x20] sm:$0xff]
    %v1232 = vld [vmem:[#allocation5 + $0x28] sm:$0xff]
    %v1233 = vld [vmem:[#allocation5 + $0x30] sm:$0xff]
    %v1234 = vld [vmem:[#allocation5 + $0x38] sm:$0xff]
    %v1235 = vld [vmem:[#allocation5 + $0x40] sm:$0xff]
    %v1236 = vld [vmem:[#allocation5 + $0x48] sm:$0xff]
    %v1237 = vld [vmem:[#allocation5 + $0x50] sm:$0xff]
    %v1238 = vld [vmem:[#allocation5 + $0x58] sm:$0xff]
    %v1239 = vld [vmem:[#allocation5 + $0x60] sm:$0xff]
    %v1240 = vld [vmem:[#allocation5 + $0x68] sm:$0xff]
    %v1241 = vld [vmem:[#allocation5 + $0x70] sm:$0xff]
    %v1242 = vld [vmem:[#allocation5 + $0x78] sm:$0xff]
    %v1244 = vsel %vm74, %v1227, 0
    %v1247 = vsel %vm74, %v1228, 0
    %1249 = vmatprep.subr.mxu0 0.0
    %v1250 = vand.u32 %v1134, 4294901760
    %1251 = vmatpush1.msra.mxu0 %v1250
    %1252 = vmatprep.subr.mxu0 0.0
    %v1253 = vand.u32 %v1140, 4294901760
    %1254 = vmatpush1.msra.mxu0 %v1253
    %1255 = vmatprep.subr.mxu0 0.0
    %1256 = vmatpush1.msra.mxu0 0.0
    %1257 = vmatprep.subr.mxu0 0.0
    %1258 = vmatpush1.msra.mxu0 0.0
    %1259 = vmatprep.subr.mxu0 0.0
    %1260 = vmatpush1.msra.mxu0 0.0
    %1261 = vmatprep.subr.mxu0 0.0
    %1262 = vmatpush1.msra.mxu0 0.0
    %1263 = vmatprep.subr.mxu0 0.0
    %1264 = vmatpush1.msra.mxu0 0.0
    %1265 = vmatprep.subr.mxu0 0.0
    %1266 = vmatpush1.msra.mxu0 0.0
    %1267 = vmatprep.subr.mxu0 0.0
    %1268 = vmatpush1.msra.mxu0 0.0
    %1269 = vmatprep.subr.mxu0 0.0
    %1270 = vmatpush1.msra.mxu0 0.0
    %1271 = vmatprep.subr.mxu0 0.0
    %1272 = vmatpush1.msra.mxu0 0.0
    %1273 = vmatprep.subr.mxu0 0.0
    %1274 = vmatpush1.msra.mxu0 0.0
    %1275 = vmatprep.subr.mxu0 0.0
    %1276 = vmatpush1.msra.mxu0 0.0
    %1277 = vmatprep.subr.mxu0 0.0
    %1278 = vmatpush1.msra.mxu0 0.0
    %1279 = vmatprep.subr.mxu0 0.0
    %1280 = vmatpush1.msra.mxu0 0.0
    %1281 = vmatprep.subr.mxu0 0.0
    %1282 = vmatpush1.msra.mxu0 0.0
    %1283 = vmatprep.subr.mxu0 0.0
    %1284 = vmatpush1.msra.mxu0 0.0
    %1285 = vmatprep.subr.mxu0 0.0
    %1286 = vmatpush1.msra.mxu0 0.0
    %1287 = vmatprep.subr.mxu0 0.0
    %1288 = vmatpush1.msra.mxu0 0.0
    %1289 = vmatprep.subr.mxu0 0.0
    %1290 = vmatpush1.msra.mxu0 0.0
    %1291 = vmatprep.subr.mxu0 0.0
    %1292 = vmatpush1.msra.mxu0 0.0
    %1293 = vmatprep.subr.mxu0 0.0
    %1294 = vmatpush1.msra.mxu0 0.0
    %1295 = vmatprep.subr.mxu0 0.0
    %1296 = vmatpush1.msra.mxu0 0.0
    %1297 = vmatprep.subr.mxu0 0.0
    %1298 = vmatpush1.msra.mxu0 0.0
    %1299 = vmatprep.subr.mxu0 0.0
    %1300 = vmatpush1.msra.mxu0 0.0
    %1301 = vmatprep.subr.mxu0 0.0
    %1302 = vmatpush1.msra.mxu0 0.0
    %1303 = vmatprep.subr.mxu0 0.0
    %1304 = vmatpush1.msra.mxu0 0.0
    %1305 = vmatprep.subr.mxu0 0.0
    %1306 = vmatpush1.msra.mxu0 0.0
    %1307 = vmatprep.subr.mxu0 0.0
    %1308 = vmatpush1.msra.mxu0 0.0
    %1309 = vmatprep.subr.mxu0 0.0
    %1310 = vmatpush1.msra.mxu0 0.0
    %1311 = vmatprep.subr.mxu0 0.0
    %1312 = vmatpush1.msra.mxu0 0.0
    %1313 = vmatprep.subr.mxu0 0.0
    %1314 = vmatpush1.msra.mxu0 0.0
    %1315 = vmatprep.mubr.f32.mxu0 0.0
    %v1316 = vand.u32 %v1244, 4294901760
    %v1317 = vsub.f32 %v1244, %v1316
    %v1318 = vand.u32 %v1317, 4294901760
    %v1319 = vsub.f32 %v1317, %v1318
    %v1320 = vand.u32 %v1319, 4294901760
    %1321 = vmatmul.mubr.f32.gmra.mrb[0].mxu0 %v1320
    %v1322 = vpop.f32.mrb[0].mxu0
    %v1323 = vadd.f32 0.0, %v1322
    %v1324 = vpop.f32.mrb[0].mxu0
    %1325 = vmatprep.mubr.f32.mxu0 0.0
    %v1326 = vand.u32 %v1247, 4294901760
    %v1327 = vsub.f32 %v1247, %v1326
    %v1328 = vand.u32 %v1327, 4294901760
    %v1329 = vsub.f32 %v1327, %v1328
    %v1330 = vand.u32 %v1329, 4294901760
    %1331 = vmatmul.mubr.f32.gmra.mrb[0].mxu0 %v1330
    %v1332 = vpop.f32.mrb[0].mxu0
    %v1333 = vadd.f32 0.0, %v1332
    %v1334 = vpop.f32.mrb[0].mxu0
    %1335 = vdwg.mxu0
    %1336 = vmatprep.subr.mxu0 0.0
    %v1337 = vand.u32 %v1134, 4294901760
    %v1338 = vsub.f32 %v1134, %v1337
    %v1339 = vand.u32 %v1338, 4294901760
    %v1340 = vsub.f32 %v1338, %v1339
    %v1341 = vand.u32 %v1340, 4294901760
    %1342 = vmatpush1.msra.mxu0 %v1341
    %1343 = vmatprep.subr.mxu0 0.0
    %v1344 = vand.u32 %v1140, 4294901760
    %v1345 = vsub.f32 %v1140, %v1344
    %v1346 = vand.u32 %v1345, 4294901760
    %v1347 = vsub.f32 %v1345, %v1346
    %v1348 = vand.u32 %v1347, 4294901760
    %1349 = vmatpush1.msra.mxu0 %v1348
    %1350 = vmatprep.subr.mxu0 0.0
    %1351 = vmatpush1.msra.mxu0 0.0
    %1352 = vmatprep.subr.mxu0 0.0
    %1353 = vmatpush1.msra.mxu0 0.0
    %1354 = vmatprep.subr.mxu0 0.0
    %1355 = vmatpush1.msra.mxu0 0.0
    %1356 = vmatprep.subr.mxu0 0.0
    %1357 = vmatpush1.msra.mxu0 0.0
    %1358 = vmatprep.subr.mxu0 0.0
    %1359 = vmatpush1.msra.mxu0 0.0
    %1360 = vmatprep.subr.mxu0 0.0
    %1361 = vmatpush1.msra.mxu0 0.0
    %1362 = vmatprep.subr.mxu0 0.0
    %1363 = vmatpush1.msra.mxu0 0.0
    %1364 = vmatprep.subr.mxu0 0.0
    %1365 = vmatpush1.msra.mxu0 0.0
    %1366 = vmatprep.subr.mxu0 0.0
    %1367 = vmatpush1.msra.mxu0 0.0
    %1368 = vmatprep.subr.mxu0 0.0
    %1369 = vmatpush1.msra.mxu0 0.0
    %1370 = vmatprep.subr.mxu0 0.0
    %1371 = vmatpush1.msra.mxu0 0.0
    %1372 = vmatprep.subr.mxu0 0.0
    %1373 = vmatpush1.msra.mxu0 0.0
    %1374 = vmatprep.subr.mxu0 0.0
    %1375 = vmatpush1.msra.mxu0 0.0
    %1376 = vmatprep.subr.mxu0 0.0
    %1377 = vmatpush1.msra.mxu0 0.0
    %1378 = vmatprep.subr.mxu0 0.0
    %1379 = vmatpush1.msra.mxu0 0.0
    %1380 = vmatprep.subr.mxu0 0.0
    %1381 = vmatpush1.msra.mxu0 0.0
    %1382 = vmatprep.subr.mxu0 0.0
    %1383 = vmatpush1.msra.mxu0 0.0
    %1384 = vmatprep.subr.mxu0 0.0
    %1385 = vmatpush1.msra.mxu0 0.0
    %1386 = vmatprep.subr.mxu0 0.0
    %1387 = vmatpush1.msra.mxu0 0.0
    %1388 = vmatprep.subr.mxu0 0.0
    %1389 = vmatpush1.msra.mxu0 0.0
    %1390 = vmatprep.subr.mxu0 0.0
    %1391 = vmatpush1.msra.mxu0 0.0
    %1392 = vmatprep.subr.mxu0 0.0
    %1393 = vmatpush1.msra.mxu0 0.0
    %1394 = vmatprep.subr.mxu0 0.0
    %1395 = vmatpush1.msra.mxu0 0.0
    %1396 = vmatprep.subr.mxu0 0.0
    %1397 = vmatpush1.msra.mxu0 0.0
    %1398 = vmatprep.subr.mxu0 0.0
    %1399 = vmatpush1.msra.mxu0 0.0
    %1400 = vmatprep.subr.mxu0 0.0
    %1401 = vmatpush1.msra.mxu0 0.0
    %1402 = vmatprep.subr.mxu0 0.0
    %1403 = vmatpush1.msra.mxu0 0.0
    %1404 = vmatprep.subr.mxu0 0.0
    %1405 = vmatpush1.msra.mxu0 0.0
    %1406 = vmatprep.subr.mxu0 0.0
    %1407 = vmatpush1.msra.mxu0 0.0
    %1408 = vmatprep.subr.mxu0 0.0
    %1409 = vmatpush1.msra.mxu0 0.0
    %1410 = vmatprep.mubr.f32.mxu0 0.0
    %v1411 = vand.u32 %v1244, 4294901760
    %1412 = vmatmul.mubr.f32.gmra.mrb[0].mxu0 %v1411
    %v1413 = vpop.f32.mrb[0].mxu0
    %v1414 = vadd.f32 %v1323, %v1413
    %v1415 = vpop.f32.mrb[0].mxu0
    %1416 = vmatprep.mubr.f32.mxu0 0.0
    %v1417 = vand.u32 %v1247, 4294901760
    %1418 = vmatmul.mubr.f32.gmra.mrb[0].mxu0 %v1417
    %v1419 = vpop.f32.mrb[0].mxu0
    %v1420 = vadd.f32 %v1333, %v1419
    %v1421 = vpop.f32.mrb[0].mxu0
    %1422 = vdwg.mxu0
    %1423 = vmatprep.subr.mxu0 0.0
    %v1424 = vand.u32 %v1134, 4294901760
    %v1425 = vsub.f32 %v1134, %v1424
    %1426 = vmatpush1.msra.mxu0 %v1425
    %1427 = vmatprep.subr.mxu0 0.0
    %v1428 = vand.u32 %v1140, 4294901760
    %v1429 = vsub.f32 %v1140, %v1428
    %1430 = vmatpush1.msra.mxu0 %v1429
    %1431 = vmatprep.subr.mxu0 0.0
    %1432 = vmatpush1.msra.mxu0 0.0
    %1433 = vmatprep.subr.mxu0 0.0
    %1434 = vmatpush1.msra.mxu0 0.0
    %1435 = vmatprep.subr.mxu0 0.0
    %1436 = vmatpush1.msra.mxu0 0.0
    %1437 = vmatprep.subr.mxu0 0.0
    %1438 = vmatpush1.msra.mxu0 0.0
    %1439 = vmatprep.subr.mxu0 0.0
    %1440 = vmatpush1.msra.mxu0 0.0
    %1441 = vmatprep.subr.mxu0 0.0
    %1442 = vmatpush1.msra.mxu0 0.0
    %1443 = vmatprep.subr.mxu0 0.0
    %1444 = vmatpush1.msra.mxu0 0.0
    %1445 = vmatprep.subr.mxu0 0.0
    %1446 = vmatpush1.msra.mxu0 0.0
    %1447 = vmatprep.subr.mxu0 0.0
    %1448 = vmatpush1.msra.mxu0 0.0
    %1449 = vmatprep.subr.mxu0 0.0
    %1450 = vmatpush1.msra.mxu0 0.0
    %1451 = vmatprep.subr.mxu0 0.0
    %1452 = vmatpush1.msra.mxu0 0.0
    %1453 = vmatprep.subr.mxu0 0.0
    %1454 = vmatpush1.msra.mxu0 0.0
    %1455 = vmatprep.subr.mxu0 0.0
    %1456 = vmatpush1.msra.mxu0 0.0
    %1457 = vmatprep.subr.mxu0 0.0
    %1458 = vmatpush1.msra.mxu0 0.0
    %1459 = vmatprep.subr.mxu0 0.0
    %1460 = vmatpush1.msra.mxu0 0.0
    %1461 = vmatprep.subr.mxu0 0.0
    %1462 = vmatpush1.msra.mxu0 0.0
    %1463 = vmatprep.subr.mxu0 0.0
    %1464 = vmatpush1.msra.mxu0 0.0
    %1465 = vmatprep.subr.mxu0 0.0
    %1466 = vmatpush1.msra.mxu0 0.0
    %1467 = vmatprep.subr.mxu0 0.0
    %1468 = vmatpush1.msra.mxu0 0.0
    %1469 = vmatprep.subr.mxu0 0.0
    %1470 = vmatpush1.msra.mxu0 0.0
    %1471 = vmatprep.subr.mxu0 0.0
    %1472 = vmatpush1.msra.mxu0 0.0
    %1473 = vmatprep.subr.mxu0 0.0
    %1474 = vmatpush1.msra.mxu0 0.0
    %1475 = vmatprep.subr.mxu0 0.0
    %1476 = vmatpush1.msra.mxu0 0.0
    %1477 = vmatprep.subr.mxu0 0.0
    %1478 = vmatpush1.msra.mxu0 0.0
    %1479 = vmatprep.subr.mxu0 0.0
    %1480 = vmatpush1.msra.mxu0 0.0
    %1481 = vmatprep.subr.mxu0 0.0
    %1482 = vmatpush1.msra.mxu0 0.0
    %1483 = vmatprep.subr.mxu0 0.0
    %1484 = vmatpush1.msra.mxu0 0.0
    %1485 = vmatprep.subr.mxu0 0.0
    %1486 = vmatpush1.msra.mxu0 0.0
    %1487 = vmatprep.subr.mxu0 0.0
    %1488 = vmatpush1.msra.mxu0 0.0
    %1489 = vmatprep.subr.mxu0 0.0
    %1490 = vmatpush1.msra.mxu0 0.0
    %1491 = vmatprep.mubr.f32.mxu0 0.0
    %v1492 = vand.u32 %v1244, 4294901760
    %v1493 = vsub.f32 %v1244, %v1492
    %1494 = vmatmul.mubr.f32.gmra.mrb[0].mxu0 %v1493
    %v1495 = vpop.f32.mrb[0].mxu0
    %v1496 = vadd.f32 %v1414, %v1495
    %v1497 = vpop.f32.mrb[0].mxu0
    %1498 = vmatprep.mubr.f32.mxu0 0.0
    %v1499 = vand.u32 %v1247, 4294901760
    %v1500 = vsub.f32 %v1247, %v1499
    %1501 = vmatmul.mubr.f32.gmra.mrb[0].mxu0 %v1500
    %v1502 = vpop.f32.mrb[0].mxu0
    %v1503 = vadd.f32 %v1420, %v1502
    %v1504 = vpop.f32.mrb[0].mxu0
    %1505 = vdwg.mxu0
    %1506 = vmatprep.subr.mxu0 0.0
    %v1507 = vand.u32 %v1134, 4294901760
    %1508 = vmatpush1.msra.mxu0 %v1507
    %1509 = vmatprep.subr.mxu0 0.0
    %v1510 = vand.u32 %v1140, 4294901760
    %1511 = vmatpush1.msra.mxu0 %v1510
    %1512 = vmatprep.subr.mxu0 0.0
    %1513 = vmatpush1.msra.mxu0 0.0
    %1514 = vmatprep.subr.mxu0 0.0
    %1515 = vmatpush1.msra.mxu0 0.0
    %1516 = vmatprep.subr.mxu0 0.0
    %1517 = vmatpush1.msra.mxu0 0.0
    %1518 = vmatprep.subr.mxu0 0.0
    %1519 = vmatpush1.msra.mxu0 0.0
    %1520 = vmatprep.subr.mxu0 0.0
    %1521 = vmatpush1.msra.mxu0 0.0
    %1522 = vmatprep.subr.mxu0 0.0
    %1523 = vmatpush1.msra.mxu0 0.0
    %1524 = vmatprep.subr.mxu0 0.0
    %1525 = vmatpush1.msra.mxu0 0.0
    %1526 = vmatprep.subr.mxu0 0.0
    %1527 = vmatpush1.msra.mxu0 0.0
    %1528 = vmatprep.subr.mxu0 0.0
    %1529 = vmatpush1.msra.mxu0 0.0
    %1530 = vmatprep.subr.mxu0 0.0
    %1531 = vmatpush1.msra.mxu0 0.0
    %1532 = vmatprep.subr.mxu0 0.0
    %1533 = vmatpush1.msra.mxu0 0.0
    %1534 = vmatprep.subr.mxu0 0.0
    %1535 = vmatpush1.msra.mxu0 0.0
    %1536 = vmatprep.subr.mxu0 0.0
    %1537 = vmatpush1.msra.mxu0 0.0
    %1538 = vmatprep.subr.mxu0 0.0
    %1539 = vmatpush1.msra.mxu0 0.0
    %1540 = vmatprep.subr.mxu0 0.0
    %1541 = vmatpush1.msra.mxu0 0.0
    %1542 = vmatprep.subr.mxu0 0.0
    %1543 = vmatpush1.msra.mxu0 0.0
    %1544 = vmatprep.subr.mxu0 0.0
    %1545 = vmatpush1.msra.mxu0 0.0
    %1546 = vmatprep.subr.mxu0 0.0
    %1547 = vmatpush1.msra.mxu0 0.0
    %1548 = vmatprep.subr.mxu0 0.0
    %1549 = vmatpush1.msra.mxu0 0.0
    %1550 = vmatprep.subr.mxu0 0.0
    %1551 = vmatpush1.msra.mxu0 0.0
    %1552 = vmatprep.subr.mxu0 0.0
    %1553 = vmatpush1.msra.mxu0 0.0
    %1554 = vmatprep.subr.mxu0 0.0
    %1555 = vmatpush1.msra.mxu0 0.0
    %1556 = vmatprep.subr.mxu0 0.0
    %1557 = vmatpush1.msra.mxu0 0.0
    %1558 = vmatprep.subr.mxu0 0.0
    %1559 = vmatpush1.msra.mxu0 0.0
    %1560 = vmatprep.subr.mxu0 0.0
    %1561 = vmatpush1.msra.mxu0 0.0
    %1562 = vmatprep.subr.mxu0 0.0
    %1563 = vmatpush1.msra.mxu0 0.0
    %1564 = vmatprep.subr.mxu0 0.0
    %1565 = vmatpush1.msra.mxu0 0.0
    %1566 = vmatprep.subr.mxu0 0.0
    %1567 = vmatpush1.msra.mxu0 0.0
    %1568 = vmatprep.subr.mxu0 0.0
    %1569 = vmatpush1.msra.mxu0 0.0
    %1570 = vmatprep.subr.mxu0 0.0
    %1571 = vmatpush1.msra.mxu0 0.0
    %1572 = vmatprep.mubr.f32.mxu0 0.0
    %v1573 = vand.u32 %v1244, 4294901760
    %v1574 = vsub.f32 %v1244, %v1573
    %v1575 = vand.u32 %v1574, 4294901760
    %1576 = vmatmul.mubr.f32.gmra.mrb[0].mxu0 %v1575
    %v1577 = vpop.f32.mrb[0].mxu0
    %v1578 = vadd.f32 %v1496, %v1577
    %v1579 = vpop.f32.mrb[0].mxu0
    %1580 = vmatprep.mubr.f32.mxu0 0.0
    %v1581 = vand.u32 %v1247, 4294901760
    %v1582 = vsub.f32 %v1247, %v1581
    %v1583 = vand.u32 %v1582, 4294901760
    %1584 = vmatmul.mubr.f32.gmra.mrb[0].mxu0 %v1583
    %v1585 = vpop.f32.mrb[0].mxu0
    %v1586 = vadd.f32 %v1503, %v1585
    %v1587 = vpop.f32.mrb[0].mxu0
    %1588 = vdwg.mxu0
    %1589 = vmatprep.subr.mxu0 0.0
    %v1590 = vand.u32 %v1134, 4294901760
    %v1591 = vsub.f32 %v1134, %v1590
    %v1592 = vand.u32 %v1591, 4294901760
    %1593 = vmatpush1.msra.mxu0 %v1592
    %1594 = vmatprep.subr.mxu0 0.0
    %v1595 = vand.u32 %v1140, 4294901760
    %v1596 = vsub.f32 %v1140, %v1595
    %v1597 = vand.u32 %v1596, 4294901760
    %1598 = vmatpush1.msra.mxu0 %v1597
    %1599 = vmatprep.subr.mxu0 0.0
    %1600 = vmatpush1.msra.mxu0 0.0
    %1601 = vmatprep.subr.mxu0 0.0
    %1602 = vmatpush1.msra.mxu0 0.0
    %1603 = vmatprep.subr.mxu0 0.0
    %1604 = vmatpush1.msra.mxu0 0.0
    %1605 = vmatprep.subr.mxu0 0.0
    %1606 = vmatpush1.msra.mxu0 0.0
    %1607 = vmatprep.subr.mxu0 0.0
    %1608 = vmatpush1.msra.mxu0 0.0
    %1609 = vmatprep.subr.mxu0 0.0
    %1610 = vmatpush1.msra.mxu0 0.0
    %1611 = vmatprep.subr.mxu0 0.0
    %1612 = vmatpush1.msra.mxu0 0.0
    %1613 = vmatprep.subr.mxu0 0.0
    %1614 = vmatpush1.msra.mxu0 0.0
    %1615 = vmatprep.subr.mxu0 0.0
    %1616 = vmatpush1.msra.mxu0 0.0
    %1617 = vmatprep.subr.mxu0 0.0
    %1618 = vmatpush1.msra.mxu0 0.0
    %1619 = vmatprep.subr.mxu0 0.0
    %1620 = vmatpush1.msra.mxu0 0.0
    %1621 = vmatprep.subr.mxu0 0.0
    %1622 = vmatpush1.msra.mxu0 0.0
    %1623 = vmatprep.subr.mxu0 0.0
    %1624 = vmatpush1.msra.mxu0 0.0
    %1625 = vmatprep.subr.mxu0 0.0
    %1626 = vmatpush1.msra.mxu0 0.0
    %1627 = vmatprep.subr.mxu0 0.0
    %1628 = vmatpush1.msra.mxu0 0.0
    %1629 = vmatprep.subr.mxu0 0.0
    %1630 = vmatpush1.msra.mxu0 0.0
    %1631 = vmatprep.subr.mxu0 0.0
    %1632 = vmatpush1.msra.mxu0 0.0
    %1633 = vmatprep.subr.mxu0 0.0
    %1634 = vmatpush1.msra.mxu0 0.0
    %1635 = vmatprep.subr.mxu0 0.0
    %1636 = vmatpush1.msra.mxu0 0.0
    %1637 = vmatprep.subr.mxu0 0.0
    %1638 = vmatpush1.msra.mxu0 0.0
    %1639 = vmatprep.subr.mxu0 0.0
    %1640 = vmatpush1.msra.mxu0 0.0
    %1641 = vmatprep.subr.mxu0 0.0
    %1642 = vmatpush1.msra.mxu0 0.0
    %1643 = vmatprep.subr.mxu0 0.0
    %1644 = vmatpush1.msra.mxu0 0.0
    %1645 = vmatprep.subr.mxu0 0.0
    %1646 = vmatpush1.msra.mxu0 0.0
    %1647 = vmatprep.subr.mxu0 0.0
    %1648 = vmatpush1.msra.mxu0 0.0
    %1649 = vmatprep.subr.mxu0 0.0
    %1650 = vmatpush1.msra.mxu0 0.0
    %1651 = vmatprep.subr.mxu0 0.0
    %1652 = vmatpush1.msra.mxu0 0.0
    %1653 = vmatprep.subr.mxu0 0.0
    %1654 = vmatpush1.msra.mxu0 0.0
    %1655 = vmatprep.subr.mxu0 0.0
    %1656 = vmatpush1.msra.mxu0 0.0
    %1657 = vmatprep.subr.mxu0 0.0
    %1658 = vmatpush1.msra.mxu0 0.0
    %1659 = vmatprep.mubr.f32.mxu0 0.0
    %v1660 = vand.u32 %v1244, 4294901760
    %1661 = vmatmul.mubr.f32.gmra.mrb[0].mxu0 %v1660
    %v1662 = vpop.f32.mrb[0].mxu0
    %v1663 = vadd.f32 %v1578, %v1662
    %v1664 = vpop.f32.mrb[0].mxu0
    %1665 = vmatprep.mubr.f32.mxu0 0.0
    %v1666 = vand.u32 %v1247, 4294901760
    %1667 = vmatmul.mubr.f32.gmra.mrb[0].mxu0 %v1666
    %v1668 = vpop.f32.mrb[0].mxu0
    %v1669 = vadd.f32 %v1586, %v1668
    %v1670 = vpop.f32.mrb[0].mxu0
    %1671 = vdwg.mxu0
    %1672 = vmatprep.subr.mxu0 0.0
    %v1673 = vand.u32 %v1134, 4294901760
    %1674 = vmatpush1.msra.mxu0 %v1673
    %1675 = vmatprep.subr.mxu0 0.0
    %v1676 = vand.u32 %v1140, 4294901760
    %1677 = vmatpush1.msra.mxu0 %v1676
    %1678 = vmatprep.subr.mxu0 0.0
    %1679 = vmatpush1.msra.mxu0 0.0
    %1680 = vmatprep.subr.mxu0 0.0
    %1681 = vmatpush1.msra.mxu0 0.0
    %1682 = vmatprep.subr.mxu0 0.0
    %1683 = vmatpush1.msra.mxu0 0.0
    %1684 = vmatprep.subr.mxu0 0.0
    %1685 = vmatpush1.msra.mxu0 0.0
    %1686 = vmatprep.subr.mxu0 0.0
    %1687 = vmatpush1.msra.mxu0 0.0
    %1688 = vmatprep.subr.mxu0 0.0
    %1689 = vmatpush1.msra.mxu0 0.0
    %1690 = vmatprep.subr.mxu0 0.0
    %1691 = vmatpush1.msra.mxu0 0.0
    %1692 = vmatprep.subr.mxu0 0.0
    %1693 = vmatpush1.msra.mxu0 0.0
    %1694 = vmatprep.subr.mxu0 0.0
    %1695 = vmatpush1.msra.mxu0 0.0
    %1696 = vmatprep.subr.mxu0 0.0
    %1697 = vmatpush1.msra.mxu0 0.0
    %1698 = vmatprep.subr.mxu0 0.0
    %1699 = vmatpush1.msra.mxu0 0.0
    %1700 = vmatprep.subr.mxu0 0.0
    %1701 = vmatpush1.msra.mxu0 0.0
    %1702 = vmatprep.subr.mxu0 0.0
    %1703 = vmatpush1.msra.mxu0 0.0
    %1704 = vmatprep.subr.mxu0 0.0
    %1705 = vmatpush1.msra.mxu0 0.0
    %1706 = vmatprep.subr.mxu0 0.0
    %1707 = vmatpush1.msra.mxu0 0.0
    %1708 = vmatprep.subr.mxu0 0.0
    %1709 = vmatpush1.msra.mxu0 0.0
    %1710 = vmatprep.subr.mxu0 0.0
    %1711 = vmatpush1.msra.mxu0 0.0
    %1712 = vmatprep.subr.mxu0 0.0
    %1713 = vmatpush1.msra.mxu0 0.0
    %1714 = vmatprep.subr.mxu0 0.0
    %1715 = vmatpush1.msra.mxu0 0.0
    %1716 = vmatprep.subr.mxu0 0.0
    %1717 = vmatpush1.msra.mxu0 0.0
    %1718 = vmatprep.subr.mxu0 0.0
    %1719 = vmatpush1.msra.mxu0 0.0
    %1720 = vmatprep.subr.mxu0 0.0
    %1721 = vmatpush1.msra.mxu0 0.0
    %1722 = vmatprep.subr.mxu0 0.0
    %1723 = vmatpush1.msra.mxu0 0.0
    %1724 = vmatprep.subr.mxu0 0.0
    %1725 = vmatpush1.msra.mxu0 0.0
    %1726 = vmatprep.subr.mxu0 0.0
    %1727 = vmatpush1.msra.mxu0 0.0
    %1728 = vmatprep.subr.mxu0 0.0
    %1729 = vmatpush1.msra.mxu0 0.0
    %1730 = vmatprep.subr.mxu0 0.0
    %1731 = vmatpush1.msra.mxu0 0.0
    %1732 = vmatprep.subr.mxu0 0.0
    %1733 = vmatpush1.msra.mxu0 0.0
    %1734 = vmatprep.subr.mxu0 0.0
    %1735 = vmatpush1.msra.mxu0 0.0
    %1736 = vmatprep.subr.mxu0 0.0
    %1737 = vmatpush1.msra.mxu0 0.0
    %1738 = vmatprep.mubr.f32.mxu0 0.0
    %v1739 = vand.u32 %v1244, 4294901760
    %1740 = vmatmul.mubr.f32.gmra.mrb[0].mxu0 %v1739
    %v1741 = vpop.f32.mrb[0].mxu0
    %v1742 = vadd.f32 %v1663, %v1741
    %v1743 = vpop.f32.mrb[0].mxu0
    %1744 = vmatprep.mubr.f32.mxu0 0.0
    %v1745 = vand.u32 %v1247, 4294901760
    %1746 = vmatmul.mubr.f32.gmra.mrb[0].mxu0 %v1745
    %v1747 = vpop.f32.mrb[0].mxu0
    %v1748 = vadd.f32 %v1669, %v1747
    %v1749 = vpop.f32.mrb[0].mxu0
    %1750 = vdwg.mxu0
    %v1752 = vsel %vm74, %v1229, 0
    %v1755 = vsel %vm74, %v1230, 0
    %1757 = vmatprep.subr.mxu0 0.0
    %v1758 = vand.u32 %v1146, 4294901760
    %1759 = vmatpush1.msra.mxu0 %v1758
    %1760 = vmatprep.subr.mxu0 0.0
    %v1761 = vand.u32 %v1152, 4294901760
    %1762 = vmatpush1.msra.mxu0 %v1761
    %1763 = vmatprep.subr.mxu0 0.0
    %1764 = vmatpush1.msra.mxu0 0.0
    %1765 = vmatprep.subr.mxu0 0.0
    %1766 = vmatpush1.msra.mxu0 0.0
    %1767 = vmatprep.subr.mxu0 0.0
    %1768 = vmatpush1.msra.mxu0 0.0
    %1769 = vmatprep.subr.mxu0 0.0
    %1770 = vmatpush1.msra.mxu0 0.0
    %1771 = vmatprep.subr.mxu0 0.0
    %1772 = vmatpush1.msra.mxu0 0.0
    %1773 = vmatprep.subr.mxu0 0.0
    %1774 = vmatpush1.msra.mxu0 0.0
    %1775 = vmatprep.subr.mxu0 0.0
    %1776 = vmatpush1.msra.mxu0 0.0
    %1777 = vmatprep.subr.mxu0 0.0
    %1778 = vmatpush1.msra.mxu0 0.0
    %1779 = vmatprep.subr.mxu0 0.0
    %1780 = vmatpush1.msra.mxu0 0.0
    %1781 = vmatprep.subr.mxu0 0.0
    %1782 = vmatpush1.msra.mxu0 0.0
    %1783 = vmatprep.subr.mxu0 0.0
    %1784 = vmatpush1.msra.mxu0 0.0
    %1785 = vmatprep.subr.mxu0 0.0
    %1786 = vmatpush1.msra.mxu0 0.0
    %1787 = vmatprep.subr.mxu0 0.0
    %1788 = vmatpush1.msra.mxu0 0.0
    %1789 = vmatprep.subr.mxu0 0.0
    %1790 = vmatpush1.msra.mxu0 0.0
    %1791 = vmatprep.subr.mxu0 0.0
    %1792 = vmatpush1.msra.mxu0 0.0
    %1793 = vmatprep.subr.mxu0 0.0
    %1794 = vmatpush1.msra.mxu0 0.0
    %1795 = vmatprep.subr.mxu0 0.0
    %1796 = vmatpush1.msra.mxu0 0.0
    %1797 = vmatprep.subr.mxu0 0.0
    %1798 = vmatpush1.msra.mxu0 0.0
    %1799 = vmatprep.subr.mxu0 0.0
    %1800 = vmatpush1.msra.mxu0 0.0
    %1801 = vmatprep.subr.mxu0 0.0
    %1802 = vmatpush1.msra.mxu0 0.0
    %1803 = vmatprep.subr.mxu0 0.0
    %1804 = vmatpush1.msra.mxu0 0.0
    %1805 = vmatprep.subr.mxu0 0.0
    %1806 = vmatpush1.msra.mxu0 0.0
    %1807 = vmatprep.subr.mxu0 0.0
    %1808 = vmatpush1.msra.mxu0 0.0
    %1809 = vmatprep.subr.mxu0 0.0
    %1810 = vmatpush1.msra.mxu0 0.0
    %1811 = vmatprep.subr.mxu0 0.0
    %1812 = vmatpush1.msra.mxu0 0.0
    %1813 = vmatprep.subr.mxu0 0.0
    %1814 = vmatpush1.msra.mxu0 0.0
    %1815 = vmatprep.subr.mxu0 0.0
    %1816 = vmatpush1.msra.mxu0 0.0
    %1817 = vmatprep.subr.mxu0 0.0
    %1818 = vmatpush1.msra.mxu0 0.0
    %1819 = vmatprep.subr.mxu0 0.0
    %1820 = vmatpush1.msra.mxu0 0.0
    %1821 = vmatprep.subr.mxu0 0.0
    %1822 = vmatpush1.msra.mxu0 0.0
    %1823 = vmatprep.mubr.f32.mxu0 0.0
    %v1824 = vand.u32 %v1752, 4294901760
    %v1825 = vsub.f32 %v1752, %v1824
    %v1826 = vand.u32 %v1825, 4294901760
    %v1827 = vsub.f32 %v1825, %v1826
    %v1828 = vand.u32 %v1827, 4294901760
    %1829 = vmatmul.mubr.f32.gmra.mrb[0].mxu0 %v1828
    %v1830 = vpop.f32.mrb[0].mxu0
    %v1831 = vadd.f32 0.0, %v1830
    %v1832 = vpop.f32.mrb[0].mxu0
    %1833 = vmatprep.mubr.f32.mxu0 0.0
    %v1834 = vand.u32 %v1755, 4294901760
    %v1835 = vsub.f32 %v1755, %v1834
    %v1836 = vand.u32 %v1835, 4294901760
    %v1837 = vsub.f32 %v1835, %v1836
    %v1838 = vand.u32 %v1837, 4294901760
    %1839 = vmatmul.mubr.f32.gmra.mrb[0].mxu0 %v1838
    %v1840 = vpop.f32.mrb[0].mxu0
    %v1841 = vadd.f32 0.0, %v1840
    %v1842 = vpop.f32.mrb[0].mxu0
    %1843 = vdwg.mxu0
    %1844 = vmatprep.subr.mxu0 0.0
    %v1845 = vand.u32 %v1146, 4294901760
    %v1846 = vsub.f32 %v1146, %v1845
    %v1847 = vand.u32 %v1846, 4294901760
    %v1848 = vsub.f32 %v1846, %v1847
    %v1849 = vand.u32 %v1848, 4294901760
    %1850 = vmatpush1.msra.mxu0 %v1849
    %1851 = vmatprep.subr.mxu0 0.0
    %v1852 = vand.u32 %v1152, 4294901760
    %v1853 = vsub.f32 %v1152, %v1852
    %v1854 = vand.u32 %v1853, 4294901760
    %v1855 = vsub.f32 %v1853, %v1854
    %v1856 = vand.u32 %v1855, 4294901760
    %1857 = vmatpush1.msra.mxu0 %v1856
    %1858 = vmatprep.subr.mxu0 0.0
    %1859 = vmatpush1.msra.mxu0 0.0
    %1860 = vmatprep.subr.mxu0 0.0
    %1861 = vmatpush1.msra.mxu0 0.0
    %1862 = vmatprep.subr.mxu0 0.0
    %1863 = vmatpush1.msra.mxu0 0.0
    %1864 = vmatprep.subr.mxu0 0.0
    %1865 = vmatpush1.msra.mxu0 0.0
    %1866 = vmatprep.subr.mxu0 0.0
    %1867 = vmatpush1.msra.mxu0 0.0
    %1868 = vmatprep.subr.mxu0 0.0
    %1869 = vmatpush1.msra.mxu0 0.0
    %1870 = vmatprep.subr.mxu0 0.0
    %1871 = vmatpush1.msra.mxu0 0.0
    %1872 = vmatprep.subr.mxu0 0.0
    %1873 = vmatpush1.msra.mxu0 0.0
    %1874 = vmatprep.subr.mxu0 0.0
    %1875 = vmatpush1.msra.mxu0 0.0
    %1876 = vmatprep.subr.mxu0 0.0
    %1877 = vmatpush1.msra.mxu0 0.0
    %1878 = vmatprep.subr.mxu0 0.0
    %1879 = vmatpush1.msra.mxu0 0.0
    %1880 = vmatprep.subr.mxu0 0.0
    %1881 = vmatpush1.msra.mxu0 0.0
    %1882 = vmatprep.subr.mxu0 0.0
    %1883 = vmatpush1.msra.mxu0 0.0
    %1884 = vmatprep.subr.mxu0 0.0
    %1885 = vmatpush1.msra.mxu0 0.0
    %1886 = vmatprep.subr.mxu0 0.0
    %1887 = vmatpush1.msra.mxu0 0.0
    %1888 = vmatprep.subr.mxu0 0.0
    %1889 = vmatpush1.msra.mxu0 0.0
    %1890 = vmatprep.subr.mxu0 0.0
    %1891 = vmatpush1.msra.mxu0 0.0
    %1892 = vmatprep.subr.mxu0 0.0
    %1893 = vmatpush1.msra.mxu0 0.0
    %1894 = vmatprep.subr.mxu0 0.0
    %1895 = vmatpush1.msra.mxu0 0.0
    %1896 = vmatprep.subr.mxu0 0.0
    %1897 = vmatpush1.msra.mxu0 0.0
    %1898 = vmatprep.subr.mxu0 0.0
    %1899 = vmatpush1.msra.mxu0 0.0
    %1900 = vmatprep.subr.mxu0 0.0
    %1901 = vmatpush1.msra.mxu0 0.0
    %1902 = vmatprep.subr.mxu0 0.0
    %1903 = vmatpush1.msra.mxu0 0.0
    %1904 = vmatprep.subr.mxu0 0.0
    %1905 = vmatpush1.msra.mxu0 0.0
    %1906 = vmatprep.subr.mxu0 0.0
    %1907 = vmatpush1.msra.mxu0 0.0
    %1908 = vmatprep.subr.mxu0 0.0
    %1909 = vmatpush1.msra.mxu0 0.0
    %1910 = vmatprep.subr.mxu0 0.0
    %1911 = vmatpush1.msra.mxu0 0.0
    %1912 = vmatprep.subr.mxu0 0.0
    %1913 = vmatpush1.msra.mxu0 0.0
    %1914 = vmatprep.subr.mxu0 0.0
    %1915 = vmatpush1.msra.mxu0 0.0
    %1916 = vmatprep.subr.mxu0 0.0
    %1917 = vmatpush1.msra.mxu0 0.0
    %1918 = vmatprep.mubr.f32.mxu0 0.0
    %v1919 = vand.u32 %v1752, 4294901760
    %1920 = vmatmul.mubr.f32.gmra.mrb[0].mxu0 %v1919
    %v1921 = vpop.f32.mrb[0].mxu0
    %v1922 = vadd.f32 %v1831, %v1921
    %v1923 = vpop.f32.mrb[0].mxu0
    %1924 = vmatprep.mubr.f32.mxu0 0.0
    %v1925 = vand.u32 %v1755, 4294901760
    %1926 = vmatmul.mubr.f32.gmra.mrb[0].mxu0 %v1925
    %v1927 = vpop.f32.mrb[0].mxu0
    %v1928 = vadd.f32 %v1841, %v1927
    %v1929 = vpop.f32.mrb[0].mxu0
    %1930 = vdwg.mxu0
    %1931 = vmatprep.subr.mxu0 0.0
    %v1932 = vand.u32 %v1146, 4294901760
    %v1933 = vsub.f32 %v1146, %v1932
    %1934 = vmatpush1.msra.mxu0 %v1933
    %1935 = vmatprep.subr.mxu0 0.0
    %v1936 = vand.u32 %v1152, 4294901760
    %v1937 = vsub.f32 %v1152, %v1936
    %1938 = vmatpush1.msra.mxu0 %v1937
    %1939 = vmatprep.subr.mxu0 0.0
    %1940 = vmatpush1.msra.mxu0 0.0
    %1941 = vmatprep.subr.mxu0 0.0
    %1942 = vmatpush1.msra.mxu0 0.0
    %1943 = vmatprep.subr.mxu0 0.0
    %1944 = vmatpush1.msra.mxu0 0.0
    %1945 = vmatprep.subr.mxu0 0.0
    %1946 = vmatpush1.msra.mxu0 0.0
    %1947 = vmatprep.subr.mxu0 0.0
    %1948 = vmatpush1.msra.mxu0 0.0
    %1949 = vmatprep.subr.mxu0 0.0
    %1950 = vmatpush1.msra.mxu0 0.0
    %1951 = vmatprep.subr.mxu0 0.0
    %1952 = vmatpush1.msra.mxu0 0.0
    %1953 = vmatprep.subr.mxu0 0.0
    %1954 = vmatpush1.msra.mxu0 0.0
    %1955 = vmatprep.subr.mxu0 0.0
    %1956 = vmatpush1.msra.mxu0 0.0
    %1957 = vmatprep.subr.mxu0 0.0
    %1958 = vmatpush1.msra.mxu0 0.0
    %1959 = vmatprep.subr.mxu0 0.0
    %1960 = vmatpush1.msra.mxu0 0.0
    %1961 = vmatprep.subr.mxu0 0.0
    %1962 = vmatpush1.msra.mxu0 0.0
    %1963 = vmatprep.subr.mxu0 0.0
    %1964 = vmatpush1.msra.mxu0 0.0
    %1965 = vmatprep.subr.mxu0 0.0
    %1966 = vmatpush1.msra.mxu0 0.0
    %1967 = vmatprep.subr.mxu0 0.0
    %1968 = vmatpush1.msra.mxu0 0.0
    %1969 = vmatprep.subr.mxu0 0.0
    %1970 = vmatpush1.msra.mxu0 0.0
    %1971 = vmatprep.subr.mxu0 0.0
    %1972 = vmatpush1.msra.mxu0 0.0
    %1973 = vmatprep.subr.mxu0 0.0
    %1974 = vmatpush1.msra.mxu0 0.0
    %1975 = vmatprep.subr.mxu0 0.0
    %1976 = vmatpush1.msra.mxu0 0.0
    %1977 = vmatprep.subr.mxu0 0.0
    %1978 = vmatpush1.msra.mxu0 0.0
    %1979 = vmatprep.subr.mxu0 0.0
    %1980 = vmatpush1.msra.mxu0 0.0
    %1981 = vmatprep.subr.mxu0 0.0
    %1982 = vmatpush1.msra.mxu0 0.0
    %1983 = vmatprep.subr.mxu0 0.0
    %1984 = vmatpush1.msra.mxu0 0.0
    %1985 = vmatprep.subr.mxu0 0.0
    %1986 = vmatpush1.msra.mxu0 0.0
    %1987 = vmatprep.subr.mxu0 0.0
    %1988 = vmatpush1.msra.mxu0 0.0
    %1989 = vmatprep.subr.mxu0 0.0
    %1990 = vmatpush1.msra.mxu0 0.0
    %1991 = vmatprep.subr.mxu0 0.0
    %1992 = vmatpush1.msra.mxu0 0.0
    %1993 = vmatprep.subr.mxu0 0.0
    %1994 = vmatpush1.msra.mxu0 0.0
    %1995 = vmatprep.subr.mxu0 0.0
    %1996 = vmatpush1.msra.mxu0 0.0
    %1997 = vmatprep.subr.mxu0 0.0
    %1998 = vmatpush1.msra.mxu0 0.0
    %1999 = vmatprep.mubr.f32.mxu0 0.0
    %v2000 = vand.u32 %v1752, 4294901760
    %v2001 = vsub.f32 %v1752, %v2000
    %2002 = vmatmul.mubr.f32.gmra.mrb[0].mxu0 %v2001
    %v2003 = vpop.f32.mrb[0].mxu0
    %v2004 = vadd.f32 %v1922, %v2003
    %v2005 = vpop.f32.mrb[0].mxu0
    %2006 = vmatprep.mubr.f32.mxu0 0.0
    %v2007 = vand.u32 %v1755, 4294901760
    %v2008 = vsub.f32 %v1755, %v2007
    %2009 = vmatmul.mubr.f32.gmra.mrb[0].mxu0 %v2008
    %v2010 = vpop.f32.mrb[0].mxu0
    %v2011 = vadd.f32 %v1928, %v2010
    %v2012 = vpop.f32.mrb[0].mxu0
    %2013 = vdwg.mxu0
    %2014 = vmatprep.subr.mxu0 0.0
    %v2015 = vand.u32 %v1146, 4294901760
    %2016 = vmatpush1.msra.mxu0 %v2015
    %2017 = vmatprep.subr.mxu0 0.0
    %v2018 = vand.u32 %v1152, 4294901760
    %2019 = vmatpush1.msra.mxu0 %v2018
    %2020 = vmatprep.subr.mxu0 0.0
    %2021 = vmatpush1.msra.mxu0 0.0
    %2022 = vmatprep.subr.mxu0 0.0
    %2023 = vmatpush1.msra.mxu0 0.0
    %2024 = vmatprep.subr.mxu0 0.0
    %2025 = vmatpush1.msra.mxu0 0.0
    %2026 = vmatprep.subr.mxu0 0.0
    %2027 = vmatpush1.msra.mxu0 0.0
    %2028 = vmatprep.subr.mxu0 0.0
    %2029 = vmatpush1.msra.mxu0 0.0
    %2030 = vmatprep.subr.mxu0 0.0
    %2031 = vmatpush1.msra.mxu0 0.0
    %2032 = vmatprep.subr.mxu0 0.0
    %2033 = vmatpush1.msra.mxu0 0.0
    %2034 = vmatprep.subr.mxu0 0.0
    %2035 = vmatpush1.msra.mxu0 0.0
    %2036 = vmatprep.subr.mxu0 0.0
    %2037 = vmatpush1.msra.mxu0 0.0
    %2038 = vmatprep.subr.mxu0 0.0
    %2039 = vmatpush1.msra.mxu0 0.0
    %2040 = vmatprep.subr.mxu0 0.0
    %2041 = vmatpush1.msra.mxu0 0.0
    %2042 = vmatprep.subr.mxu0 0.0
    %2043 = vmatpush1.msra.mxu0 0.0
    %2044 = vmatprep.subr.mxu0 0.0
    %2045 = vmatpush1.msra.mxu0 0.0
    %2046 = vmatprep.subr.mxu0 0.0
    %2047 = vmatpush1.msra.mxu0 0.0
    %2048 = vmatprep.subr.mxu0 0.0
    %2049 = vmatpush1.msra.mxu0 0.0
    %2050 = vmatprep.subr.mxu0 0.0
    %2051 = vmatpush1.msra.mxu0 0.0
    %2052 = vmatprep.subr.mxu0 0.0
    %2053 = vmatpush1.msra.mxu0 0.0
    %2054 = vmatprep.subr.mxu0 0.0
    %2055 = vmatpush1.msra.mxu0 0.0
    %2056 = vmatprep.subr.mxu0 0.0
    %2057 = vmatpush1.msra.mxu0 0.0
    %2058 = vmatprep.subr.mxu0 0.0
    %2059 = vmatpush1.msra.mxu0 0.0
    %2060 = vmatprep.subr.mxu0 0.0
    %2061 = vmatpush1.msra.mxu0 0.0
    %2062 = vmatprep.subr.mxu0 0.0
    %2063 = vmatpush1.msra.mxu0 0.0
    %2064 = vmatprep.subr.mxu0 0.0
    %2065 = vmatpush1.msra.mxu0 0.0
    %2066 = vmatprep.subr.mxu0 0.0
    %2067 = vmatpush1.msra.mxu0 0.0
    %2068 = vmatprep.subr.mxu0 0.0
    %2069 = vmatpush1.msra.mxu0 0.0
    %2070 = vmatprep.subr.mxu0 0.0
    %2071 = vmatpush1.msra.mxu0 0.0
    %2072 = vmatprep.subr.mxu0 0.0
    %2073 = vmatpush1.msra.mxu0 0.0
    %2074 = vmatprep.subr.mxu0 0.0
    %2075 = vmatpush1.msra.mxu0 0.0
    %2076 = vmatprep.subr.mxu0 0.0
    %2077 = vmatpush1.msra.mxu0 0.0
    %2078 = vmatprep.subr.mxu0 0.0
    %2079 = vmatpush1.msra.mxu0 0.0
    %2080 = vmatprep.mubr.f32.mxu0 0.0
    %v2081 = vand.u32 %v1752, 4294901760
    %v2082 = vsub.f32 %v1752, %v2081
    %v2083 = vand.u32 %v2082, 4294901760
    %2084 = vmatmul.mubr.f32.gmra.mrb[0].mxu0 %v2083
    %v2085 = vpop.f32.mrb[0].mxu0
    %v2086 = vadd.f32 %v2004, %v2085
    %v2087 = vpop.f32.mrb[0].mxu0
    %2088 = vmatprep.mubr.f32.mxu0 0.0
    %v2089 = vand.u32 %v1755, 4294901760
    %v2090 = vsub.f32 %v1755, %v2089
    %v2091 = vand.u32 %v2090, 4294901760
    %2092 = vmatmul.mubr.f32.gmra.mrb[0].mxu0 %v2091
    %v2093 = vpop.f32.mrb[0].mxu0
    %v2094 = vadd.f32 %v2011, %v2093
    %v2095 = vpop.f32.mrb[0].mxu0
    %2096 = vdwg.mxu0
    %2097 = vmatprep.subr.mxu0 0.0
    %v2098 = vand.u32 %v1146, 4294901760
    %v2099 = vsub.f32 %v1146, %v2098
    %v2100 = vand.u32 %v2099, 4294901760
    %2101 = vmatpush1.msra.mxu0 %v2100
    %2102 = vmatprep.subr.mxu0 0.0
    %v2103 = vand.u32 %v1152, 4294901760
    %v2104 = vsub.f32 %v1152, %v2103
    %v2105 = vand.u32 %v2104, 4294901760
    %2106 = vmatpush1.msra.mxu0 %v2105
    %2107 = vmatprep.subr.mxu0 0.0
    %2108 = vmatpush1.msra.mxu0 0.0
    %2109 = vmatprep.subr.mxu0 0.0
    %2110 = vmatpush1.msra.mxu0 0.0
    %2111 = vmatprep.subr.mxu0 0.0
    %2112 = vmatpush1.msra.mxu0 0.0
    %2113 = vmatprep.subr.mxu0 0.0
    %2114 = vmatpush1.msra.mxu0 0.0
    %2115 = vmatprep.subr.mxu0 0.0
    %2116 = vmatpush1.msra.mxu0 0.0
    %2117 = vmatprep.subr.mxu0 0.0
    %2118 = vmatpush1.msra.mxu0 0.0
    %2119 = vmatprep.subr.mxu0 0.0
    %2120 = vmatpush1.msra.mxu0 0.0
    %2121 = vmatprep.subr.mxu0 0.0
    %2122 = vmatpush1.msra.mxu0 0.0
    %2123 = vmatprep.subr.mxu0 0.0
    %2124 = vmatpush1.msra.mxu0 0.0
    %2125 = vmatprep.subr.mxu0 0.0
    %2126 = vmatpush1.msra.mxu0 0.0
    %2127 = vmatprep.subr.mxu0 0.0
    %2128 = vmatpush1.msra.mxu0 0.0
    %2129 = vmatprep.subr.mxu0 0.0
    %2130 = vmatpush1.msra.mxu0 0.0
    %2131 = vmatprep.subr.mxu0 0.0
    %2132 = vmatpush1.msra.mxu0 0.0
    %2133 = vmatprep.subr.mxu0 0.0
    %2134 = vmatpush1.msra.mxu0 0.0
    %2135 = vmatprep.subr.mxu0 0.0
    %2136 = vmatpush1.msra.mxu0 0.0
    %2137 = vmatprep.subr.mxu0 0.0
    %2138 = vmatpush1.msra.mxu0 0.0
    %2139 = vmatprep.subr.mxu0 0.0
    %2140 = vmatpush1.msra.mxu0 0.0
    %2141 = vmatprep.subr.mxu0 0.0
    %2142 = vmatpush1.msra.mxu0 0.0
    %2143 = vmatprep.subr.mxu0 0.0
    %2144 = vmatpush1.msra.mxu0 0.0
    %2145 = vmatprep.subr.mxu0 0.0
    %2146 = vmatpush1.msra.mxu0 0.0
    %2147 = vmatprep.subr.mxu0 0.0
    %2148 = vmatpush1.msra.mxu0 0.0
    %2149 = vmatprep.subr.mxu0 0.0
    %2150 = vmatpush1.msra.mxu0 0.0
    %2151 = vmatprep.subr.mxu0 0.0
    %2152 = vmatpush1.msra.mxu0 0.0
    %2153 = vmatprep.subr.mxu0 0.0
    %2154 = vmatpush1.msra.mxu0 0.0
    %2155 = vmatprep.subr.mxu0 0.0
    %2156 = vmatpush1.msra.mxu0 0.0
    %2157 = vmatprep.subr.mxu0 0.0
    %2158 = vmatpush1.msra.mxu0 0.0
    %2159 = vmatprep.subr.mxu0 0.0
    %2160 = vmatpush1.msra.mxu0 0.0
    %2161 = vmatprep.subr.mxu0 0.0
    %2162 = vmatpush1.msra.mxu0 0.0
    %2163 = vmatprep.subr.mxu0 0.0
    %2164 = vmatpush1.msra.mxu0 0.0
    %2165 = vmatprep.subr.mxu0 0.0
    %2166 = vmatpush1.msra.mxu0 0.0
    %2167 = vmatprep.mubr.f32.mxu0 0.0
    %v2168 = vand.u32 %v1752, 4294901760
    %2169 = vmatmul.mubr.f32.gmra.mrb[0].mxu0 %v2168
    %v2170 = vpop.f32.mrb[0].mxu0
    %v2171 = vadd.f32 %v2086, %v2170
    %v2172 = vpop.f32.mrb[0].mxu0
    %2173 = vmatprep.mubr.f32.mxu0 0.0
    %v2174 = vand.u32 %v1755, 4294901760
    %2175 = vmatmul.mubr.f32.gmra.mrb[0].mxu0 %v2174
    %v2176 = vpop.f32.mrb[0].mxu0
    %v2177 = vadd.f32 %v2094, %v2176
    %v2178 = vpop.f32.mrb[0].mxu0
    %2179 = vdwg.mxu0
    %2180 = vmatprep.subr.mxu0 0.0
    %v2181 = vand.u32 %v1146, 4294901760
    %2182 = vmatpush1.msra.mxu0 %v2181
    %2183 = vmatprep.subr.mxu0 0.0
    %v2184 = vand.u32 %v1152, 4294901760
    %2185 = vmatpush1.msra.mxu0 %v2184
    %2186 = vmatprep.subr.mxu0 0.0
    %2187 = vmatpush1.msra.mxu0 0.0
    %2188 = vmatprep.subr.mxu0 0.0
    %2189 = vmatpush1.msra.mxu0 0.0
    %2190 = vmatprep.subr.mxu0 0.0
    %2191 = vmatpush1.msra.mxu0 0.0
    %2192 = vmatprep.subr.mxu0 0.0
    %2193 = vmatpush1.msra.mxu0 0.0
    %2194 = vmatprep.subr.mxu0 0.0
    %2195 = vmatpush1.msra.mxu0 0.0
    %2196 = vmatprep.subr.mxu0 0.0
    %2197 = vmatpush1.msra.mxu0 0.0
    %2198 = vmatprep.subr.mxu0 0.0
    %2199 = vmatpush1.msra.mxu0 0.0
    %2200 = vmatprep.subr.mxu0 0.0
    %2201 = vmatpush1.msra.mxu0 0.0
    %2202 = vmatprep.subr.mxu0 0.0
    %2203 = vmatpush1.msra.mxu0 0.0
    %2204 = vmatprep.subr.mxu0 0.0
    %2205 = vmatpush1.msra.mxu0 0.0
    %2206 = vmatprep.subr.mxu0 0.0
    %2207 = vmatpush1.msra.mxu0 0.0
    %2208 = vmatprep.subr.mxu0 0.0
    %2209 = vmatpush1.msra.mxu0 0.0
    %2210 = vmatprep.subr.mxu0 0.0
    %2211 = vmatpush1.msra.mxu0 0.0
    %2212 = vmatprep.subr.mxu0 0.0
    %2213 = vmatpush1.msra.mxu0 0.0
    %2214 = vmatprep.subr.mxu0 0.0
    %2215 = vmatpush1.msra.mxu0 0.0
    %2216 = vmatprep.subr.mxu0 0.0
    %2217 = vmatpush1.msra.mxu0 0.0
    %2218 = vmatprep.subr.mxu0 0.0
    %2219 = vmatpush1.msra.mxu0 0.0
    %2220 = vmatprep.subr.mxu0 0.0
    %2221 = vmatpush1.msra.mxu0 0.0
    %2222 = vmatprep.subr.mxu0 0.0
    %2223 = vmatpush1.msra.mxu0 0.0
    %2224 = vmatprep.subr.mxu0 0.0
    %2225 = vmatpush1.msra.mxu0 0.0
    %2226 = vmatprep.subr.mxu0 0.0
    %2227 = vmatpush1.msra.mxu0 0.0
    %2228 = vmatprep.subr.mxu0 0.0
    %2229 = vmatpush1.msra.mxu0 0.0
    %2230 = vmatprep.subr.mxu0 0.0
    %2231 = vmatpush1.msra.mxu0 0.0
    %2232 = vmatprep.subr.mxu0 0.0
    %2233 = vmatpush1.msra.mxu0 0.0
    %2234 = vmatprep.subr.mxu0 0.0
    %2235 = vmatpush1.msra.mxu0 0.0
    %2236 = vmatprep.subr.mxu0 0.0
    %2237 = vmatpush1.msra.mxu0 0.0
    %2238 = vmatprep.subr.mxu0 0.0
    %2239 = vmatpush1.msra.mxu0 0.0
    %2240 = vmatprep.subr.mxu0 0.0
    %2241 = vmatpush1.msra.mxu0 0.0
    %2242 = vmatprep.subr.mxu0 0.0
    %2243 = vmatpush1.msra.mxu0 0.0
    %2244 = vmatprep.subr.mxu0 0.0
    %2245 = vmatpush1.msra.mxu0 0.0
    %2246 = vmatprep.mubr.f32.mxu0 0.0
    %v2247 = vand.u32 %v1752, 4294901760
    %2248 = vmatmul.mubr.f32.gmra.mrb[0].mxu0 %v2247
    %v2249 = vpop.f32.mrb[0].mxu0
    %v2250 = vadd.f32 %v2171, %v2249
    %v2251 = vpop.f32.mrb[0].mxu0
    %2252 = vmatprep.mubr.f32.mxu0 0.0
    %v2253 = vand.u32 %v1755, 4294901760
    %2254 = vmatmul.mubr.f32.gmra.mrb[0].mxu0 %v2253
    %v2255 = vpop.f32.mrb[0].mxu0
    %v2256 = vadd.f32 %v2177, %v2255
    %v2257 = vpop.f32.mrb[0].mxu0
    %2258 = vdwg.mxu0
    %v2260 = vsel %vm74, %v1231, 0
    %v2263 = vsel %vm74, %v1232, 0
    %2265 = vmatprep.subr.mxu0 0.0
    %v2266 = vand.u32 %v1158, 4294901760
    %2267 = vmatpush1.msra.mxu0 %v2266
    %2268 = vmatprep.subr.mxu0 0.0
    %v2269 = vand.u32 %v1164, 4294901760
    %2270 = vmatpush1.msra.mxu0 %v2269
    %2271 = vmatprep.subr.mxu0 0.0
    %2272 = vmatpush1.msra.mxu0 0.0
    %2273 = vmatprep.subr.mxu0 0.0
    %2274 = vmatpush1.msra.mxu0 0.0
    %2275 = vmatprep.subr.mxu0 0.0
    %2276 = vmatpush1.msra.mxu0 0.0
    %2277 = vmatprep.subr.mxu0 0.0
    %2278 = vmatpush1.msra.mxu0 0.0
    %2279 = vmatprep.subr.mxu0 0.0
    %2280 = vmatpush1.msra.mxu0 0.0
    %2281 = vmatprep.subr.mxu0 0.0
    %2282 = vmatpush1.msra.mxu0 0.0
    %2283 = vmatprep.subr.mxu0 0.0
    %2284 = vmatpush1.msra.mxu0 0.0
    %2285 = vmatprep.subr.mxu0 0.0
    %2286 = vmatpush1.msra.mxu0 0.0
    %2287 = vmatprep.subr.mxu0 0.0
    %2288 = vmatpush1.msra.mxu0 0.0
    %2289 = vmatprep.subr.mxu0 0.0
    %2290 = vmatpush1.msra.mxu0 0.0
    %2291 = vmatprep.subr.mxu0 0.0
    %2292 = vmatpush1.msra.mxu0 0.0
    %2293 = vmatprep.subr.mxu0 0.0
    %2294 = vmatpush1.msra.mxu0 0.0
    %2295 = vmatprep.subr.mxu0 0.0
    %2296 = vmatpush1.msra.mxu0 0.0
    %2297 = vmatprep.subr.mxu0 0.0
    %2298 = vmatpush1.msra.mxu0 0.0
    %2299 = vmatprep.subr.mxu0 0.0
    %2300 = vmatpush1.msra.mxu0 0.0
    %2301 = vmatprep.subr.mxu0 0.0
    %2302 = vmatpush1.msra.mxu0 0.0
    %2303 = vmatprep.subr.mxu0 0.0
    %2304 = vmatpush1.msra.mxu0 0.0
    %2305 = vmatprep.subr.mxu0 0.0
    %2306 = vmatpush1.msra.mxu0 0.0
    %2307 = vmatprep.subr.mxu0 0.0
    %2308 = vmatpush1.msra.mxu0 0.0
    %2309 = vmatprep.subr.mxu0 0.0
    %2310 = vmatpush1.msra.mxu0 0.0
    %2311 = vmatprep.subr.mxu0 0.0
    %2312 = vmatpush1.msra.mxu0 0.0
    %2313 = vmatprep.subr.mxu0 0.0
    %2314 = vmatpush1.msra.mxu0 0.0
    %2315 = vmatprep.subr.mxu0 0.0
    %2316 = vmatpush1.msra.mxu0 0.0
    %2317 = vmatprep.subr.mxu0 0.0
    %2318 = vmatpush1.msra.mxu0 0.0
    %2319 = vmatprep.subr.mxu0 0.0
    %2320 = vmatpush1.msra.mxu0 0.0
    %2321 = vmatprep.subr.mxu0 0.0
    %2322 = vmatpush1.msra.mxu0 0.0
    %2323 = vmatprep.subr.mxu0 0.0
    %2324 = vmatpush1.msra.mxu0 0.0
    %2325 = vmatprep.subr.mxu0 0.0
    %2326 = vmatpush1.msra.mxu0 0.0
    %2327 = vmatprep.subr.mxu0 0.0
    %2328 = vmatpush1.msra.mxu0 0.0
    %2329 = vmatprep.subr.mxu0 0.0
    %2330 = vmatpush1.msra.mxu0 0.0
    %2331 = vmatprep.mubr.f32.mxu0 0.0
    %v2332 = vand.u32 %v2260, 4294901760
    %v2333 = vsub.f32 %v2260, %v2332
    %v2334 = vand.u32 %v2333, 4294901760
    %v2335 = vsub.f32 %v2333, %v2334
    %v2336 = vand.u32 %v2335, 4294901760
    %2337 = vmatmul.mubr.f32.gmra.mrb[0].mxu0 %v2336
    %v2338 = vpop.f32.mrb[0].mxu0
    %v2339 = vadd.f32 0.0, %v2338
    %v2340 = vpop.f32.mrb[0].mxu0
    %2341 = vmatprep.mubr.f32.mxu0 0.0
    %v2342 = vand.u32 %v2263, 4294901760
    %v2343 = vsub.f32 %v2263, %v2342
    %v2344 = vand.u32 %v2343, 4294901760
    %v2345 = vsub.f32 %v2343, %v2344
    %v2346 = vand.u32 %v2345, 4294901760
    %2347 = vmatmul.mubr.f32.gmra.mrb[0].mxu0 %v2346
    %v2348 = vpop.f32.mrb[0].mxu0
    %v2349 = vadd.f32 0.0, %v2348
    %v2350 = vpop.f32.mrb[0].mxu0
    %2351 = vdwg.mxu0
    %2352 = vmatprep.subr.mxu0 0.0
    %v2353 = vand.u32 %v1158, 4294901760
    %v2354 = vsub.f32 %v1158, %v2353
    %v2355 = vand.u32 %v2354, 4294901760
    %v2356 = vsub.f32 %v2354, %v2355
    %v2357 = vand.u32 %v2356, 4294901760
    %2358 = vmatpush1.msra.mxu0 %v2357
    %2359 = vmatprep.subr.mxu0 0.0
    %v2360 = vand.u32 %v1164, 4294901760
    %v2361 = vsub.f32 %v1164, %v2360
    %v2362 = vand.u32 %v2361, 4294901760
    %v2363 = vsub.f32 %v2361, %v2362
    %v2364 = vand.u32 %v2363, 4294901760
    %2365 = vmatpush1.msra.mxu0 %v2364
    %2366 = vmatprep.subr.mxu0 0.0
    %2367 = vmatpush1.msra.mxu0 0.0
    %2368 = vmatprep.subr.mxu0 0.0
    %2369 = vmatpush1.msra.mxu0 0.0
    %2370 = vmatprep.subr.mxu0 0.0
    %2371 = vmatpush1.msra.mxu0 0.0
    %2372 = vmatprep.subr.mxu0 0.0
    %2373 = vmatpush1.msra.mxu0 0.0
    %2374 = vmatprep.subr.mxu0 0.0
    %2375 = vmatpush1.msra.mxu0 0.0
    %2376 = vmatprep.subr.mxu0 0.0
    %2377 = vmatpush1.msra.mxu0 0.0
    %2378 = vmatprep.subr.mxu0 0.0
    %2379 = vmatpush1.msra.mxu0 0.0
    %2380 = vmatprep.subr.mxu0 0.0
    %2381 = vmatpush1.msra.mxu0 0.0
    %2382 = vmatprep.subr.mxu0 0.0
    %2383 = vmatpush1.msra.mxu0 0.0
    %2384 = vmatprep.subr.mxu0 0.0
    %2385 = vmatpush1.msra.mxu0 0.0
    %2386 = vmatprep.subr.mxu0 0.0
    %2387 = vmatpush1.msra.mxu0 0.0
    %2388 = vmatprep.subr.mxu0 0.0
    %2389 = vmatpush1.msra.mxu0 0.0
    %2390 = vmatprep.subr.mxu0 0.0
    %2391 = vmatpush1.msra.mxu0 0.0
    %2392 = vmatprep.subr.mxu0 0.0
    %2393 = vmatpush1.msra.mxu0 0.0
    %2394 = vmatprep.subr.mxu0 0.0
    %2395 = vmatpush1.msra.mxu0 0.0
    %2396 = vmatprep.subr.mxu0 0.0
    %2397 = vmatpush1.msra.mxu0 0.0
    %2398 = vmatprep.subr.mxu0 0.0
    %2399 = vmatpush1.msra.mxu0 0.0
    %2400 = vmatprep.subr.mxu0 0.0
    %2401 = vmatpush1.msra.mxu0 0.0
    %2402 = vmatprep.subr.mxu0 0.0
    %2403 = vmatpush1.msra.mxu0 0.0
    %2404 = vmatprep.subr.mxu0 0.0
    %2405 = vmatpush1.msra.mxu0 0.0
    %2406 = vmatprep.subr.mxu0 0.0
    %2407 = vmatpush1.msra.mxu0 0.0
    %2408 = vmatprep.subr.mxu0 0.0
    %2409 = vmatpush1.msra.mxu0 0.0
    %2410 = vmatprep.subr.mxu0 0.0
    %2411 = vmatpush1.msra.mxu0 0.0
    %2412 = vmatprep.subr.mxu0 0.0
    %2413 = vmatpush1.msra.mxu0 0.0
    %2414 = vmatprep.subr.mxu0 0.0
    %2415 = vmatpush1.msra.mxu0 0.0
    %2416 = vmatprep.subr.mxu0 0.0
    %2417 = vmatpush1.msra.mxu0 0.0
    %2418 = vmatprep.subr.mxu0 0.0
    %2419 = vmatpush1.msra.mxu0 0.0
    %2420 = vmatprep.subr.mxu0 0.0
    %2421 = vmatpush1.msra.mxu0 0.0
    %2422 = vmatprep.subr.mxu0 0.0
    %2423 = vmatpush1.msra.mxu0 0.0
    %2424 = vmatprep.subr.mxu0 0.0
    %2425 = vmatpush1.msra.mxu0 0.0
    %2426 = vmatprep.mubr.f32.mxu0 0.0
    %v2427 = vand.u32 %v2260, 4294901760
    %2428 = vmatmul.mubr.f32.gmra.mrb[0].mxu0 %v2427
    %v2429 = vpop.f32.mrb[0].mxu0
    %v2430 = vadd.f32 %v2339, %v2429
    %v2431 = vpop.f32.mrb[0].mxu0
    %2432 = vmatprep.mubr.f32.mxu0 0.0
    %v2433 = vand.u32 %v2263, 4294901760
    %2434 = vmatmul.mubr.f32.gmra.mrb[0].mxu0 %v2433
    %v2435 = vpop.f32.mrb[0].mxu0
    %v2436 = vadd.f32 %v2349, %v2435
    %v2437 = vpop.f32.mrb[0].mxu0
    %2438 = vdwg.mxu0
    %2439 = vmatprep.subr.mxu0 0.0
    %v2440 = vand.u32 %v1158, 4294901760
    %v2441 = vsub.f32 %v1158, %v2440
    %2442 = vmatpush1.msra.mxu0 %v2441
    %2443 = vmatprep.subr.mxu0 0.0
    %v2444 = vand.u32 %v1164, 4294901760
    %v2445 = vsub.f32 %v1164, %v2444
    %2446 = vmatpush1.msra.mxu0 %v2445
    %2447 = vmatprep.subr.mxu0 0.0
    %2448 = vmatpush1.msra.mxu0 0.0
    %2449 = vmatprep.subr.mxu0 0.0
    %2450 = vmatpush1.msra.mxu0 0.0
    %2451 = vmatprep.subr.mxu0 0.0
    %2452 = vmatpush1.msra.mxu0 0.0
    %2453 = vmatprep.subr.mxu0 0.0
    %2454 = vmatpush1.msra.mxu0 0.0
    %2455 = vmatprep.subr.mxu0 0.0
    %2456 = vmatpush1.msra.mxu0 0.0
    %2457 = vmatprep.subr.mxu0 0.0
    %2458 = vmatpush1.msra.mxu0 0.0
    %2459 = vmatprep.subr.mxu0 0.0
    %2460 = vmatpush1.msra.mxu0 0.0
    %2461 = vmatprep.subr.mxu0 0.0
    %2462 = vmatpush1.msra.mxu0 0.0
    %2463 = vmatprep.subr.mxu0 0.0
    %2464 = vmatpush1.msra.mxu0 0.0
    %2465 = vmatprep.subr.mxu0 0.0
    %2466 = vmatpush1.msra.mxu0 0.0
    %2467 = vmatprep.subr.mxu0 0.0
    %2468 = vmatpush1.msra.mxu0 0.0
    %2469 = vmatprep.subr.mxu0 0.0
    %2470 = vmatpush1.msra.mxu0 0.0
    %2471 = vmatprep.subr.mxu0 0.0
    %2472 = vmatpush1.msra.mxu0 0.0
    %2473 = vmatprep.subr.mxu0 0.0
    %2474 = vmatpush1.msra.mxu0 0.0
    %2475 = vmatprep.subr.mxu0 0.0
    %2476 = vmatpush1.msra.mxu0 0.0
    %2477 = vmatprep.subr.mxu0 0.0
    %2478 = vmatpush1.msra.mxu0 0.0
    %2479 = vmatprep.subr.mxu0 0.0
    %2480 = vmatpush1.msra.mxu0 0.0
    %2481 = vmatprep.subr.mxu0 0.0
    %2482 = vmatpush1.msra.mxu0 0.0
    %2483 = vmatprep.subr.mxu0 0.0
    %2484 = vmatpush1.msra.mxu0 0.0
    %2485 = vmatprep.subr.mxu0 0.0
    %2486 = vmatpush1.msra.mxu0 0.0
    %2487 = vmatprep.subr.mxu0 0.0
    %2488 = vmatpush1.msra.mxu0 0.0
    %2489 = vmatprep.subr.mxu0 0.0
    %2490 = vmatpush1.msra.mxu0 0.0
    %2491 = vmatprep.subr.mxu0 0.0
    %2492 = vmatpush1.msra.mxu0 0.0
    %2493 = vmatprep.subr.mxu0 0.0
    %2494 = vmatpush1.msra.mxu0 0.0
    %2495 = vmatprep.subr.mxu0 0.0
    %2496 = vmatpush1.msra.mxu0 0.0
    %2497 = vmatprep.subr.mxu0 0.0
    %2498 = vmatpush1.msra.mxu0 0.0
    %2499 = vmatprep.subr.mxu0 0.0
    %2500 = vmatpush1.msra.mxu0 0.0
    %2501 = vmatprep.subr.mxu0 0.0
    %2502 = vmatpush1.msra.mxu0 0.0
    %2503 = vmatprep.subr.mxu0 0.0
    %2504 = vmatpush1.msra.mxu0 0.0
    %2505 = vmatprep.subr.mxu0 0.0
    %2506 = vmatpush1.msra.mxu0 0.0
    %2507 = vmatprep.mubr.f32.mxu0 0.0
    %v2508 = vand.u32 %v2260, 4294901760
    %v2509 = vsub.f32 %v2260, %v2508
    %2510 = vmatmul.mubr.f32.gmra.mrb[0].mxu0 %v2509
    %v2511 = vpop.f32.mrb[0].mxu0
    %v2512 = vadd.f32 %v2430, %v2511
    %v2513 = vpop.f32.mrb[0].mxu0
    %2514 = vmatprep.mubr.f32.mxu0 0.0
    %v2515 = vand.u32 %v2263, 4294901760
    %v2516 = vsub.f32 %v2263, %v2515
    %2517 = vmatmul.mubr.f32.gmra.mrb[0].mxu0 %v2516
    %v2518 = vpop.f32.mrb[0].mxu0
    %v2519 = vadd.f32 %v2436, %v2518
    %v2520 = vpop.f32.mrb[0].mxu0
    %2521 = vdwg.mxu0
    %2522 = vmatprep.subr.mxu0 0.0
    %v2523 = vand.u32 %v1158, 4294901760
    %2524 = vmatpush1.msra.mxu0 %v2523
    %2525 = vmatprep.subr.mxu0 0.0
    %v2526 = vand.u32 %v1164, 4294901760
    %2527 = vmatpush1.msra.mxu0 %v2526
    %2528 = vmatprep.subr.mxu0 0.0
    %2529 = vmatpush1.msra.mxu0 0.0
    %2530 = vmatprep.subr.mxu0 0.0
    %2531 = vmatpush1.msra.mxu0 0.0
    %2532 = vmatprep.subr.mxu0 0.0
    %2533 = vmatpush1.msra.mxu0 0.0
    %2534 = vmatprep.subr.mxu0 0.0
    %2535 = vmatpush1.msra.mxu0 0.0
    %2536 = vmatprep.subr.mxu0 0.0
    %2537 = vmatpush1.msra.mxu0 0.0
    %2538 = vmatprep.subr.mxu0 0.0
    %2539 = vmatpush1.msra.mxu0 0.0
    %2540 = vmatprep.subr.mxu0 0.0
    %2541 = vmatpush1.msra.mxu0 0.0
    %2542 = vmatprep.subr.mxu0 0.0
    %2543 = vmatpush1.msra.mxu0 0.0
    %2544 = vmatprep.subr.mxu0 0.0
    %2545 = vmatpush1.msra.mxu0 0.0
    %2546 = vmatprep.subr.mxu0 0.0
    %2547 = vmatpush1.msra.mxu0 0.0
    %2548 = vmatprep.subr.mxu0 0.0
    %2549 = vmatpush1.msra.mxu0 0.0
    %2550 = vmatprep.subr.mxu0 0.0
    %2551 = vmatpush1.msra.mxu0 0.0
    %2552 = vmatprep.subr.mxu0 0.0
    %2553 = vmatpush1.msra.mxu0 0.0
    %2554 = vmatprep.subr.mxu0 0.0
    %2555 = vmatpush1.msra.mxu0 0.0
    %2556 = vmatprep.subr.mxu0 0.0
    %2557 = vmatpush1.msra.mxu0 0.0
    %2558 = vmatprep.subr.mxu0 0.0
    %2559 = vmatpush1.msra.mxu0 0.0
    %2560 = vmatprep.subr.mxu0 0.0
    %2561 = vmatpush1.msra.mxu0 0.0
    %2562 = vmatprep.subr.mxu0 0.0
    %2563 = vmatpush1.msra.mxu0 0.0
    %2564 = vmatprep.subr.mxu0 0.0
    %2565 = vmatpush1.msra.mxu0 0.0
    %2566 = vmatprep.subr.mxu0 0.0
    %2567 = vmatpush1.msra.mxu0 0.0
    %2568 = vmatprep.subr.mxu0 0.0
    %2569 = vmatpush1.msra.mxu0 0.0
    %2570 = vmatprep.subr.mxu0 0.0
    %2571 = vmatpush1.msra.mxu0 0.0
    %2572 = vmatprep.subr.mxu0 0.0
    %2573 = vmatpush1.msra.mxu0 0.0
    %2574 = vmatprep.subr.mxu0 0.0
    %2575 = vmatpush1.msra.mxu0 0.0
    %2576 = vmatprep.subr.mxu0 0.0
    %2577 = vmatpush1.msra.mxu0 0.0
    %2578 = vmatprep.subr.mxu0 0.0
    %2579 = vmatpush1.msra.mxu0 0.0
    %2580 = vmatprep.subr.mxu0 0.0
    %2581 = vmatpush1.msra.mxu0 0.0
    %2582 = vmatprep.subr.mxu0 0.0
    %2583 = vmatpush1.msra.mxu0 0.0
    %2584 = vmatprep.subr.mxu0 0.0
    %2585 = vmatpush1.msra.mxu0 0.0
    %2586 = vmatprep.subr.mxu0 0.0
    %2587 = vmatpush1.msra.mxu0 0.0
    %2588 = vmatprep.mubr.f32.mxu0 0.0
    %v2589 = vand.u32 %v2260, 4294901760
    %v2590 = vsub.f32 %v2260, %v2589
    %v2591 = vand.u32 %v2590, 4294901760
    %2592 = vmatmul.mubr.f32.gmra.mrb[0].mxu0 %v2591
    %v2593 = vpop.f32.mrb[0].mxu0
    %v2594 = vadd.f32 %v2512, %v2593
    %v2595 = vpop.f32.mrb[0].mxu0
    %2596 = vmatprep.mubr.f32.mxu0 0.0
    %v2597 = vand.u32 %v2263, 4294901760
    %v2598 = vsub.f32 %v2263, %v2597
    %v2599 = vand.u32 %v2598, 4294901760
    %2600 = vmatmul.mubr.f32.gmra.mrb[0].mxu0 %v2599
    %v2601 = vpop.f32.mrb[0].mxu0
    %v2602 = vadd.f32 %v2519, %v2601
    %v2603 = vpop.f32.mrb[0].mxu0
    %2604 = vdwg.mxu0
    %2605 = vmatprep.subr.mxu0 0.0
    %v2606 = vand.u32 %v1158, 4294901760
    %v2607 = vsub.f32 %v1158, %v2606
    %v2608 = vand.u32 %v2607, 4294901760
    %2609 = vmatpush1.msra.mxu0 %v2608
    %2610 = vmatprep.subr.mxu0 0.0
    %v2611 = vand.u32 %v1164, 4294901760
    %v2612 = vsub.f32 %v1164, %v2611
    %v2613 = vand.u32 %v2612, 4294901760
    %2614 = vmatpush1.msra.mxu0 %v2613
    %2615 = vmatprep.subr.mxu0 0.0
    %2616 = vmatpush1.msra.mxu0 0.0
    %2617 = vmatprep.subr.mxu0 0.0
    %2618 = vmatpush1.msra.mxu0 0.0
    %2619 = vmatprep.subr.mxu0 0.0
    %2620 = vmatpush1.msra.mxu0 0.0
    %2621 = vmatprep.subr.mxu0 0.0
    %2622 = vmatpush1.msra.mxu0 0.0
    %2623 = vmatprep.subr.mxu0 0.0
    %2624 = vmatpush1.msra.mxu0 0.0
    %2625 = vmatprep.subr.mxu0 0.0
    %2626 = vmatpush1.msra.mxu0 0.0
    %2627 = vmatprep.subr.mxu0 0.0
    %2628 = vmatpush1.msra.mxu0 0.0
    %2629 = vmatprep.subr.mxu0 0.0
    %2630 = vmatpush1.msra.mxu0 0.0
    %2631 = vmatprep.subr.mxu0 0.0
    %2632 = vmatpush1.msra.mxu0 0.0
    %2633 = vmatprep.subr.mxu0 0.0
    %2634 = vmatpush1.msra.mxu0 0.0
    %2635 = vmatprep.subr.mxu0 0.0
    %2636 = vmatpush1.msra.mxu0 0.0
    %2637 = vmatprep.subr.mxu0 0.0
    %2638 = vmatpush1.msra.mxu0 0.0
    %2639 = vmatprep.subr.mxu0 0.0
    %2640 = vmatpush1.msra.mxu0 0.0
    %2641 = vmatprep.subr.mxu0 0.0
    %2642 = vmatpush1.msra.mxu0 0.0
    %2643 = vmatprep.subr.mxu0 0.0
    %2644 = vmatpush1.msra.mxu0 0.0
    %2645 = vmatprep.subr.mxu0 0.0
    %2646 = vmatpush1.msra.mxu0 0.0
    %2647 = vmatprep.subr.mxu0 0.0
    %2648 = vmatpush1.msra.mxu0 0.0
    %2649 = vmatprep.subr.mxu0 0.0
    %2650 = vmatpush1.msra.mxu0 0.0
    %2651 = vmatprep.subr.mxu0 0.0
    %2652 = vmatpush1.msra.mxu0 0.0
    %2653 = vmatprep.subr.mxu0 0.0
    %2654 = vmatpush1.msra.mxu0 0.0
    %2655 = vmatprep.subr.mxu0 0.0
    %2656 = vmatpush1.msra.mxu0 0.0
    %2657 = vmatprep.subr.mxu0 0.0
    %2658 = vmatpush1.msra.mxu0 0.0
    %2659 = vmatprep.subr.mxu0 0.0
    %2660 = vmatpush1.msra.mxu0 0.0
    %2661 = vmatprep.subr.mxu0 0.0
    %2662 = vmatpush1.msra.mxu0 0.0
    %2663 = vmatprep.subr.mxu0 0.0
    %2664 = vmatpush1.msra.mxu0 0.0
    %2665 = vmatprep.subr.mxu0 0.0
    %2666 = vmatpush1.msra.mxu0 0.0
    %2667 = vmatprep.subr.mxu0 0.0
    %2668 = vmatpush1.msra.mxu0 0.0
    %2669 = vmatprep.subr.mxu0 0.0
    %2670 = vmatpush1.msra.mxu0 0.0
    %2671 = vmatprep.subr.mxu0 0.0
    %2672 = vmatpush1.msra.mxu0 0.0
    %2673 = vmatprep.subr.mxu0 0.0
    %2674 = vmatpush1.msra.mxu0 0.0
    %2675 = vmatprep.mubr.f32.mxu0 0.0
    %v2676 = vand.u32 %v2260, 4294901760
    %2677 = vmatmul.mubr.f32.gmra.mrb[0].mxu0 %v2676
    %v2678 = vpop.f32.mrb[0].mxu0
    %v2679 = vadd.f32 %v2594, %v2678
    %v2680 = vpop.f32.mrb[0].mxu0
    %2681 = vmatprep.mubr.f32.mxu0 0.0
    %v2682 = vand.u32 %v2263, 4294901760
    %2683 = vmatmul.mubr.f32.gmra.mrb[0].mxu0 %v2682
    %v2684 = vpop.f32.mrb[0].mxu0
    %v2685 = vadd.f32 %v2602, %v2684
    %v2686 = vpop.f32.mrb[0].mxu0
    %2687 = vdwg.mxu0
    %2688 = vmatprep.subr.mxu0 0.0
    %v2689 = vand.u32 %v1158, 4294901760
    %2690 = vmatpush1.msra.mxu0 %v2689
    %2691 = vmatprep.subr.mxu0 0.0
    %v2692 = vand.u32 %v1164, 4294901760
    %2693 = vmatpush1.msra.mxu0 %v2692
    %2694 = vmatprep.subr.mxu0 0.0
    %2695 = vmatpush1.msra.mxu0 0.0
    %2696 = vmatprep.subr.mxu0 0.0
    %2697 = vmatpush1.msra.mxu0 0.0
    %2698 = vmatprep.subr.mxu0 0.0
    %2699 = vmatpush1.msra.mxu0 0.0
    %2700 = vmatprep.subr.mxu0 0.0
    %2701 = vmatpush1.msra.mxu0 0.0
    %2702 = vmatprep.subr.mxu0 0.0
    %2703 = vmatpush1.msra.mxu0 0.0
    %2704 = vmatprep.subr.mxu0 0.0
    %2705 = vmatpush1.msra.mxu0 0.0
    %2706 = vmatprep.subr.mxu0 0.0
    %2707 = vmatpush1.msra.mxu0 0.0
    %2708 = vmatprep.subr.mxu0 0.0
    %2709 = vmatpush1.msra.mxu0 0.0
    %2710 = vmatprep.subr.mxu0 0.0
    %2711 = vmatpush1.msra.mxu0 0.0
    %2712 = vmatprep.subr.mxu0 0.0
    %2713 = vmatpush1.msra.mxu0 0.0
    %2714 = vmatprep.subr.mxu0 0.0
    %2715 = vmatpush1.msra.mxu0 0.0
    %2716 = vmatprep.subr.mxu0 0.0
    %2717 = vmatpush1.msra.mxu0 0.0
    %2718 = vmatprep.subr.mxu0 0.0
    %2719 = vmatpush1.msra.mxu0 0.0
    %2720 = vmatprep.subr.mxu0 0.0
    %2721 = vmatpush1.msra.mxu0 0.0
    %2722 = vmatprep.subr.mxu0 0.0
    %2723 = vmatpush1.msra.mxu0 0.0
    %2724 = vmatprep.subr.mxu0 0.0
    %2725 = vmatpush1.msra.mxu0 0.0
    %2726 = vmatprep.subr.mxu0 0.0
    %2727 = vmatpush1.msra.mxu0 0.0
    %2728 = vmatprep.subr.mxu0 0.0
    %2729 = vmatpush1.msra.mxu0 0.0
    %2730 = vmatprep.subr.mxu0 0.0
    %2731 = vmatpush1.msra.mxu0 0.0
    %2732 = vmatprep.subr.mxu0 0.0
    %2733 = vmatpush1.msra.mxu0 0.0
    %2734 = vmatprep.subr.mxu0 0.0
    %2735 = vmatpush1.msra.mxu0 0.0
    %2736 = vmatprep.subr.mxu0 0.0
    %2737 = vmatpush1.msra.mxu0 0.0
    %2738 = vmatprep.subr.mxu0 0.0
    %2739 = vmatpush1.msra.mxu0 0.0
    %2740 = vmatprep.subr.mxu0 0.0
    %2741 = vmatpush1.msra.mxu0 0.0
    %2742 = vmatprep.subr.mxu0 0.0
    %2743 = vmatpush1.msra.mxu0 0.0
    %2744 = vmatprep.subr.mxu0 0.0
    %2745 = vmatpush1.msra.mxu0 0.0
    %2746 = vmatprep.subr.mxu0 0.0
    %2747 = vmatpush1.msra.mxu0 0.0
    %2748 = vmatprep.subr.mxu0 0.0
    %2749 = vmatpush1.msra.mxu0 0.0
    %2750 = vmatprep.subr.mxu0 0.0
    %2751 = vmatpush1.msra.mxu0 0.0
    %2752 = vmatprep.subr.mxu0 0.0
    %2753 = vmatpush1.msra.mxu0 0.0
    %2754 = vmatprep.mubr.f32.mxu0 0.0
    %v2755 = vand.u32 %v2260, 4294901760
    %2756 = vmatmul.mubr.f32.gmra.mrb[0].mxu0 %v2755
    %v2757 = vpop.f32.mrb[0].mxu0
    %v2758 = vadd.f32 %v2679, %v2757
    %v2759 = vpop.f32.mrb[0].mxu0
    %2760 = vmatprep.mubr.f32.mxu0 0.0
    %v2761 = vand.u32 %v2263, 4294901760
    %2762 = vmatmul.mubr.f32.gmra.mrb[0].mxu0 %v2761
    %v2763 = vpop.f32.mrb[0].mxu0
    %v2764 = vadd.f32 %v2685, %v2763
    %v2765 = vpop.f32.mrb[0].mxu0
    %2766 = vdwg.mxu0
    %v2768 = vsel %vm74, %v1233, 0
    %v2771 = vsel %vm74, %v1234, 0
    %2773 = vmatprep.subr.mxu0 0.0
    %v2774 = vand.u32 %v1170, 4294901760
    %2775 = vmatpush1.msra.mxu0 %v2774
    %2776 = vmatprep.subr.mxu0 0.0
    %v2777 = vand.u32 %v1176, 4294901760
    %2778 = vmatpush1.msra.mxu0 %v2777
    %2779 = vmatprep.subr.mxu0 0.0
    %2780 = vmatpush1.msra.mxu0 0.0
    %2781 = vmatprep.subr.mxu0 0.0
    %2782 = vmatpush1.msra.mxu0 0.0
    %2783 = vmatprep.subr.mxu0 0.0
    %2784 = vmatpush1.msra.mxu0 0.0
    %2785 = vmatprep.subr.mxu0 0.0
    %2786 = vmatpush1.msra.mxu0 0.0
    %2787 = vmatprep.subr.mxu0 0.0
    %2788 = vmatpush1.msra.mxu0 0.0
    %2789 = vmatprep.subr.mxu0 0.0
    %2790 = vmatpush1.msra.mxu0 0.0
    %2791 = vmatprep.subr.mxu0 0.0
    %2792 = vmatpush1.msra.mxu0 0.0
    %2793 = vmatprep.subr.mxu0 0.0
    %2794 = vmatpush1.msra.mxu0 0.0
    %2795 = vmatprep.subr.mxu0 0.0
    %2796 = vmatpush1.msra.mxu0 0.0
    %2797 = vmatprep.subr.mxu0 0.0
    %2798 = vmatpush1.msra.mxu0 0.0
    %2799 = vmatprep.subr.mxu0 0.0
    %2800 = vmatpush1.msra.mxu0 0.0
    %2801 = vmatprep.subr.mxu0 0.0
    %2802 = vmatpush1.msra.mxu0 0.0
    %2803 = vmatprep.subr.mxu0 0.0
    %2804 = vmatpush1.msra.mxu0 0.0
    %2805 = vmatprep.subr.mxu0 0.0
    %2806 = vmatpush1.msra.mxu0 0.0
    %2807 = vmatprep.subr.mxu0 0.0
    %2808 = vmatpush1.msra.mxu0 0.0
    %2809 = vmatprep.subr.mxu0 0.0
    %2810 = vmatpush1.msra.mxu0 0.0
    %2811 = vmatprep.subr.mxu0 0.0
    %2812 = vmatpush1.msra.mxu0 0.0
    %2813 = vmatprep.subr.mxu0 0.0
    %2814 = vmatpush1.msra.mxu0 0.0
    %2815 = vmatprep.subr.mxu0 0.0
    %2816 = vmatpush1.msra.mxu0 0.0
    %2817 = vmatprep.subr.mxu0 0.0
    %2818 = vmatpush1.msra.mxu0 0.0
    %2819 = vmatprep.subr.mxu0 0.0
    %2820 = vmatpush1.msra.mxu0 0.0
    %2821 = vmatprep.subr.mxu0 0.0
    %2822 = vmatpush1.msra.mxu0 0.0
    %2823 = vmatprep.subr.mxu0 0.0
    %2824 = vmatpush1.msra.mxu0 0.0
    %2825 = vmatprep.subr.mxu0 0.0
    %2826 = vmatpush1.msra.mxu0 0.0
    %2827 = vmatprep.subr.mxu0 0.0
    %2828 = vmatpush1.msra.mxu0 0.0
    %2829 = vmatprep.subr.mxu0 0.0
    %2830 = vmatpush1.msra.mxu0 0.0
    %2831 = vmatprep.subr.mxu0 0.0
    %2832 = vmatpush1.msra.mxu0 0.0
    %2833 = vmatprep.subr.mxu0 0.0
    %2834 = vmatpush1.msra.mxu0 0.0
    %2835 = vmatprep.subr.mxu0 0.0
    %2836 = vmatpush1.msra.mxu0 0.0
    %2837 = vmatprep.subr.mxu0 0.0
    %2838 = vmatpush1.msra.mxu0 0.0
    %2839 = vmatprep.mubr.f32.mxu0 0.0
    %v2840 = vand.u32 %v2768, 4294901760
    %v2841 = vsub.f32 %v2768, %v2840
    %v2842 = vand.u32 %v2841, 4294901760
    %v2843 = vsub.f32 %v2841, %v2842
    %v2844 = vand.u32 %v2843, 4294901760
    %2845 = vmatmul.mubr.f32.gmra.mrb[0].mxu0 %v2844
    %v2846 = vpop.f32.mrb[0].mxu0
    %v2847 = vadd.f32 0.0, %v2846
    %v2848 = vpop.f32.mrb[0].mxu0
    %2849 = vmatprep.mubr.f32.mxu0 0.0
    %v2850 = vand.u32 %v2771, 4294901760
    %v2851 = vsub.f32 %v2771, %v2850
    %v2852 = vand.u32 %v2851, 4294901760
    %v2853 = vsub.f32 %v2851, %v2852
    %v2854 = vand.u32 %v2853, 4294901760
    %2855 = vmatmul.mubr.f32.gmra.mrb[0].mxu0 %v2854
    %v2856 = vpop.f32.mrb[0].mxu0
    %v2857 = vadd.f32 0.0, %v2856
    %v2858 = vpop.f32.mrb[0].mxu0
    %2859 = vdwg.mxu0
    %2860 = vmatprep.subr.mxu0 0.0
    %v2861 = vand.u32 %v1170, 4294901760
    %v2862 = vsub.f32 %v1170, %v2861
    %v2863 = vand.u32 %v2862, 4294901760
    %v2864 = vsub.f32 %v2862, %v2863
    %v2865 = vand.u32 %v2864, 4294901760
    %2866 = vmatpush1.msra.mxu0 %v2865
    %2867 = vmatprep.subr.mxu0 0.0
    %v2868 = vand.u32 %v1176, 4294901760
    %v2869 = vsub.f32 %v1176, %v2868
    %v2870 = vand.u32 %v2869, 4294901760
    %v2871 = vsub.f32 %v2869, %v2870
    %v2872 = vand.u32 %v2871, 4294901760
    %2873 = vmatpush1.msra.mxu0 %v2872
    %2874 = vmatprep.subr.mxu0 0.0
    %2875 = vmatpush1.msra.mxu0 0.0
    %2876 = vmatprep.subr.mxu0 0.0
    %2877 = vmatpush1.msra.mxu0 0.0
    %2878 = vmatprep.subr.mxu0 0.0
    %2879 = vmatpush1.msra.mxu0 0.0
    %2880 = vmatprep.subr.mxu0 0.0
    %2881 = vmatpush1.msra.mxu0 0.0
    %2882 = vmatprep.subr.mxu0 0.0
    %2883 = vmatpush1.msra.mxu0 0.0
    %2884 = vmatprep.subr.mxu0 0.0
    %2885 = vmatpush1.msra.mxu0 0.0
    %2886 = vmatprep.subr.mxu0 0.0
    %2887 = vmatpush1.msra.mxu0 0.0
    %2888 = vmatprep.subr.mxu0 0.0
    %2889 = vmatpush1.msra.mxu0 0.0
    %2890 = vmatprep.subr.mxu0 0.0
    %2891 = vmatpush1.msra.mxu0 0.0
    %2892 = vmatprep.subr.mxu0 0.0
    %2893 = vmatpush1.msra.mxu0 0.0
    %2894 = vmatprep.subr.mxu0 0.0
    %2895 = vmatpush1.msra.mxu0 0.0
    %2896 = vmatprep.subr.mxu0 0.0
    %2897 = vmatpush1.msra.mxu0 0.0
    %2898 = vmatprep.subr.mxu0 0.0
    %2899 = vmatpush1.msra.mxu0 0.0
    %2900 = vmatprep.subr.mxu0 0.0
    %2901 = vmatpush1.msra.mxu0 0.0
    %2902 = vmatprep.subr.mxu0 0.0
    %2903 = vmatpush1.msra.mxu0 0.0
    %2904 = vmatprep.subr.mxu0 0.0
    %2905 = vmatpush1.msra.mxu0 0.0
    %2906 = vmatprep.subr.mxu0 0.0
    %2907 = vmatpush1.msra.mxu0 0.0
    %2908 = vmatprep.subr.mxu0 0.0
    %2909 = vmatpush1.msra.mxu0 0.0
    %2910 = vmatprep.subr.mxu0 0.0
    %2911 = vmatpush1.msra.mxu0 0.0
    %2912 = vmatprep.subr.mxu0 0.0
    %2913 = vmatpush1.msra.mxu0 0.0
    %2914 = vmatprep.subr.mxu0 0.0
    %2915 = vmatpush1.msra.mxu0 0.0
    %2916 = vmatprep.subr.mxu0 0.0
    %2917 = vmatpush1.msra.mxu0 0.0
    %2918 = vmatprep.subr.mxu0 0.0
    %2919 = vmatpush1.msra.mxu0 0.0
    %2920 = vmatprep.subr.mxu0 0.0
    %2921 = vmatpush1.msra.mxu0 0.0
    %2922 = vmatprep.subr.mxu0 0.0
    %2923 = vmatpush1.msra.mxu0 0.0
    %2924 = vmatprep.subr.mxu0 0.0
    %2925 = vmatpush1.msra.mxu0 0.0
    %2926 = vmatprep.subr.mxu0 0.0
    %2927 = vmatpush1.msra.mxu0 0.0
    %2928 = vmatprep.subr.mxu0 0.0
    %2929 = vmatpush1.msra.mxu0 0.0
    %2930 = vmatprep.subr.mxu0 0.0
    %2931 = vmatpush1.msra.mxu0 0.0
    %2932 = vmatprep.subr.mxu0 0.0
    %2933 = vmatpush1.msra.mxu0 0.0
    %2934 = vmatprep.mubr.f32.mxu0 0.0
    %v2935 = vand.u32 %v2768, 4294901760
    %2936 = vmatmul.mubr.f32.gmra.mrb[0].mxu0 %v2935
    %v2937 = vpop.f32.mrb[0].mxu0
    %v2938 = vadd.f32 %v2847, %v2937
    %v2939 = vpop.f32.mrb[0].mxu0
    %2940 = vmatprep.mubr.f32.mxu0 0.0
    %v2941 = vand.u32 %v2771, 4294901760
    %2942 = vmatmul.mubr.f32.gmra.mrb[0].mxu0 %v2941
    %v2943 = vpop.f32.mrb[0].mxu0
    %v2944 = vadd.f32 %v2857, %v2943
    %v2945 = vpop.f32.mrb[0].mxu0
    %2946 = vdwg.mxu0
    %2947 = vmatprep.subr.mxu0 0.0
    %v2948 = vand.u32 %v1170, 4294901760
    %v2949 = vsub.f32 %v1170, %v2948
    %2950 = vmatpush1.msra.mxu0 %v2949
    %2951 = vmatprep.subr.mxu0 0.0
    %v2952 = vand.u32 %v1176, 4294901760
    %v2953 = vsub.f32 %v1176, %v2952
    %2954 = vmatpush1.msra.mxu0 %v2953
    %2955 = vmatprep.subr.mxu0 0.0
    %2956 = vmatpush1.msra.mxu0 0.0
    %2957 = vmatprep.subr.mxu0 0.0
    %2958 = vmatpush1.msra.mxu0 0.0
    %2959 = vmatprep.subr.mxu0 0.0
    %2960 = vmatpush1.msra.mxu0 0.0
    %2961 = vmatprep.subr.mxu0 0.0
    %2962 = vmatpush1.msra.mxu0 0.0
    %2963 = vmatprep.subr.mxu0 0.0
    %2964 = vmatpush1.msra.mxu0 0.0
    %2965 = vmatprep.subr.mxu0 0.0
    %2966 = vmatpush1.msra.mxu0 0.0
    %2967 = vmatprep.subr.mxu0 0.0
    %2968 = vmatpush1.msra.mxu0 0.0
    %2969 = vmatprep.subr.mxu0 0.0
    %2970 = vmatpush1.msra.mxu0 0.0
    %2971 = vmatprep.subr.mxu0 0.0
    %2972 = vmatpush1.msra.mxu0 0.0
    %2973 = vmatprep.subr.mxu0 0.0
    %2974 = vmatpush1.msra.mxu0 0.0
    %2975 = vmatprep.subr.mxu0 0.0
    %2976 = vmatpush1.msra.mxu0 0.0
    %2977 = vmatprep.subr.mxu0 0.0
    %2978 = vmatpush1.msra.mxu0 0.0
    %2979 = vmatprep.subr.mxu0 0.0
    %2980 = vmatpush1.msra.mxu0 0.0
    %2981 = vmatprep.subr.mxu0 0.0
    %2982 = vmatpush1.msra.mxu0 0.0
    %2983 = vmatprep.subr.mxu0 0.0
    %2984 = vmatpush1.msra.mxu0 0.0
    %2985 = vmatprep.subr.mxu0 0.0
    %2986 = vmatpush1.msra.mxu0 0.0
    %2987 = vmatprep.subr.mxu0 0.0
    %2988 = vmatpush1.msra.mxu0 0.0
    %2989 = vmatprep.subr.mxu0 0.0
    %2990 = vmatpush1.msra.mxu0 0.0
    %2991 = vmatprep.subr.mxu0 0.0
    %2992 = vmatpush1.msra.mxu0 0.0
    %2993 = vmatprep.subr.mxu0 0.0
    %2994 = vmatpush1.msra.mxu0 0.0
    %2995 = vmatprep.subr.mxu0 0.0
    %2996 = vmatpush1.msra.mxu0 0.0
    %2997 = vmatprep.subr.mxu0 0.0
    %2998 = vmatpush1.msra.mxu0 0.0
    %2999 = vmatprep.subr.mxu0 0.0
    %3000 = vmatpush1.msra.mxu0 0.0
    %3001 = vmatprep.subr.mxu0 0.0
    %3002 = vmatpush1.msra.mxu0 0.0
    %3003 = vmatprep.subr.mxu0 0.0
    %3004 = vmatpush1.msra.mxu0 0.0
    %3005 = vmatprep.subr.mxu0 0.0
    %3006 = vmatpush1.msra.mxu0 0.0
    %3007 = vmatprep.subr.mxu0 0.0
    %3008 = vmatpush1.msra.mxu0 0.0
    %3009 = vmatprep.subr.mxu0 0.0
    %3010 = vmatpush1.msra.mxu0 0.0
    %3011 = vmatprep.subr.mxu0 0.0
    %3012 = vmatpush1.msra.mxu0 0.0
    %3013 = vmatprep.subr.mxu0 0.0
    %3014 = vmatpush1.msra.mxu0 0.0
    %3015 = vmatprep.mubr.f32.mxu0 0.0
    %v3016 = vand.u32 %v2768, 4294901760
    %v3017 = vsub.f32 %v2768, %v3016
    %3018 = vmatmul.mubr.f32.gmra.mrb[0].mxu0 %v3017
    %v3019 = vpop.f32.mrb[0].mxu0
    %v3020 = vadd.f32 %v2938, %v3019
    %v3021 = vpop.f32.mrb[0].mxu0
    %3022 = vmatprep.mubr.f32.mxu0 0.0
    %v3023 = vand.u32 %v2771, 4294901760
    %v3024 = vsub.f32 %v2771, %v3023
    %3025 = vmatmul.mubr.f32.gmra.mrb[0].mxu0 %v3024
    %v3026 = vpop.f32.mrb[0].mxu0
    %v3027 = vadd.f32 %v2944, %v3026
    %v3028 = vpop.f32.mrb[0].mxu0
    %3029 = vdwg.mxu0
    %3030 = vmatprep.subr.mxu0 0.0
    %v3031 = vand.u32 %v1170, 4294901760
    %3032 = vmatpush1.msra.mxu0 %v3031
    %3033 = vmatprep.subr.mxu0 0.0
    %v3034 = vand.u32 %v1176, 4294901760
    %3035 = vmatpush1.msra.mxu0 %v3034
    %3036 = vmatprep.subr.mxu0 0.0
    %3037 = vmatpush1.msra.mxu0 0.0
    %3038 = vmatprep.subr.mxu0 0.0
    %3039 = vmatpush1.msra.mxu0 0.0
    %3040 = vmatprep.subr.mxu0 0.0
    %3041 = vmatpush1.msra.mxu0 0.0
    %3042 = vmatprep.subr.mxu0 0.0
    %3043 = vmatpush1.msra.mxu0 0.0
    %3044 = vmatprep.subr.mxu0 0.0
    %3045 = vmatpush1.msra.mxu0 0.0
    %3046 = vmatprep.subr.mxu0 0.0
    %3047 = vmatpush1.msra.mxu0 0.0
    %3048 = vmatprep.subr.mxu0 0.0
    %3049 = vmatpush1.msra.mxu0 0.0
    %3050 = vmatprep.subr.mxu0 0.0
    %3051 = vmatpush1.msra.mxu0 0.0
    %3052 = vmatprep.subr.mxu0 0.0
    %3053 = vmatpush1.msra.mxu0 0.0
    %3054 = vmatprep.subr.mxu0 0.0
    %3055 = vmatpush1.msra.mxu0 0.0
    %3056 = vmatprep.subr.mxu0 0.0
    %3057 = vmatpush1.msra.mxu0 0.0
    %3058 = vmatprep.subr.mxu0 0.0
    %3059 = vmatpush1.msra.mxu0 0.0
    %3060 = vmatprep.subr.mxu0 0.0
    %3061 = vmatpush1.msra.mxu0 0.0
    %3062 = vmatprep.subr.mxu0 0.0
    %3063 = vmatpush1.msra.mxu0 0.0
    %3064 = vmatprep.subr.mxu0 0.0
    %3065 = vmatpush1.msra.mxu0 0.0
    %3066 = vmatprep.subr.mxu0 0.0
    %3067 = vmatpush1.msra.mxu0 0.0
    %3068 = vmatprep.subr.mxu0 0.0
    %3069 = vmatpush1.msra.mxu0 0.0
    %3070 = vmatprep.subr.mxu0 0.0
    %3071 = vmatpush1.msra.mxu0 0.0
    %3072 = vmatprep.subr.mxu0 0.0
    %3073 = vmatpush1.msra.mxu0 0.0
    %3074 = vmatprep.subr.mxu0 0.0
    %3075 = vmatpush1.msra.mxu0 0.0
    %3076 = vmatprep.subr.mxu0 0.0
    %3077 = vmatpush1.msra.mxu0 0.0
    %3078 = vmatprep.subr.mxu0 0.0
    %3079 = vmatpush1.msra.mxu0 0.0
    %3080 = vmatprep.subr.mxu0 0.0
    %3081 = vmatpush1.msra.mxu0 0.0
    %3082 = vmatprep.subr.mxu0 0.0
    %3083 = vmatpush1.msra.mxu0 0.0
    %3084 = vmatprep.subr.mxu0 0.0
    %3085 = vmatpush1.msra.mxu0 0.0
    %3086 = vmatprep.subr.mxu0 0.0
    %3087 = vmatpush1.msra.mxu0 0.0
    %3088 = vmatprep.subr.mxu0 0.0
    %3089 = vmatpush1.msra.mxu0 0.0
    %3090 = vmatprep.subr.mxu0 0.0
    %3091 = vmatpush1.msra.mxu0 0.0
    %3092 = vmatprep.subr.mxu0 0.0
    %3093 = vmatpush1.msra.mxu0 0.0
    %3094 = vmatprep.subr.mxu0 0.0
    %3095 = vmatpush1.msra.mxu0 0.0
    %3096 = vmatprep.mubr.f32.mxu0 0.0
    %v3097 = vand.u32 %v2768, 4294901760
    %v3098 = vsub.f32 %v2768, %v3097
    %v3099 = vand.u32 %v3098, 4294901760
    %3100 = vmatmul.mubr.f32.gmra.mrb[0].mxu0 %v3099
    %v3101 = vpop.f32.mrb[0].mxu0
    %v3102 = vadd.f32 %v3020, %v3101
    %v3103 = vpop.f32.mrb[0].mxu0
    %3104 = vmatprep.mubr.f32.mxu0 0.0
    %v3105 = vand.u32 %v2771, 4294901760
    %v3106 = vsub.f32 %v2771, %v3105
    %v3107 = vand.u32 %v3106, 4294901760
    %3108 = vmatmul.mubr.f32.gmra.mrb[0].mxu0 %v3107
    %v3109 = vpop.f32.mrb[0].mxu0
    %v3110 = vadd.f32 %v3027, %v3109
    %v3111 = vpop.f32.mrb[0].mxu0
    %3112 = vdwg.mxu0
    %3113 = vmatprep.subr.mxu0 0.0
    %v3114 = vand.u32 %v1170, 4294901760
    %v3115 = vsub.f32 %v1170, %v3114
    %v3116 = vand.u32 %v3115, 4294901760
    %3117 = vmatpush1.msra.mxu0 %v3116
    %3118 = vmatprep.subr.mxu0 0.0
    %v3119 = vand.u32 %v1176, 4294901760
    %v3120 = vsub.f32 %v1176, %v3119
    %v3121 = vand.u32 %v3120, 4294901760
    %3122 = vmatpush1.msra.mxu0 %v3121
    %3123 = vmatprep.subr.mxu0 0.0
    %3124 = vmatpush1.msra.mxu0 0.0
    %3125 = vmatprep.subr.mxu0 0.0
    %3126 = vmatpush1.msra.mxu0 0.0
    %3127 = vmatprep.subr.mxu0 0.0
    %3128 = vmatpush1.msra.mxu0 0.0
    %3129 = vmatprep.subr.mxu0 0.0
    %3130 = vmatpush1.msra.mxu0 0.0
    %3131 = vmatprep.subr.mxu0 0.0
    %3132 = vmatpush1.msra.mxu0 0.0
    %3133 = vmatprep.subr.mxu0 0.0
    %3134 = vmatpush1.msra.mxu0 0.0
    %3135 = vmatprep.subr.mxu0 0.0
    %3136 = vmatpush1.msra.mxu0 0.0
    %3137 = vmatprep.subr.mxu0 0.0
    %3138 = vmatpush1.msra.mxu0 0.0
    %3139 = vmatprep.subr.mxu0 0.0
    %3140 = vmatpush1.msra.mxu0 0.0
    %3141 = vmatprep.subr.mxu0 0.0
    %3142 = vmatpush1.msra.mxu0 0.0
    %3143 = vmatprep.subr.mxu0 0.0
    %3144 = vmatpush1.msra.mxu0 0.0
    %3145 = vmatprep.subr.mxu0 0.0
    %3146 = vmatpush1.msra.mxu0 0.0
    %3147 = vmatprep.subr.mxu0 0.0
    %3148 = vmatpush1.msra.mxu0 0.0
    %3149 = vmatprep.subr.mxu0 0.0
    %3150 = vmatpush1.msra.mxu0 0.0
    %3151 = vmatprep.subr.mxu0 0.0
    %3152 = vmatpush1.msra.mxu0 0.0
    %3153 = vmatprep.subr.mxu0 0.0
    %3154 = vmatpush1.msra.mxu0 0.0
    %3155 = vmatprep.subr.mxu0 0.0
    %3156 = vmatpush1.msra.mxu0 0.0
    %3157 = vmatprep.subr.mxu0 0.0
    %3158 = vmatpush1.msra.mxu0 0.0
    %3159 = vmatprep.subr.mxu0 0.0
    %3160 = vmatpush1.msra.mxu0 0.0
    %3161 = vmatprep.subr.mxu0 0.0
    %3162 = vmatpush1.msra.mxu0 0.0
    %3163 = vmatprep.subr.mxu0 0.0
    %3164 = vmatpush1.msra.mxu0 0.0
    %3165 = vmatprep.subr.mxu0 0.0
    %3166 = vmatpush1.msra.mxu0 0.0
    %3167 = vmatprep.subr.mxu0 0.0
    %3168 = vmatpush1.msra.mxu0 0.0
    %3169 = vmatprep.subr.mxu0 0.0
    %3170 = vmatpush1.msra.mxu0 0.0
    %3171 = vmatprep.subr.mxu0 0.0
    %3172 = vmatpush1.msra.mxu0 0.0
    %3173 = vmatprep.subr.mxu0 0.0
    %3174 = vmatpush1.msra.mxu0 0.0
    %3175 = vmatprep.subr.mxu0 0.0
    %3176 = vmatpush1.msra.mxu0 0.0
    %3177 = vmatprep.subr.mxu0 0.0
    %3178 = vmatpush1.msra.mxu0 0.0
    %3179 = vmatprep.subr.mxu0 0.0
    %3180 = vmatpush1.msra.mxu0 0.0
    %3181 = vmatprep.subr.mxu0 0.0
    %3182 = vmatpush1.msra.mxu0 0.0
    %3183 = vmatprep.mubr.f32.mxu0 0.0
    %v3184 = vand.u32 %v2768, 4294901760
    %3185 = vmatmul.mubr.f32.gmra.mrb[0].mxu0 %v3184
    %v3186 = vpop.f32.mrb[0].mxu0
    %v3187 = vadd.f32 %v3102, %v3186
    %v3188 = vpop.f32.mrb[0].mxu0
    %3189 = vmatprep.mubr.f32.mxu0 0.0
    %v3190 = vand.u32 %v2771, 4294901760
    %3191 = vmatmul.mubr.f32.gmra.mrb[0].mxu0 %v3190
    %v3192 = vpop.f32.mrb[0].mxu0
    %v3193 = vadd.f32 %v3110, %v3192
    %v3194 = vpop.f32.mrb[0].mxu0
    %3195 = vdwg.mxu0
    %3196 = vmatprep.subr.mxu0 0.0
    %v3197 = vand.u32 %v1170, 4294901760
    %3198 = vmatpush1.msra.mxu0 %v3197
    %3199 = vmatprep.subr.mxu0 0.0
    %v3200 = vand.u32 %v1176, 4294901760
    %3201 = vmatpush1.msra.mxu0 %v3200
    %3202 = vmatprep.subr.mxu0 0.0
    %3203 = vmatpush1.msra.mxu0 0.0
    %3204 = vmatprep.subr.mxu0 0.0
    %3205 = vmatpush1.msra.mxu0 0.0
    %3206 = vmatprep.subr.mxu0 0.0
    %3207 = vmatpush1.msra.mxu0 0.0
    %3208 = vmatprep.subr.mxu0 0.0
    %3209 = vmatpush1.msra.mxu0 0.0
    %3210 = vmatprep.subr.mxu0 0.0
    %3211 = vmatpush1.msra.mxu0 0.0
    %3212 = vmatprep.subr.mxu0 0.0
    %3213 = vmatpush1.msra.mxu0 0.0
    %3214 = vmatprep.subr.mxu0 0.0
    %3215 = vmatpush1.msra.mxu0 0.0
    %3216 = vmatprep.subr.mxu0 0.0
    %3217 = vmatpush1.msra.mxu0 0.0
    %3218 = vmatprep.subr.mxu0 0.0
    %3219 = vmatpush1.msra.mxu0 0.0
    %3220 = vmatprep.subr.mxu0 0.0
    %3221 = vmatpush1.msra.mxu0 0.0
    %3222 = vmatprep.subr.mxu0 0.0
    %3223 = vmatpush1.msra.mxu0 0.0
    %3224 = vmatprep.subr.mxu0 0.0
    %3225 = vmatpush1.msra.mxu0 0.0
    %3226 = vmatprep.subr.mxu0 0.0
    %3227 = vmatpush1.msra.mxu0 0.0
    %3228 = vmatprep.subr.mxu0 0.0
    %3229 = vmatpush1.msra.mxu0 0.0
    %3230 = vmatprep.subr.mxu0 0.0
    %3231 = vmatpush1.msra.mxu0 0.0
    %3232 = vmatprep.subr.mxu0 0.0
    %3233 = vmatpush1.msra.mxu0 0.0
    %3234 = vmatprep.subr.mxu0 0.0
    %3235 = vmatpush1.msra.mxu0 0.0
    %3236 = vmatprep.subr.mxu0 0.0
    %3237 = vmatpush1.msra.mxu0 0.0
    %3238 = vmatprep.subr.mxu0 0.0
    %3239 = vmatpush1.msra.mxu0 0.0
    %3240 = vmatprep.subr.mxu0 0.0
    %3241 = vmatpush1.msra.mxu0 0.0
    %3242 = vmatprep.subr.mxu0 0.0
    %3243 = vmatpush1.msra.mxu0 0.0
    %3244 = vmatprep.subr.mxu0 0.0
    %3245 = vmatpush1.msra.mxu0 0.0
    %3246 = vmatprep.subr.mxu0 0.0
    %3247 = vmatpush1.msra.mxu0 0.0
    %3248 = vmatprep.subr.mxu0 0.0
    %3249 = vmatpush1.msra.mxu0 0.0
    %3250 = vmatprep.subr.mxu0 0.0
    %3251 = vmatpush1.msra.mxu0 0.0
    %3252 = vmatprep.subr.mxu0 0.0
    %3253 = vmatpush1.msra.mxu0 0.0
    %3254 = vmatprep.subr.mxu0 0.0
    %3255 = vmatpush1.msra.mxu0 0.0
    %3256 = vmatprep.subr.mxu0 0.0
    %3257 = vmatpush1.msra.mxu0 0.0
    %3258 = vmatprep.subr.mxu0 0.0
    %3259 = vmatpush1.msra.mxu0 0.0
    %3260 = vmatprep.subr.mxu0 0.0
    %3261 = vmatpush1.msra.mxu0 0.0
    %3262 = vmatprep.mubr.f32.mxu0 0.0
    %v3263 = vand.u32 %v2768, 4294901760
    %3264 = vmatmul.mubr.f32.gmra.mrb[0].mxu0 %v3263
    %v3265 = vpop.f32.mrb[0].mxu0
    %v3266 = vadd.f32 %v3187, %v3265
    %v3267 = vpop.f32.mrb[0].mxu0
    %3268 = vmatprep.mubr.f32.mxu0 0.0
    %v3269 = vand.u32 %v2771, 4294901760
    %3270 = vmatmul.mubr.f32.gmra.mrb[0].mxu0 %v3269
    %v3271 = vpop.f32.mrb[0].mxu0
    %v3272 = vadd.f32 %v3193, %v3271
    %v3273 = vpop.f32.mrb[0].mxu0
    %3274 = vdwg.mxu0
    %v3276 = vsel %vm74, %v1235, 0
    %v3279 = vsel %vm74, %v1236, 0
    %3281 = vmatprep.subr.mxu0 0.0
    %v3282 = vand.u32 %v1182, 4294901760
    %3283 = vmatpush1.msra.mxu0 %v3282
    %3284 = vmatprep.subr.mxu0 0.0
    %v3285 = vand.u32 %v1188, 4294901760
    %3286 = vmatpush1.msra.mxu0 %v3285
    %3287 = vmatprep.subr.mxu0 0.0
    %3288 = vmatpush1.msra.mxu0 0.0
    %3289 = vmatprep.subr.mxu0 0.0
    %3290 = vmatpush1.msra.mxu0 0.0
    %3291 = vmatprep.subr.mxu0 0.0
    %3292 = vmatpush1.msra.mxu0 0.0
    %3293 = vmatprep.subr.mxu0 0.0
    %3294 = vmatpush1.msra.mxu0 0.0
    %3295 = vmatprep.subr.mxu0 0.0
    %3296 = vmatpush1.msra.mxu0 0.0
    %3297 = vmatprep.subr.mxu0 0.0
    %3298 = vmatpush1.msra.mxu0 0.0
    %3299 = vmatprep.subr.mxu0 0.0
    %3300 = vmatpush1.msra.mxu0 0.0
    %3301 = vmatprep.subr.mxu0 0.0
    %3302 = vmatpush1.msra.mxu0 0.0
    %3303 = vmatprep.subr.mxu0 0.0
    %3304 = vmatpush1.msra.mxu0 0.0
    %3305 = vmatprep.subr.mxu0 0.0
    %3306 = vmatpush1.msra.mxu0 0.0
    %3307 = vmatprep.subr.mxu0 0.0
    %3308 = vmatpush1.msra.mxu0 0.0
    %3309 = vmatprep.subr.mxu0 0.0
    %3310 = vmatpush1.msra.mxu0 0.0
    %3311 = vmatprep.subr.mxu0 0.0
    %3312 = vmatpush1.msra.mxu0 0.0
    %3313 = vmatprep.subr.mxu0 0.0
    %3314 = vmatpush1.msra.mxu0 0.0
    %3315 = vmatprep.subr.mxu0 0.0
    %3316 = vmatpush1.msra.mxu0 0.0
    %3317 = vmatprep.subr.mxu0 0.0
    %3318 = vmatpush1.msra.mxu0 0.0
    %3319 = vmatprep.subr.mxu0 0.0
    %3320 = vmatpush1.msra.mxu0 0.0
    %3321 = vmatprep.subr.mxu0 0.0
    %3322 = vmatpush1.msra.mxu0 0.0
    %3323 = vmatprep.subr.mxu0 0.0
    %3324 = vmatpush1.msra.mxu0 0.0
    %3325 = vmatprep.subr.mxu0 0.0
    %3326 = vmatpush1.msra.mxu0 0.0
    %3327 = vmatprep.subr.mxu0 0.0
    %3328 = vmatpush1.msra.mxu0 0.0
    %3329 = vmatprep.subr.mxu0 0.0
    %3330 = vmatpush1.msra.mxu0 0.0
    %3331 = vmatprep.subr.mxu0 0.0
    %3332 = vmatpush1.msra.mxu0 0.0
    %3333 = vmatprep.subr.mxu0 0.0
    %3334 = vmatpush1.msra.mxu0 0.0
    %3335 = vmatprep.subr.mxu0 0.0
    %3336 = vmatpush1.msra.mxu0 0.0
    %3337 = vmatprep.subr.mxu0 0.0
    %3338 = vmatpush1.msra.mxu0 0.0
    %3339 = vmatprep.subr.mxu0 0.0
    %3340 = vmatpush1.msra.mxu0 0.0
    %3341 = vmatprep.subr.mxu0 0.0
    %3342 = vmatpush1.msra.mxu0 0.0
    %3343 = vmatprep.subr.mxu0 0.0
    %3344 = vmatpush1.msra.mxu0 0.0
    %3345 = vmatprep.subr.mxu0 0.0
    %3346 = vmatpush1.msra.mxu0 0.0
    %3347 = vmatprep.mubr.f32.mxu0 0.0
    %v3348 = vand.u32 %v3276, 4294901760
    %v3349 = vsub.f32 %v3276, %v3348
    %v3350 = vand.u32 %v3349, 4294901760
    %v3351 = vsub.f32 %v3349, %v3350
    %v3352 = vand.u32 %v3351, 4294901760
    %3353 = vmatmul.mubr.f32.gmra.mrb[0].mxu0 %v3352
    %v3354 = vpop.f32.mrb[0].mxu0
    %v3355 = vadd.f32 0.0, %v3354
    %v3356 = vpop.f32.mrb[0].mxu0
    %3357 = vmatprep.mubr.f32.mxu0 0.0
    %v3358 = vand.u32 %v3279, 4294901760
    %v3359 = vsub.f32 %v3279, %v3358
    %v3360 = vand.u32 %v3359, 4294901760
    %v3361 = vsub.f32 %v3359, %v3360
    %v3362 = vand.u32 %v3361, 4294901760
    %3363 = vmatmul.mubr.f32.gmra.mrb[0].mxu0 %v3362
    %v3364 = vpop.f32.mrb[0].mxu0
    %v3365 = vadd.f32 0.0, %v3364
    %v3366 = vpop.f32.mrb[0].mxu0
    %3367 = vdwg.mxu0
    %3368 = vmatprep.subr.mxu0 0.0
    %v3369 = vand.u32 %v1182, 4294901760
    %v3370 = vsub.f32 %v1182, %v3369
    %v3371 = vand.u32 %v3370, 4294901760
    %v3372 = vsub.f32 %v3370, %v3371
    %v3373 = vand.u32 %v3372, 4294901760
    %3374 = vmatpush1.msra.mxu0 %v3373
    %3375 = vmatprep.subr.mxu0 0.0
    %v3376 = vand.u32 %v1188, 4294901760
    %v3377 = vsub.f32 %v1188, %v3376
    %v3378 = vand.u32 %v3377, 4294901760
    %v3379 = vsub.f32 %v3377, %v3378
    %v3380 = vand.u32 %v3379, 4294901760
    %3381 = vmatpush1.msra.mxu0 %v3380
    %3382 = vmatprep.subr.mxu0 0.0
    %3383 = vmatpush1.msra.mxu0 0.0
    %3384 = vmatprep.subr.mxu0 0.0
    %3385 = vmatpush1.msra.mxu0 0.0
    %3386 = vmatprep.subr.mxu0 0.0
    %3387 = vmatpush1.msra.mxu0 0.0
    %3388 = vmatprep.subr.mxu0 0.0
    %3389 = vmatpush1.msra.mxu0 0.0
    %3390 = vmatprep.subr.mxu0 0.0
    %3391 = vmatpush1.msra.mxu0 0.0
    %3392 = vmatprep.subr.mxu0 0.0
    %3393 = vmatpush1.msra.mxu0 0.0
    %3394 = vmatprep.subr.mxu0 0.0
    %3395 = vmatpush1.msra.mxu0 0.0
    %3396 = vmatprep.subr.mxu0 0.0
    %3397 = vmatpush1.msra.mxu0 0.0
    %3398 = vmatprep.subr.mxu0 0.0
    %3399 = vmatpush1.msra.mxu0 0.0
    %3400 = vmatprep.subr.mxu0 0.0
    %3401 = vmatpush1.msra.mxu0 0.0
    %3402 = vmatprep.subr.mxu0 0.0
    %3403 = vmatpush1.msra.mxu0 0.0
    %3404 = vmatprep.subr.mxu0 0.0
    %3405 = vmatpush1.msra.mxu0 0.0
    %3406 = vmatprep.subr.mxu0 0.0
    %3407 = vmatpush1.msra.mxu0 0.0
    %3408 = vmatprep.subr.mxu0 0.0
    %3409 = vmatpush1.msra.mxu0 0.0
    %3410 = vmatprep.subr.mxu0 0.0
    %3411 = vmatpush1.msra.mxu0 0.0
    %3412 = vmatprep.subr.mxu0 0.0
    %3413 = vmatpush1.msra.mxu0 0.0
    %3414 = vmatprep.subr.mxu0 0.0
    %3415 = vmatpush1.msra.mxu0 0.0
    %3416 = vmatprep.subr.mxu0 0.0
    %3417 = vmatpush1.msra.mxu0 0.0
    %3418 = vmatprep.subr.mxu0 0.0
    %3419 = vmatpush1.msra.mxu0 0.0
    %3420 = vmatprep.subr.mxu0 0.0
    %3421 = vmatpush1.msra.mxu0 0.0
    %3422 = vmatprep.subr.mxu0 0.0
    %3423 = vmatpush1.msra.mxu0 0.0
    %3424 = vmatprep.subr.mxu0 0.0
    %3425 = vmatpush1.msra.mxu0 0.0
    %3426 = vmatprep.subr.mxu0 0.0
    %3427 = vmatpush1.msra.mxu0 0.0
    %3428 = vmatprep.subr.mxu0 0.0
    %3429 = vmatpush1.msra.mxu0 0.0
    %3430 = vmatprep.subr.mxu0 0.0
    %3431 = vmatpush1.msra.mxu0 0.0
    %3432 = vmatprep.subr.mxu0 0.0
    %3433 = vmatpush1.msra.mxu0 0.0
    %3434 = vmatprep.subr.mxu0 0.0
    %3435 = vmatpush1.msra.mxu0 0.0
    %3436 = vmatprep.subr.mxu0 0.0
    %3437 = vmatpush1.msra.mxu0 0.0
    %3438 = vmatprep.subr.mxu0 0.0
    %3439 = vmatpush1.msra.mxu0 0.0
    %3440 = vmatprep.subr.mxu0 0.0
    %3441 = vmatpush1.msra.mxu0 0.0
    %3442 = vmatprep.mubr.f32.mxu0 0.0
    %v3443 = vand.u32 %v3276, 4294901760
    %3444 = vmatmul.mubr.f32.gmra.mrb[0].mxu0 %v3443
    %v3445 = vpop.f32.mrb[0].mxu0
    %v3446 = vadd.f32 %v3355, %v3445
    %v3447 = vpop.f32.mrb[0].mxu0
    %3448 = vmatprep.mubr.f32.mxu0 0.0
    %v3449 = vand.u32 %v3279, 4294901760
    %3450 = vmatmul.mubr.f32.gmra.mrb[0].mxu0 %v3449
    %v3451 = vpop.f32.mrb[0].mxu0
    %v3452 = vadd.f32 %v3365, %v3451
    %v3453 = vpop.f32.mrb[0].mxu0
    %3454 = vdwg.mxu0
    %3455 = vmatprep.subr.mxu0 0.0
    %v3456 = vand.u32 %v1182, 4294901760
    %v3457 = vsub.f32 %v1182, %v3456
    %3458 = vmatpush1.msra.mxu0 %v3457
    %3459 = vmatprep.subr.mxu0 0.0
    %v3460 = vand.u32 %v1188, 4294901760
    %v3461 = vsub.f32 %v1188, %v3460
    %3462 = vmatpush1.msra.mxu0 %v3461
    %3463 = vmatprep.subr.mxu0 0.0
    %3464 = vmatpush1.msra.mxu0 0.0
    %3465 = vmatprep.subr.mxu0 0.0
    %3466 = vmatpush1.msra.mxu0 0.0
    %3467 = vmatprep.subr.mxu0 0.0
    %3468 = vmatpush1.msra.mxu0 0.0
    %3469 = vmatprep.subr.mxu0 0.0
    %3470 = vmatpush1.msra.mxu0 0.0
    %3471 = vmatprep.subr.mxu0 0.0
    %3472 = vmatpush1.msra.mxu0 0.0
    %3473 = vmatprep.subr.mxu0 0.0
    %3474 = vmatpush1.msra.mxu0 0.0
    %3475 = vmatprep.subr.mxu0 0.0
    %3476 = vmatpush1.msra.mxu0 0.0
    %3477 = vmatprep.subr.mxu0 0.0
    %3478 = vmatpush1.msra.mxu0 0.0
    %3479 = vmatprep.subr.mxu0 0.0
    %3480 = vmatpush1.msra.mxu0 0.0
    %3481 = vmatprep.subr.mxu0 0.0
    %3482 = vmatpush1.msra.mxu0 0.0
    %3483 = vmatprep.subr.mxu0 0.0
    %3484 = vmatpush1.msra.mxu0 0.0
    %3485 = vmatprep.subr.mxu0 0.0
    %3486 = vmatpush1.msra.mxu0 0.0
    %3487 = vmatprep.subr.mxu0 0.0
    %3488 = vmatpush1.msra.mxu0 0.0
    %3489 = vmatprep.subr.mxu0 0.0
    %3490 = vmatpush1.msra.mxu0 0.0
    %3491 = vmatprep.subr.mxu0 0.0
    %3492 = vmatpush1.msra.mxu0 0.0
    %3493 = vmatprep.subr.mxu0 0.0
    %3494 = vmatpush1.msra.mxu0 0.0
    %3495 = vmatprep.subr.mxu0 0.0
    %3496 = vmatpush1.msra.mxu0 0.0
    %3497 = vmatprep.subr.mxu0 0.0
    %3498 = vmatpush1.msra.mxu0 0.0
    %3499 = vmatprep.subr.mxu0 0.0
    %3500 = vmatpush1.msra.mxu0 0.0
    %3501 = vmatprep.subr.mxu0 0.0
    %3502 = vmatpush1.msra.mxu0 0.0
    %3503 = vmatprep.subr.mxu0 0.0
    %3504 = vmatpush1.msra.mxu0 0.0
    %3505 = vmatprep.subr.mxu0 0.0
    %3506 = vmatpush1.msra.mxu0 0.0
    %3507 = vmatprep.subr.mxu0 0.0
    %3508 = vmatpush1.msra.mxu0 0.0
    %3509 = vmatprep.subr.mxu0 0.0
    %3510 = vmatpush1.msra.mxu0 0.0
    %3511 = vmatprep.subr.mxu0 0.0
    %3512 = vmatpush1.msra.mxu0 0.0
    %3513 = vmatprep.subr.mxu0 0.0
    %3514 = vmatpush1.msra.mxu0 0.0
    %3515 = vmatprep.subr.mxu0 0.0
    %3516 = vmatpush1.msra.mxu0 0.0
    %3517 = vmatprep.subr.mxu0 0.0
    %3518 = vmatpush1.msra.mxu0 0.0
    %3519 = vmatprep.subr.mxu0 0.0
    %3520 = vmatpush1.msra.mxu0 0.0
    %3521 = vmatprep.subr.mxu0 0.0
    %3522 = vmatpush1.msra.mxu0 0.0
    %3523 = vmatprep.mubr.f32.mxu0 0.0
    %v3524 = vand.u32 %v3276, 4294901760
    %v3525 = vsub.f32 %v3276, %v3524
    %3526 = vmatmul.mubr.f32.gmra.mrb[0].mxu0 %v3525
    %v3527 = vpop.f32.mrb[0].mxu0
    %v3528 = vadd.f32 %v3446, %v3527
    %v3529 = vpop.f32.mrb[0].mxu0
    %3530 = vmatprep.mubr.f32.mxu0 0.0
    %v3531 = vand.u32 %v3279, 4294901760
    %v3532 = vsub.f32 %v3279, %v3531
    %3533 = vmatmul.mubr.f32.gmra.mrb[0].mxu0 %v3532
    %v3534 = vpop.f32.mrb[0].mxu0
    %v3535 = vadd.f32 %v3452, %v3534
    %v3536 = vpop.f32.mrb[0].mxu0
    %3537 = vdwg.mxu0
    %3538 = vmatprep.subr.mxu0 0.0
    %v3539 = vand.u32 %v1182, 4294901760
    %3540 = vmatpush1.msra.mxu0 %v3539
    %3541 = vmatprep.subr.mxu0 0.0
    %v3542 = vand.u32 %v1188, 4294901760
    %3543 = vmatpush1.msra.mxu0 %v3542
    %3544 = vmatprep.subr.mxu0 0.0
    %3545 = vmatpush1.msra.mxu0 0.0
    %3546 = vmatprep.subr.mxu0 0.0
    %3547 = vmatpush1.msra.mxu0 0.0
    %3548 = vmatprep.subr.mxu0 0.0
    %3549 = vmatpush1.msra.mxu0 0.0
    %3550 = vmatprep.subr.mxu0 0.0
    %3551 = vmatpush1.msra.mxu0 0.0
    %3552 = vmatprep.subr.mxu0 0.0
    %3553 = vmatpush1.msra.mxu0 0.0
    %3554 = vmatprep.subr.mxu0 0.0
    %3555 = vmatpush1.msra.mxu0 0.0
    %3556 = vmatprep.subr.mxu0 0.0
    %3557 = vmatpush1.msra.mxu0 0.0
    %3558 = vmatprep.subr.mxu0 0.0
    %3559 = vmatpush1.msra.mxu0 0.0
    %3560 = vmatprep.subr.mxu0 0.0
    %3561 = vmatpush1.msra.mxu0 0.0
    %3562 = vmatprep.subr.mxu0 0.0
    %3563 = vmatpush1.msra.mxu0 0.0
    %3564 = vmatprep.subr.mxu0 0.0
    %3565 = vmatpush1.msra.mxu0 0.0
    %3566 = vmatprep.subr.mxu0 0.0
    %3567 = vmatpush1.msra.mxu0 0.0
    %3568 = vmatprep.subr.mxu0 0.0
    %3569 = vmatpush1.msra.mxu0 0.0
    %3570 = vmatprep.subr.mxu0 0.0
    %3571 = vmatpush1.msra.mxu0 0.0
    %3572 = vmatprep.subr.mxu0 0.0
    %3573 = vmatpush1.msra.mxu0 0.0
    %3574 = vmatprep.subr.mxu0 0.0
    %3575 = vmatpush1.msra.mxu0 0.0
    %3576 = vmatprep.subr.mxu0 0.0
    %3577 = vmatpush1.msra.mxu0 0.0
    %3578 = vmatprep.subr.mxu0 0.0
    %3579 = vmatpush1.msra.mxu0 0.0
    %3580 = vmatprep.subr.mxu0 0.0
    %3581 = vmatpush1.msra.mxu0 0.0
    %3582 = vmatprep.subr.mxu0 0.0
    %3583 = vmatpush1.msra.mxu0 0.0
    %3584 = vmatprep.subr.mxu0 0.0
    %3585 = vmatpush1.msra.mxu0 0.0
    %3586 = vmatprep.subr.mxu0 0.0
    %3587 = vmatpush1.msra.mxu0 0.0
    %3588 = vmatprep.subr.mxu0 0.0
    %3589 = vmatpush1.msra.mxu0 0.0
    %3590 = vmatprep.subr.mxu0 0.0
    %3591 = vmatpush1.msra.mxu0 0.0
    %3592 = vmatprep.subr.mxu0 0.0
    %3593 = vmatpush1.msra.mxu0 0.0
    %3594 = vmatprep.subr.mxu0 0.0
    %3595 = vmatpush1.msra.mxu0 0.0
    %3596 = vmatprep.subr.mxu0 0.0
    %3597 = vmatpush1.msra.mxu0 0.0
    %3598 = vmatprep.subr.mxu0 0.0
    %3599 = vmatpush1.msra.mxu0 0.0
    %3600 = vmatprep.subr.mxu0 0.0
    %3601 = vmatpush1.msra.mxu0 0.0
    %3602 = vmatprep.subr.mxu0 0.0
    %3603 = vmatpush1.msra.mxu0 0.0
    %3604 = vmatprep.mubr.f32.mxu0 0.0
    %v3605 = vand.u32 %v3276, 4294901760
    %v3606 = vsub.f32 %v3276, %v3605
    %v3607 = vand.u32 %v3606, 4294901760
    %3608 = vmatmul.mubr.f32.gmra.mrb[0].mxu0 %v3607
    %v3609 = vpop.f32.mrb[0].mxu0
    %v3610 = vadd.f32 %v3528, %v3609
    %v3611 = vpop.f32.mrb[0].mxu0
    %3612 = vmatprep.mubr.f32.mxu0 0.0
    %v3613 = vand.u32 %v3279, 4294901760
    %v3614 = vsub.f32 %v3279, %v3613
    %v3615 = vand.u32 %v3614, 4294901760
    %3616 = vmatmul.mubr.f32.gmra.mrb[0].mxu0 %v3615
    %v3617 = vpop.f32.mrb[0].mxu0
    %v3618 = vadd.f32 %v3535, %v3617
    %v3619 = vpop.f32.mrb[0].mxu0
    %3620 = vdwg.mxu0
    %3621 = vmatprep.subr.mxu0 0.0
    %v3622 = vand.u32 %v1182, 4294901760
    %v3623 = vsub.f32 %v1182, %v3622
    %v3624 = vand.u32 %v3623, 4294901760
    %3625 = vmatpush1.msra.mxu0 %v3624
    %3626 = vmatprep.subr.mxu0 0.0
    %v3627 = vand.u32 %v1188, 4294901760
    %v3628 = vsub.f32 %v1188, %v3627
    %v3629 = vand.u32 %v3628, 4294901760
    %3630 = vmatpush1.msra.mxu0 %v3629
    %3631 = vmatprep.subr.mxu0 0.0
    %3632 = vmatpush1.msra.mxu0 0.0
    %3633 = vmatprep.subr.mxu0 0.0
    %3634 = vmatpush1.msra.mxu0 0.0
    %3635 = vmatprep.subr.mxu0 0.0
    %3636 = vmatpush1.msra.mxu0 0.0
    %3637 = vmatprep.subr.mxu0 0.0
    %3638 = vmatpush1.msra.mxu0 0.0
    %3639 = vmatprep.subr.mxu0 0.0
    %3640 = vmatpush1.msra.mxu0 0.0
    %3641 = vmatprep.subr.mxu0 0.0
    %3642 = vmatpush1.msra.mxu0 0.0
    %3643 = vmatprep.subr.mxu0 0.0
    %3644 = vmatpush1.msra.mxu0 0.0
    %3645 = vmatprep.subr.mxu0 0.0
    %3646 = vmatpush1.msra.mxu0 0.0
    %3647 = vmatprep.subr.mxu0 0.0
    %3648 = vmatpush1.msra.mxu0 0.0
    %3649 = vmatprep.subr.mxu0 0.0
    %3650 = vmatpush1.msra.mxu0 0.0
    %3651 = vmatprep.subr.mxu0 0.0
    %3652 = vmatpush1.msra.mxu0 0.0
    %3653 = vmatprep.subr.mxu0 0.0
    %3654 = vmatpush1.msra.mxu0 0.0
    %3655 = vmatprep.subr.mxu0 0.0
    %3656 = vmatpush1.msra.mxu0 0.0
    %3657 = vmatprep.subr.mxu0 0.0
    %3658 = vmatpush1.msra.mxu0 0.0
    %3659 = vmatprep.subr.mxu0 0.0
    %3660 = vmatpush1.msra.mxu0 0.0
    %3661 = vmatprep.subr.mxu0 0.0
    %3662 = vmatpush1.msra.mxu0 0.0
    %3663 = vmatprep.subr.mxu0 0.0
    %3664 = vmatpush1.msra.mxu0 0.0
    %3665 = vmatprep.subr.mxu0 0.0
    %3666 = vmatpush1.msra.mxu0 0.0
    %3667 = vmatprep.subr.mxu0 0.0
    %3668 = vmatpush1.msra.mxu0 0.0
    %3669 = vmatprep.subr.mxu0 0.0
    %3670 = vmatpush1.msra.mxu0 0.0
    %3671 = vmatprep.subr.mxu0 0.0
    %3672 = vmatpush1.msra.mxu0 0.0
    %3673 = vmatprep.subr.mxu0 0.0
    %3674 = vmatpush1.msra.mxu0 0.0
    %3675 = vmatprep.subr.mxu0 0.0
    %3676 = vmatpush1.msra.mxu0 0.0
    %3677 = vmatprep.subr.mxu0 0.0
    %3678 = vmatpush1.msra.mxu0 0.0
    %3679 = vmatprep.subr.mxu0 0.0
    %3680 = vmatpush1.msra.mxu0 0.0
    %3681 = vmatprep.subr.mxu0 0.0
    %3682 = vmatpush1.msra.mxu0 0.0
    %3683 = vmatprep.subr.mxu0 0.0
    %3684 = vmatpush1.msra.mxu0 0.0
    %3685 = vmatprep.subr.mxu0 0.0
    %3686 = vmatpush1.msra.mxu0 0.0
    %3687 = vmatprep.subr.mxu0 0.0
    %3688 = vmatpush1.msra.mxu0 0.0
    %3689 = vmatprep.subr.mxu0 0.0
    %3690 = vmatpush1.msra.mxu0 0.0
    %3691 = vmatprep.mubr.f32.mxu0 0.0
    %v3692 = vand.u32 %v3276, 4294901760
    %3693 = vmatmul.mubr.f32.gmra.mrb[0].mxu0 %v3692
    %v3694 = vpop.f32.mrb[0].mxu0
    %v3695 = vadd.f32 %v3610, %v3694
    %v3696 = vpop.f32.mrb[0].mxu0
    %3697 = vmatprep.mubr.f32.mxu0 0.0
    %v3698 = vand.u32 %v3279, 4294901760
    %3699 = vmatmul.mubr.f32.gmra.mrb[0].mxu0 %v3698
    %v3700 = vpop.f32.mrb[0].mxu0
    %v3701 = vadd.f32 %v3618, %v3700
    %v3702 = vpop.f32.mrb[0].mxu0
    %3703 = vdwg.mxu0
    %3704 = vmatprep.subr.mxu0 0.0
    %v3705 = vand.u32 %v1182, 4294901760
    %3706 = vmatpush1.msra.mxu0 %v3705
    %3707 = vmatprep.subr.mxu0 0.0
    %v3708 = vand.u32 %v1188, 4294901760
    %3709 = vmatpush1.msra.mxu0 %v3708
    %3710 = vmatprep.subr.mxu0 0.0
    %3711 = vmatpush1.msra.mxu0 0.0
    %3712 = vmatprep.subr.mxu0 0.0
    %3713 = vmatpush1.msra.mxu0 0.0
    %3714 = vmatprep.subr.mxu0 0.0
    %3715 = vmatpush1.msra.mxu0 0.0
    %3716 = vmatprep.subr.mxu0 0.0
    %3717 = vmatpush1.msra.mxu0 0.0
    %3718 = vmatprep.subr.mxu0 0.0
    %3719 = vmatpush1.msra.mxu0 0.0
    %3720 = vmatprep.subr.mxu0 0.0
    %3721 = vmatpush1.msra.mxu0 0.0
    %3722 = vmatprep.subr.mxu0 0.0
    %3723 = vmatpush1.msra.mxu0 0.0
    %3724 = vmatprep.subr.mxu0 0.0
    %3725 = vmatpush1.msra.mxu0 0.0
    %3726 = vmatprep.subr.mxu0 0.0
    %3727 = vmatpush1.msra.mxu0 0.0
    %3728 = vmatprep.subr.mxu0 0.0
    %3729 = vmatpush1.msra.mxu0 0.0
    %3730 = vmatprep.subr.mxu0 0.0
    %3731 = vmatpush1.msra.mxu0 0.0
    %3732 = vmatprep.subr.mxu0 0.0
    %3733 = vmatpush1.msra.mxu0 0.0
    %3734 = vmatprep.subr.mxu0 0.0
    %3735 = vmatpush1.msra.mxu0 0.0
    %3736 = vmatprep.subr.mxu0 0.0
    %3737 = vmatpush1.msra.mxu0 0.0
    %3738 = vmatprep.subr.mxu0 0.0
    %3739 = vmatpush1.msra.mxu0 0.0
    %3740 = vmatprep.subr.mxu0 0.0
    %3741 = vmatpush1.msra.mxu0 0.0
    %3742 = vmatprep.subr.mxu0 0.0
    %3743 = vmatpush1.msra.mxu0 0.0
    %3744 = vmatprep.subr.mxu0 0.0
    %3745 = vmatpush1.msra.mxu0 0.0
    %3746 = vmatprep.subr.mxu0 0.0
    %3747 = vmatpush1.msra.mxu0 0.0
    %3748 = vmatprep.subr.mxu0 0.0
    %3749 = vmatpush1.msra.mxu0 0.0
    %3750 = vmatprep.subr.mxu0 0.0
    %3751 = vmatpush1.msra.mxu0 0.0
    %3752 = vmatprep.subr.mxu0 0.0
    %3753 = vmatpush1.msra.mxu0 0.0
    %3754 = vmatprep.subr.mxu0 0.0
    %3755 = vmatpush1.msra.mxu0 0.0
    %3756 = vmatprep.subr.mxu0 0.0
    %3757 = vmatpush1.msra.mxu0 0.0
    %3758 = vmatprep.subr.mxu0 0.0
    %3759 = vmatpush1.msra.mxu0 0.0
    %3760 = vmatprep.subr.mxu0 0.0
    %3761 = vmatpush1.msra.mxu0 0.0
    %3762 = vmatprep.subr.mxu0 0.0
    %3763 = vmatpush1.msra.mxu0 0.0
    %3764 = vmatprep.subr.mxu0 0.0
    %3765 = vmatpush1.msra.mxu0 0.0
    %3766 = vmatprep.subr.mxu0 0.0
    %3767 = vmatpush1.msra.mxu0 0.0
    %3768 = vmatprep.subr.mxu0 0.0
    %3769 = vmatpush1.msra.mxu0 0.0
    %3770 = vmatprep.mubr.f32.mxu0 0.0
    %v3771 = vand.u32 %v3276, 4294901760
    %3772 = vmatmul.mubr.f32.gmra.mrb[0].mxu0 %v3771
    %v3773 = vpop.f32.mrb[0].mxu0
    %v3774 = vadd.f32 %v3695, %v3773
    %v3775 = vpop.f32.mrb[0].mxu0
    %3776 = vmatprep.mubr.f32.mxu0 0.0
    %v3777 = vand.u32 %v3279, 4294901760
    %3778 = vmatmul.mubr.f32.gmra.mrb[0].mxu0 %v3777
    %v3779 = vpop.f32.mrb[0].mxu0
    %v3780 = vadd.f32 %v3701, %v3779
    %v3781 = vpop.f32.mrb[0].mxu0
    %3782 = vdwg.mxu0
    %v3784 = vsel %vm74, %v1237, 0
    %v3787 = vsel %vm74, %v1238, 0
    %3789 = vmatprep.subr.mxu0 0.0
    %v3790 = vand.u32 %v1194, 4294901760
    %3791 = vmatpush1.msra.mxu0 %v3790
    %3792 = vmatprep.subr.mxu0 0.0
    %v3793 = vand.u32 %v1200, 4294901760
    %3794 = vmatpush1.msra.mxu0 %v3793
    %3795 = vmatprep.subr.mxu0 0.0
    %3796 = vmatpush1.msra.mxu0 0.0
    %3797 = vmatprep.subr.mxu0 0.0
    %3798 = vmatpush1.msra.mxu0 0.0
    %3799 = vmatprep.subr.mxu0 0.0
    %3800 = vmatpush1.msra.mxu0 0.0
    %3801 = vmatprep.subr.mxu0 0.0
    %3802 = vmatpush1.msra.mxu0 0.0
    %3803 = vmatprep.subr.mxu0 0.0
    %3804 = vmatpush1.msra.mxu0 0.0
    %3805 = vmatprep.subr.mxu0 0.0
    %3806 = vmatpush1.msra.mxu0 0.0
    %3807 = vmatprep.subr.mxu0 0.0
    %3808 = vmatpush1.msra.mxu0 0.0
    %3809 = vmatprep.subr.mxu0 0.0
    %3810 = vmatpush1.msra.mxu0 0.0
    %3811 = vmatprep.subr.mxu0 0.0
    %3812 = vmatpush1.msra.mxu0 0.0
    %3813 = vmatprep.subr.mxu0 0.0
    %3814 = vmatpush1.msra.mxu0 0.0
    %3815 = vmatprep.subr.mxu0 0.0
    %3816 = vmatpush1.msra.mxu0 0.0
    %3817 = vmatprep.subr.mxu0 0.0
    %3818 = vmatpush1.msra.mxu0 0.0
    %3819 = vmatprep.subr.mxu0 0.0
    %3820 = vmatpush1.msra.mxu0 0.0
    %3821 = vmatprep.subr.mxu0 0.0
    %3822 = vmatpush1.msra.mxu0 0.0
    %3823 = vmatprep.subr.mxu0 0.0
    %3824 = vmatpush1.msra.mxu0 0.0
    %3825 = vmatprep.subr.mxu0 0.0
    %3826 = vmatpush1.msra.mxu0 0.0
    %3827 = vmatprep.subr.mxu0 0.0
    %3828 = vmatpush1.msra.mxu0 0.0
    %3829 = vmatprep.subr.mxu0 0.0
    %3830 = vmatpush1.msra.mxu0 0.0
    %3831 = vmatprep.subr.mxu0 0.0
    %3832 = vmatpush1.msra.mxu0 0.0
    %3833 = vmatprep.subr.mxu0 0.0
    %3834 = vmatpush1.msra.mxu0 0.0
    %3835 = vmatprep.subr.mxu0 0.0
    %3836 = vmatpush1.msra.mxu0 0.0
    %3837 = vmatprep.subr.mxu0 0.0
    %3838 = vmatpush1.msra.mxu0 0.0
    %3839 = vmatprep.subr.mxu0 0.0
    %3840 = vmatpush1.msra.mxu0 0.0
    %3841 = vmatprep.subr.mxu0 0.0
    %3842 = vmatpush1.msra.mxu0 0.0
    %3843 = vmatprep.subr.mxu0 0.0
    %3844 = vmatpush1.msra.mxu0 0.0
    %3845 = vmatprep.subr.mxu0 0.0
    %3846 = vmatpush1.msra.mxu0 0.0
    %3847 = vmatprep.subr.mxu0 0.0
    %3848 = vmatpush1.msra.mxu0 0.0
    %3849 = vmatprep.subr.mxu0 0.0
    %3850 = vmatpush1.msra.mxu0 0.0
    %3851 = vmatprep.subr.mxu0 0.0
    %3852 = vmatpush1.msra.mxu0 0.0
    %3853 = vmatprep.subr.mxu0 0.0
    %3854 = vmatpush1.msra.mxu0 0.0
    %3855 = vmatprep.mubr.f32.mxu0 0.0
    %v3856 = vand.u32 %v3784, 4294901760
    %v3857 = vsub.f32 %v3784, %v3856
    %v3858 = vand.u32 %v3857, 4294901760
    %v3859 = vsub.f32 %v3857, %v3858
    %v3860 = vand.u32 %v3859, 4294901760
    %3861 = vmatmul.mubr.f32.gmra.mrb[0].mxu0 %v3860
    %v3862 = vpop.f32.mrb[0].mxu0
    %v3863 = vadd.f32 0.0, %v3862
    %v3864 = vpop.f32.mrb[0].mxu0
    %3865 = vmatprep.mubr.f32.mxu0 0.0
    %v3866 = vand.u32 %v3787, 4294901760
    %v3867 = vsub.f32 %v3787, %v3866
    %v3868 = vand.u32 %v3867, 4294901760
    %v3869 = vsub.f32 %v3867, %v3868
    %v3870 = vand.u32 %v3869, 4294901760
    %3871 = vmatmul.mubr.f32.gmra.mrb[0].mxu0 %v3870
    %v3872 = vpop.f32.mrb[0].mxu0
    %v3873 = vadd.f32 0.0, %v3872
    %v3874 = vpop.f32.mrb[0].mxu0
    %3875 = vdwg.mxu0
    %3876 = vmatprep.subr.mxu0 0.0
    %v3877 = vand.u32 %v1194, 4294901760
    %v3878 = vsub.f32 %v1194, %v3877
    %v3879 = vand.u32 %v3878, 4294901760
    %v3880 = vsub.f32 %v3878, %v3879
    %v3881 = vand.u32 %v3880, 4294901760
    %3882 = vmatpush1.msra.mxu0 %v3881
    %3883 = vmatprep.subr.mxu0 0.0
    %v3884 = vand.u32 %v1200, 4294901760
    %v3885 = vsub.f32 %v1200, %v3884
    %v3886 = vand.u32 %v3885, 4294901760
    %v3887 = vsub.f32 %v3885, %v3886
    %v3888 = vand.u32 %v3887, 4294901760
    %3889 = vmatpush1.msra.mxu0 %v3888
    %3890 = vmatprep.subr.mxu0 0.0
    %3891 = vmatpush1.msra.mxu0 0.0
    %3892 = vmatprep.subr.mxu0 0.0
    %3893 = vmatpush1.msra.mxu0 0.0
    %3894 = vmatprep.subr.mxu0 0.0
    %3895 = vmatpush1.msra.mxu0 0.0
    %3896 = vmatprep.subr.mxu0 0.0
    %3897 = vmatpush1.msra.mxu0 0.0
    %3898 = vmatprep.subr.mxu0 0.0
    %3899 = vmatpush1.msra.mxu0 0.0
    %3900 = vmatprep.subr.mxu0 0.0
    %3901 = vmatpush1.msra.mxu0 0.0
    %3902 = vmatprep.subr.mxu0 0.0
    %3903 = vmatpush1.msra.mxu0 0.0
    %3904 = vmatprep.subr.mxu0 0.0
    %3905 = vmatpush1.msra.mxu0 0.0
    %3906 = vmatprep.subr.mxu0 0.0
    %3907 = vmatpush1.msra.mxu0 0.0
    %3908 = vmatprep.subr.mxu0 0.0
    %3909 = vmatpush1.msra.mxu0 0.0
    %3910 = vmatprep.subr.mxu0 0.0
    %3911 = vmatpush1.msra.mxu0 0.0
    %3912 = vmatprep.subr.mxu0 0.0
    %3913 = vmatpush1.msra.mxu0 0.0
    %3914 = vmatprep.subr.mxu0 0.0
    %3915 = vmatpush1.msra.mxu0 0.0
    %3916 = vmatprep.subr.mxu0 0.0
    %3917 = vmatpush1.msra.mxu0 0.0
    %3918 = vmatprep.subr.mxu0 0.0
    %3919 = vmatpush1.msra.mxu0 0.0
    %3920 = vmatprep.subr.mxu0 0.0
    %3921 = vmatpush1.msra.mxu0 0.0
    %3922 = vmatprep.subr.mxu0 0.0
    %3923 = vmatpush1.msra.mxu0 0.0
    %3924 = vmatprep.subr.mxu0 0.0
    %3925 = vmatpush1.msra.mxu0 0.0
    %3926 = vmatprep.subr.mxu0 0.0
    %3927 = vmatpush1.msra.mxu0 0.0
    %3928 = vmatprep.subr.mxu0 0.0
    %3929 = vmatpush1.msra.mxu0 0.0
    %3930 = vmatprep.subr.mxu0 0.0
    %3931 = vmatpush1.msra.mxu0 0.0
    %3932 = vmatprep.subr.mxu0 0.0
    %3933 = vmatpush1.msra.mxu0 0.0
    %3934 = vmatprep.subr.mxu0 0.0
    %3935 = vmatpush1.msra.mxu0 0.0
    %3936 = vmatprep.subr.mxu0 0.0
    %3937 = vmatpush1.msra.mxu0 0.0
    %3938 = vmatprep.subr.mxu0 0.0
    %3939 = vmatpush1.msra.mxu0 0.0
    %3940 = vmatprep.subr.mxu0 0.0
    %3941 = vmatpush1.msra.mxu0 0.0
    %3942 = vmatprep.subr.mxu0 0.0
    %3943 = vmatpush1.msra.mxu0 0.0
    %3944 = vmatprep.subr.mxu0 0.0
    %3945 = vmatpush1.msra.mxu0 0.0
    %3946 = vmatprep.subr.mxu0 0.0
    %3947 = vmatpush1.msra.mxu0 0.0
    %3948 = vmatprep.subr.mxu0 0.0
    %3949 = vmatpush1.msra.mxu0 0.0
    %3950 = vmatprep.mubr.f32.mxu0 0.0
    %v3951 = vand.u32 %v3784, 4294901760
    %3952 = vmatmul.mubr.f32.gmra.mrb[0].mxu0 %v3951
    %v3953 = vpop.f32.mrb[0].mxu0
    %v3954 = vadd.f32 %v3863, %v3953
    %v3955 = vpop.f32.mrb[0].mxu0
    %3956 = vmatprep.mubr.f32.mxu0 0.0
    %v3957 = vand.u32 %v3787, 4294901760
    %3958 = vmatmul.mubr.f32.gmra.mrb[0].mxu0 %v3957
    %v3959 = vpop.f32.mrb[0].mxu0
    %v3960 = vadd.f32 %v3873, %v3959
    %v3961 = vpop.f32.mrb[0].mxu0
    %3962 = vdwg.mxu0
    %3963 = vmatprep.subr.mxu0 0.0
    %v3964 = vand.u32 %v1194, 4294901760
    %v3965 = vsub.f32 %v1194, %v3964
    %3966 = vmatpush1.msra.mxu0 %v3965
    %3967 = vmatprep.subr.mxu0 0.0
    %v3968 = vand.u32 %v1200, 4294901760
    %v3969 = vsub.f32 %v1200, %v3968
    %3970 = vmatpush1.msra.mxu0 %v3969
    %3971 = vmatprep.subr.mxu0 0.0
    %3972 = vmatpush1.msra.mxu0 0.0
    %3973 = vmatprep.subr.mxu0 0.0
    %3974 = vmatpush1.msra.mxu0 0.0
    %3975 = vmatprep.subr.mxu0 0.0
    %3976 = vmatpush1.msra.mxu0 0.0
    %3977 = vmatprep.subr.mxu0 0.0
    %3978 = vmatpush1.msra.mxu0 0.0
    %3979 = vmatprep.subr.mxu0 0.0
    %3980 = vmatpush1.msra.mxu0 0.0
    %3981 = vmatprep.subr.mxu0 0.0
    %3982 = vmatpush1.msra.mxu0 0.0
    %3983 = vmatprep.subr.mxu0 0.0
    %3984 = vmatpush1.msra.mxu0 0.0
    %3985 = vmatprep.subr.mxu0 0.0
    %3986 = vmatpush1.msra.mxu0 0.0
    %3987 = vmatprep.subr.mxu0 0.0
    %3988 = vmatpush1.msra.mxu0 0.0
    %3989 = vmatprep.subr.mxu0 0.0
    %3990 = vmatpush1.msra.mxu0 0.0
    %3991 = vmatprep.subr.mxu0 0.0
    %3992 = vmatpush1.msra.mxu0 0.0
    %3993 = vmatprep.subr.mxu0 0.0
    %3994 = vmatpush1.msra.mxu0 0.0
    %3995 = vmatprep.subr.mxu0 0.0
    %3996 = vmatpush1.msra.mxu0 0.0
    %3997 = vmatprep.subr.mxu0 0.0
    %3998 = vmatpush1.msra.mxu0 0.0
    %3999 = vmatprep.subr.mxu0 0.0
    %4000 = vmatpush1.msra.mxu0 0.0
    %4001 = vmatprep.subr.mxu0 0.0
    %4002 = vmatpush1.msra.mxu0 0.0
    %4003 = vmatprep.subr.mxu0 0.0
    %4004 = vmatpush1.msra.mxu0 0.0
    %4005 = vmatprep.subr.mxu0 0.0
    %4006 = vmatpush1.msra.mxu0 0.0
    %4007 = vmatprep.subr.mxu0 0.0
    %4008 = vmatpush1.msra.mxu0 0.0
    %4009 = vmatprep.subr.mxu0 0.0
    %4010 = vmatpush1.msra.mxu0 0.0
    %4011 = vmatprep.subr.mxu0 0.0
    %4012 = vmatpush1.msra.mxu0 0.0
    %4013 = vmatprep.subr.mxu0 0.0
    %4014 = vmatpush1.msra.mxu0 0.0
    %4015 = vmatprep.subr.mxu0 0.0
    %4016 = vmatpush1.msra.mxu0 0.0
    %4017 = vmatprep.subr.mxu0 0.0
    %4018 = vmatpush1.msra.mxu0 0.0
    %4019 = vmatprep.subr.mxu0 0.0
    %4020 = vmatpush1.msra.mxu0 0.0
    %4021 = vmatprep.subr.mxu0 0.0
    %4022 = vmatpush1.msra.mxu0 0.0
    %4023 = vmatprep.subr.mxu0 0.0
    %4024 = vmatpush1.msra.mxu0 0.0
    %4025 = vmatprep.subr.mxu0 0.0
    %4026 = vmatpush1.msra.mxu0 0.0
    %4027 = vmatprep.subr.mxu0 0.0
    %4028 = vmatpush1.msra.mxu0 0.0
    %4029 = vmatprep.subr.mxu0 0.0
    %4030 = vmatpush1.msra.mxu0 0.0
    %4031 = vmatprep.mubr.f32.mxu0 0.0
    %v4032 = vand.u32 %v3784, 4294901760
    %v4033 = vsub.f32 %v3784, %v4032
    %4034 = vmatmul.mubr.f32.gmra.mrb[0].mxu0 %v4033
    %v4035 = vpop.f32.mrb[0].mxu0
    %v4036 = vadd.f32 %v3954, %v4035
    %v4037 = vpop.f32.mrb[0].mxu0
    %4038 = vmatprep.mubr.f32.mxu0 0.0
    %v4039 = vand.u32 %v3787, 4294901760
    %v4040 = vsub.f32 %v3787, %v4039
    %4041 = vmatmul.mubr.f32.gmra.mrb[0].mxu0 %v4040
    %v4042 = vpop.f32.mrb[0].mxu0
    %v4043 = vadd.f32 %v3960, %v4042
    %v4044 = vpop.f32.mrb[0].mxu0
    %4045 = vdwg.mxu0
    %4046 = vmatprep.subr.mxu0 0.0
    %v4047 = vand.u32 %v1194, 4294901760
    %4048 = vmatpush1.msra.mxu0 %v4047
    %4049 = vmatprep.subr.mxu0 0.0
    %v4050 = vand.u32 %v1200, 4294901760
    %4051 = vmatpush1.msra.mxu0 %v4050
    %4052 = vmatprep.subr.mxu0 0.0
    %4053 = vmatpush1.msra.mxu0 0.0
    %4054 = vmatprep.subr.mxu0 0.0
    %4055 = vmatpush1.msra.mxu0 0.0
    %4056 = vmatprep.subr.mxu0 0.0
    %4057 = vmatpush1.msra.mxu0 0.0
    %4058 = vmatprep.subr.mxu0 0.0
    %4059 = vmatpush1.msra.mxu0 0.0
    %4060 = vmatprep.subr.mxu0 0.0
    %4061 = vmatpush1.msra.mxu0 0.0
    %4062 = vmatprep.subr.mxu0 0.0
    %4063 = vmatpush1.msra.mxu0 0.0
    %4064 = vmatprep.subr.mxu0 0.0
    %4065 = vmatpush1.msra.mxu0 0.0
    %4066 = vmatprep.subr.mxu0 0.0
    %4067 = vmatpush1.msra.mxu0 0.0
    %4068 = vmatprep.subr.mxu0 0.0
    %4069 = vmatpush1.msra.mxu0 0.0
    %4070 = vmatprep.subr.mxu0 0.0
    %4071 = vmatpush1.msra.mxu0 0.0
    %4072 = vmatprep.subr.mxu0 0.0
    %4073 = vmatpush1.msra.mxu0 0.0
    %4074 = vmatprep.subr.mxu0 0.0
    %4075 = vmatpush1.msra.mxu0 0.0
    %4076 = vmatprep.subr.mxu0 0.0
    %4077 = vmatpush1.msra.mxu0 0.0
    %4078 = vmatprep.subr.mxu0 0.0
    %4079 = vmatpush1.msra.mxu0 0.0
    %4080 = vmatprep.subr.mxu0 0.0
    %4081 = vmatpush1.msra.mxu0 0.0
    %4082 = vmatprep.subr.mxu0 0.0
    %4083 = vmatpush1.msra.mxu0 0.0
    %4084 = vmatprep.subr.mxu0 0.0
    %4085 = vmatpush1.msra.mxu0 0.0
    %4086 = vmatprep.subr.mxu0 0.0
    %4087 = vmatpush1.msra.mxu0 0.0
    %4088 = vmatprep.subr.mxu0 0.0
    %4089 = vmatpush1.msra.mxu0 0.0
    %4090 = vmatprep.subr.mxu0 0.0
    %4091 = vmatpush1.msra.mxu0 0.0
    %4092 = vmatprep.subr.mxu0 0.0
    %4093 = vmatpush1.msra.mxu0 0.0
    %4094 = vmatprep.subr.mxu0 0.0
    %4095 = vmatpush1.msra.mxu0 0.0
    %4096 = vmatprep.subr.mxu0 0.0
    %4097 = vmatpush1.msra.mxu0 0.0
    %4098 = vmatprep.subr.mxu0 0.0
    %4099 = vmatpush1.msra.mxu0 0.0
    %4100 = vmatprep.subr.mxu0 0.0
    %4101 = vmatpush1.msra.mxu0 0.0
    %4102 = vmatprep.subr.mxu0 0.0
    %4103 = vmatpush1.msra.mxu0 0.0
    %4104 = vmatprep.subr.mxu0 0.0
    %4105 = vmatpush1.msra.mxu0 0.0
    %4106 = vmatprep.subr.mxu0 0.0
    %4107 = vmatpush1.msra.mxu0 0.0
    %4108 = vmatprep.subr.mxu0 0.0
    %4109 = vmatpush1.msra.mxu0 0.0
    %4110 = vmatprep.subr.mxu0 0.0
    %4111 = vmatpush1.msra.mxu0 0.0
    %4112 = vmatprep.mubr.f32.mxu0 0.0
    %v4113 = vand.u32 %v3784, 4294901760
    %v4114 = vsub.f32 %v3784, %v4113
    %v4115 = vand.u32 %v4114, 4294901760
    %4116 = vmatmul.mubr.f32.gmra.mrb[0].mxu0 %v4115
    %v4117 = vpop.f32.mrb[0].mxu0
    %v4118 = vadd.f32 %v4036, %v4117
    %v4119 = vpop.f32.mrb[0].mxu0
    %4120 = vmatprep.mubr.f32.mxu0 0.0
    %v4121 = vand.u32 %v3787, 4294901760
    %v4122 = vsub.f32 %v3787, %v4121
    %v4123 = vand.u32 %v4122, 4294901760
    %4124 = vmatmul.mubr.f32.gmra.mrb[0].mxu0 %v4123
    %v4125 = vpop.f32.mrb[0].mxu0
    %v4126 = vadd.f32 %v4043, %v4125
    %v4127 = vpop.f32.mrb[0].mxu0
    %4128 = vdwg.mxu0
    %4129 = vmatprep.subr.mxu0 0.0
    %v4130 = vand.u32 %v1194, 4294901760
    %v4131 = vsub.f32 %v1194, %v4130
    %v4132 = vand.u32 %v4131, 4294901760
    %4133 = vmatpush1.msra.mxu0 %v4132
    %4134 = vmatprep.subr.mxu0 0.0
    %v4135 = vand.u32 %v1200, 4294901760
    %v4136 = vsub.f32 %v1200, %v4135
    %v4137 = vand.u32 %v4136, 4294901760
    %4138 = vmatpush1.msra.mxu0 %v4137
    %4139 = vmatprep.subr.mxu0 0.0
    %4140 = vmatpush1.msra.mxu0 0.0
    %4141 = vmatprep.subr.mxu0 0.0
    %4142 = vmatpush1.msra.mxu0 0.0
    %4143 = vmatprep.subr.mxu0 0.0
    %4144 = vmatpush1.msra.mxu0 0.0
    %4145 = vmatprep.subr.mxu0 0.0
    %4146 = vmatpush1.msra.mxu0 0.0
    %4147 = vmatprep.subr.mxu0 0.0
    %4148 = vmatpush1.msra.mxu0 0.0
    %4149 = vmatprep.subr.mxu0 0.0
    %4150 = vmatpush1.msra.mxu0 0.0
    %4151 = vmatprep.subr.mxu0 0.0
    %4152 = vmatpush1.msra.mxu0 0.0
    %4153 = vmatprep.subr.mxu0 0.0
    %4154 = vmatpush1.msra.mxu0 0.0
    %4155 = vmatprep.subr.mxu0 0.0
    %4156 = vmatpush1.msra.mxu0 0.0
    %4157 = vmatprep.subr.mxu0 0.0
    %4158 = vmatpush1.msra.mxu0 0.0
    %4159 = vmatprep.subr.mxu0 0.0
    %4160 = vmatpush1.msra.mxu0 0.0
    %4161 = vmatprep.subr.mxu0 0.0
    %4162 = vmatpush1.msra.mxu0 0.0
    %4163 = vmatprep.subr.mxu0 0.0
    %4164 = vmatpush1.msra.mxu0 0.0
    %4165 = vmatprep.subr.mxu0 0.0
    %4166 = vmatpush1.msra.mxu0 0.0
    %4167 = vmatprep.subr.mxu0 0.0
    %4168 = vmatpush1.msra.mxu0 0.0
    %4169 = vmatprep.subr.mxu0 0.0
    %4170 = vmatpush1.msra.mxu0 0.0
    %4171 = vmatprep.subr.mxu0 0.0
    %4172 = vmatpush1.msra.mxu0 0.0
    %4173 = vmatprep.subr.mxu0 0.0
    %4174 = vmatpush1.msra.mxu0 0.0
    %4175 = vmatprep.subr.mxu0 0.0
    %4176 = vmatpush1.msra.mxu0 0.0
    %4177 = vmatprep.subr.mxu0 0.0
    %4178 = vmatpush1.msra.mxu0 0.0
    %4179 = vmatprep.subr.mxu0 0.0
    %4180 = vmatpush1.msra.mxu0 0.0
    %4181 = vmatprep.subr.mxu0 0.0
    %4182 = vmatpush1.msra.mxu0 0.0
    %4183 = vmatprep.subr.mxu0 0.0
    %4184 = vmatpush1.msra.mxu0 0.0
    %4185 = vmatprep.subr.mxu0 0.0
    %4186 = vmatpush1.msra.mxu0 0.0
    %4187 = vmatprep.subr.mxu0 0.0
    %4188 = vmatpush1.msra.mxu0 0.0
    %4189 = vmatprep.subr.mxu0 0.0
    %4190 = vmatpush1.msra.mxu0 0.0
    %4191 = vmatprep.subr.mxu0 0.0
    %4192 = vmatpush1.msra.mxu0 0.0
    %4193 = vmatprep.subr.mxu0 0.0
    %4194 = vmatpush1.msra.mxu0 0.0
    %4195 = vmatprep.subr.mxu0 0.0
    %4196 = vmatpush1.msra.mxu0 0.0
    %4197 = vmatprep.subr.mxu0 0.0
    %4198 = vmatpush1.msra.mxu0 0.0
    %4199 = vmatprep.mubr.f32.mxu0 0.0
    %v4200 = vand.u32 %v3784, 4294901760
    %4201 = vmatmul.mubr.f32.gmra.mrb[0].mxu0 %v4200
    %v4202 = vpop.f32.mrb[0].mxu0
    %v4203 = vadd.f32 %v4118, %v4202
    %v4204 = vpop.f32.mrb[0].mxu0
    %4205 = vmatprep.mubr.f32.mxu0 0.0
    %v4206 = vand.u32 %v3787, 4294901760
    %4207 = vmatmul.mubr.f32.gmra.mrb[0].mxu0 %v4206
    %v4208 = vpop.f32.mrb[0].mxu0
    %v4209 = vadd.f32 %v4126, %v4208
    %v4210 = vpop.f32.mrb[0].mxu0
    %4211 = vdwg.mxu0
    %4212 = vmatprep.subr.mxu0 0.0
    %v4213 = vand.u32 %v1194, 4294901760
    %4214 = vmatpush1.msra.mxu0 %v4213
    %4215 = vmatprep.subr.mxu0 0.0
    %v4216 = vand.u32 %v1200, 4294901760
    %4217 = vmatpush1.msra.mxu0 %v4216
    %4218 = vmatprep.subr.mxu0 0.0
    %4219 = vmatpush1.msra.mxu0 0.0
    %4220 = vmatprep.subr.mxu0 0.0
    %4221 = vmatpush1.msra.mxu0 0.0
    %4222 = vmatprep.subr.mxu0 0.0
    %4223 = vmatpush1.msra.mxu0 0.0
    %4224 = vmatprep.subr.mxu0 0.0
    %4225 = vmatpush1.msra.mxu0 0.0
    %4226 = vmatprep.subr.mxu0 0.0
    %4227 = vmatpush1.msra.mxu0 0.0
    %4228 = vmatprep.subr.mxu0 0.0
    %4229 = vmatpush1.msra.mxu0 0.0
    %4230 = vmatprep.subr.mxu0 0.0
    %4231 = vmatpush1.msra.mxu0 0.0
    %4232 = vmatprep.subr.mxu0 0.0
    %4233 = vmatpush1.msra.mxu0 0.0
    %4234 = vmatprep.subr.mxu0 0.0
    %4235 = vmatpush1.msra.mxu0 0.0
    %4236 = vmatprep.subr.mxu0 0.0
    %4237 = vmatpush1.msra.mxu0 0.0
    %4238 = vmatprep.subr.mxu0 0.0
    %4239 = vmatpush1.msra.mxu0 0.0
    %4240 = vmatprep.subr.mxu0 0.0
    %4241 = vmatpush1.msra.mxu0 0.0
    %4242 = vmatprep.subr.mxu0 0.0
    %4243 = vmatpush1.msra.mxu0 0.0
    %4244 = vmatprep.subr.mxu0 0.0
    %4245 = vmatpush1.msra.mxu0 0.0
    %4246 = vmatprep.subr.mxu0 0.0
    %4247 = vmatpush1.msra.mxu0 0.0
    %4248 = vmatprep.subr.mxu0 0.0
    %4249 = vmatpush1.msra.mxu0 0.0
    %4250 = vmatprep.subr.mxu0 0.0
    %4251 = vmatpush1.msra.mxu0 0.0
    %4252 = vmatprep.subr.mxu0 0.0
    %4253 = vmatpush1.msra.mxu0 0.0
    %4254 = vmatprep.subr.mxu0 0.0
    %4255 = vmatpush1.msra.mxu0 0.0
    %4256 = vmatprep.subr.mxu0 0.0
    %4257 = vmatpush1.msra.mxu0 0.0
    %4258 = vmatprep.subr.mxu0 0.0
    %4259 = vmatpush1.msra.mxu0 0.0
    %4260 = vmatprep.subr.mxu0 0.0
    %4261 = vmatpush1.msra.mxu0 0.0
    %4262 = vmatprep.subr.mxu0 0.0
    %4263 = vmatpush1.msra.mxu0 0.0
    %4264 = vmatprep.subr.mxu0 0.0
    %4265 = vmatpush1.msra.mxu0 0.0
    %4266 = vmatprep.subr.mxu0 0.0
    %4267 = vmatpush1.msra.mxu0 0.0
    %4268 = vmatprep.subr.mxu0 0.0
    %4269 = vmatpush1.msra.mxu0 0.0
    %4270 = vmatprep.subr.mxu0 0.0
    %4271 = vmatpush1.msra.mxu0 0.0
    %4272 = vmatprep.subr.mxu0 0.0
    %4273 = vmatpush1.msra.mxu0 0.0
    %4274 = vmatprep.subr.mxu0 0.0
    %4275 = vmatpush1.msra.mxu0 0.0
    %4276 = vmatprep.subr.mxu0 0.0
    %4277 = vmatpush1.msra.mxu0 0.0
    %4278 = vmatprep.mubr.f32.mxu0 0.0
    %v4279 = vand.u32 %v3784, 4294901760
    %4280 = vmatmul.mubr.f32.gmra.mrb[0].mxu0 %v4279
    %v4281 = vpop.f32.mrb[0].mxu0
    %v4282 = vadd.f32 %v4203, %v4281
    %v4283 = vpop.f32.mrb[0].mxu0
    %4284 = vmatprep.mubr.f32.mxu0 0.0
    %v4285 = vand.u32 %v3787, 4294901760
    %4286 = vmatmul.mubr.f32.gmra.mrb[0].mxu0 %v4285
    %v4287 = vpop.f32.mrb[0].mxu0
    %v4288 = vadd.f32 %v4209, %v4287
    %v4289 = vpop.f32.mrb[0].mxu0
    %4290 = vdwg.mxu0
    %v4292 = vsel %vm74, %v1239, 0
    %v4295 = vsel %vm74, %v1240, 0
    %4297 = vmatprep.subr.mxu0 0.0
    %v4298 = vand.u32 %v1206, 4294901760
    %4299 = vmatpush1.msra.mxu0 %v4298
    %4300 = vmatprep.subr.mxu0 0.0
    %v4301 = vand.u32 %v1212, 4294901760
    %4302 = vmatpush1.msra.mxu0 %v4301
    %4303 = vmatprep.subr.mxu0 0.0
    %4304 = vmatpush1.msra.mxu0 0.0
    %4305 = vmatprep.subr.mxu0 0.0
    %4306 = vmatpush1.msra.mxu0 0.0
    %4307 = vmatprep.subr.mxu0 0.0
    %4308 = vmatpush1.msra.mxu0 0.0
    %4309 = vmatprep.subr.mxu0 0.0
    %4310 = vmatpush1.msra.mxu0 0.0
    %4311 = vmatprep.subr.mxu0 0.0
    %4312 = vmatpush1.msra.mxu0 0.0
    %4313 = vmatprep.subr.mxu0 0.0
    %4314 = vmatpush1.msra.mxu0 0.0
    %4315 = vmatprep.subr.mxu0 0.0
    %4316 = vmatpush1.msra.mxu0 0.0
    %4317 = vmatprep.subr.mxu0 0.0
    %4318 = vmatpush1.msra.mxu0 0.0
    %4319 = vmatprep.subr.mxu0 0.0
    %4320 = vmatpush1.msra.mxu0 0.0
    %4321 = vmatprep.subr.mxu0 0.0
    %4322 = vmatpush1.msra.mxu0 0.0
    %4323 = vmatprep.subr.mxu0 0.0
    %4324 = vmatpush1.msra.mxu0 0.0
    %4325 = vmatprep.subr.mxu0 0.0
    %4326 = vmatpush1.msra.mxu0 0.0
    %4327 = vmatprep.subr.mxu0 0.0
    %4328 = vmatpush1.msra.mxu0 0.0
    %4329 = vmatprep.subr.mxu0 0.0
    %4330 = vmatpush1.msra.mxu0 0.0
    %4331 = vmatprep.subr.mxu0 0.0
    %4332 = vmatpush1.msra.mxu0 0.0
    %4333 = vmatprep.subr.mxu0 0.0
    %4334 = vmatpush1.msra.mxu0 0.0
    %4335 = vmatprep.subr.mxu0 0.0
    %4336 = vmatpush1.msra.mxu0 0.0
    %4337 = vmatprep.subr.mxu0 0.0
    %4338 = vmatpush1.msra.mxu0 0.0
    %4339 = vmatprep.subr.mxu0 0.0
    %4340 = vmatpush1.msra.mxu0 0.0
    %4341 = vmatprep.subr.mxu0 0.0
    %4342 = vmatpush1.msra.mxu0 0.0
    %4343 = vmatprep.subr.mxu0 0.0
    %4344 = vmatpush1.msra.mxu0 0.0
    %4345 = vmatprep.subr.mxu0 0.0
    %4346 = vmatpush1.msra.mxu0 0.0
    %4347 = vmatprep.subr.mxu0 0.0
    %4348 = vmatpush1.msra.mxu0 0.0
    %4349 = vmatprep.subr.mxu0 0.0
    %4350 = vmatpush1.msra.mxu0 0.0
    %4351 = vmatprep.subr.mxu0 0.0
    %4352 = vmatpush1.msra.mxu0 0.0
    %4353 = vmatprep.subr.mxu0 0.0
    %4354 = vmatpush1.msra.mxu0 0.0
    %4355 = vmatprep.subr.mxu0 0.0
    %4356 = vmatpush1.msra.mxu0 0.0
    %4357 = vmatprep.subr.mxu0 0.0
    %4358 = vmatpush1.msra.mxu0 0.0
    %4359 = vmatprep.subr.mxu0 0.0
    %4360 = vmatpush1.msra.mxu0 0.0
    %4361 = vmatprep.subr.mxu0 0.0
    %4362 = vmatpush1.msra.mxu0 0.0
    %4363 = vmatprep.mubr.f32.mxu0 0.0
    %v4364 = vand.u32 %v4292, 4294901760
    %v4365 = vsub.f32 %v4292, %v4364
    %v4366 = vand.u32 %v4365, 4294901760
    %v4367 = vsub.f32 %v4365, %v4366
    %v4368 = vand.u32 %v4367, 4294901760
    %4369 = vmatmul.mubr.f32.gmra.mrb[0].mxu0 %v4368
    %v4370 = vpop.f32.mrb[0].mxu0
    %v4371 = vadd.f32 0.0, %v4370
    %v4372 = vpop.f32.mrb[0].mxu0
    %4373 = vmatprep.mubr.f32.mxu0 0.0
    %v4374 = vand.u32 %v4295, 4294901760
    %v4375 = vsub.f32 %v4295, %v4374
    %v4376 = vand.u32 %v4375, 4294901760
    %v4377 = vsub.f32 %v4375, %v4376
    %v4378 = vand.u32 %v4377, 4294901760
    %4379 = vmatmul.mubr.f32.gmra.mrb[0].mxu0 %v4378
    %v4380 = vpop.f32.mrb[0].mxu0
    %v4381 = vadd.f32 0.0, %v4380
    %v4382 = vpop.f32.mrb[0].mxu0
    %4383 = vdwg.mxu0
    %4384 = vmatprep.subr.mxu0 0.0
    %v4385 = vand.u32 %v1206, 4294901760
    %v4386 = vsub.f32 %v1206, %v4385
    %v4387 = vand.u32 %v4386, 4294901760
    %v4388 = vsub.f32 %v4386, %v4387
    %v4389 = vand.u32 %v4388, 4294901760
    %4390 = vmatpush1.msra.mxu0 %v4389
    %4391 = vmatprep.subr.mxu0 0.0
    %v4392 = vand.u32 %v1212, 4294901760
    %v4393 = vsub.f32 %v1212, %v4392
    %v4394 = vand.u32 %v4393, 4294901760
    %v4395 = vsub.f32 %v4393, %v4394
    %v4396 = vand.u32 %v4395, 4294901760
    %4397 = vmatpush1.msra.mxu0 %v4396
    %4398 = vmatprep.subr.mxu0 0.0
    %4399 = vmatpush1.msra.mxu0 0.0
    %4400 = vmatprep.subr.mxu0 0.0
    %4401 = vmatpush1.msra.mxu0 0.0
    %4402 = vmatprep.subr.mxu0 0.0
    %4403 = vmatpush1.msra.mxu0 0.0
    %4404 = vmatprep.subr.mxu0 0.0
    %4405 = vmatpush1.msra.mxu0 0.0
    %4406 = vmatprep.subr.mxu0 0.0
    %4407 = vmatpush1.msra.mxu0 0.0
    %4408 = vmatprep.subr.mxu0 0.0
    %4409 = vmatpush1.msra.mxu0 0.0
    %4410 = vmatprep.subr.mxu0 0.0
    %4411 = vmatpush1.msra.mxu0 0.0
    %4412 = vmatprep.subr.mxu0 0.0
    %4413 = vmatpush1.msra.mxu0 0.0
    %4414 = vmatprep.subr.mxu0 0.0
    %4415 = vmatpush1.msra.mxu0 0.0
    %4416 = vmatprep.subr.mxu0 0.0
    %4417 = vmatpush1.msra.mxu0 0.0
    %4418 = vmatprep.subr.mxu0 0.0
    %4419 = vmatpush1.msra.mxu0 0.0
    %4420 = vmatprep.subr.mxu0 0.0
    %4421 = vmatpush1.msra.mxu0 0.0
    %4422 = vmatprep.subr.mxu0 0.0
    %4423 = vmatpush1.msra.mxu0 0.0
    %4424 = vmatprep.subr.mxu0 0.0
    %4425 = vmatpush1.msra.mxu0 0.0
    %4426 = vmatprep.subr.mxu0 0.0
    %4427 = vmatpush1.msra.mxu0 0.0
    %4428 = vmatprep.subr.mxu0 0.0
    %4429 = vmatpush1.msra.mxu0 0.0
    %4430 = vmatprep.subr.mxu0 0.0
    %4431 = vmatpush1.msra.mxu0 0.0
    %4432 = vmatprep.subr.mxu0 0.0
    %4433 = vmatpush1.msra.mxu0 0.0
    %4434 = vmatprep.subr.mxu0 0.0
    %4435 = vmatpush1.msra.mxu0 0.0
    %4436 = vmatprep.subr.mxu0 0.0
    %4437 = vmatpush1.msra.mxu0 0.0
    %4438 = vmatprep.subr.mxu0 0.0
    %4439 = vmatpush1.msra.mxu0 0.0
    %4440 = vmatprep.subr.mxu0 0.0
    %4441 = vmatpush1.msra.mxu0 0.0
    %4442 = vmatprep.subr.mxu0 0.0
    %4443 = vmatpush1.msra.mxu0 0.0
    %4444 = vmatprep.subr.mxu0 0.0
    %4445 = vmatpush1.msra.mxu0 0.0
    %4446 = vmatprep.subr.mxu0 0.0
    %4447 = vmatpush1.msra.mxu0 0.0
    %4448 = vmatprep.subr.mxu0 0.0
    %4449 = vmatpush1.msra.mxu0 0.0
    %4450 = vmatprep.subr.mxu0 0.0
    %4451 = vmatpush1.msra.mxu0 0.0
    %4452 = vmatprep.subr.mxu0 0.0
    %4453 = vmatpush1.msra.mxu0 0.0
    %4454 = vmatprep.subr.mxu0 0.0
    %4455 = vmatpush1.msra.mxu0 0.0
    %4456 = vmatprep.subr.mxu0 0.0
    %4457 = vmatpush1.msra.mxu0 0.0
    %4458 = vmatprep.mubr.f32.mxu0 0.0
    %v4459 = vand.u32 %v4292, 4294901760
    %4460 = vmatmul.mubr.f32.gmra.mrb[0].mxu0 %v4459
    %v4461 = vpop.f32.mrb[0].mxu0
    %v4462 = vadd.f32 %v4371, %v4461
    %v4463 = vpop.f32.mrb[0].mxu0
    %4464 = vmatprep.mubr.f32.mxu0 0.0
    %v4465 = vand.u32 %v4295, 4294901760
    %4466 = vmatmul.mubr.f32.gmra.mrb[0].mxu0 %v4465
    %v4467 = vpop.f32.mrb[0].mxu0
    %v4468 = vadd.f32 %v4381, %v4467
    %v4469 = vpop.f32.mrb[0].mxu0
    %4470 = vdwg.mxu0
    %4471 = vmatprep.subr.mxu0 0.0
    %v4472 = vand.u32 %v1206, 4294901760
    %v4473 = vsub.f32 %v1206, %v4472
    %4474 = vmatpush1.msra.mxu0 %v4473
    %4475 = vmatprep.subr.mxu0 0.0
    %v4476 = vand.u32 %v1212, 4294901760
    %v4477 = vsub.f32 %v1212, %v4476
    %4478 = vmatpush1.msra.mxu0 %v4477
    %4479 = vmatprep.subr.mxu0 0.0
    %4480 = vmatpush1.msra.mxu0 0.0
    %4481 = vmatprep.subr.mxu0 0.0
    %4482 = vmatpush1.msra.mxu0 0.0
    %4483 = vmatprep.subr.mxu0 0.0
    %4484 = vmatpush1.msra.mxu0 0.0
    %4485 = vmatprep.subr.mxu0 0.0
    %4486 = vmatpush1.msra.mxu0 0.0
    %4487 = vmatprep.subr.mxu0 0.0
    %4488 = vmatpush1.msra.mxu0 0.0
    %4489 = vmatprep.subr.mxu0 0.0
    %4490 = vmatpush1.msra.mxu0 0.0
    %4491 = vmatprep.subr.mxu0 0.0
    %4492 = vmatpush1.msra.mxu0 0.0
    %4493 = vmatprep.subr.mxu0 0.0
    %4494 = vmatpush1.msra.mxu0 0.0
    %4495 = vmatprep.subr.mxu0 0.0
    %4496 = vmatpush1.msra.mxu0 0.0
    %4497 = vmatprep.subr.mxu0 0.0
    %4498 = vmatpush1.msra.mxu0 0.0
    %4499 = vmatprep.subr.mxu0 0.0
    %4500 = vmatpush1.msra.mxu0 0.0
    %4501 = vmatprep.subr.mxu0 0.0
    %4502 = vmatpush1.msra.mxu0 0.0
    %4503 = vmatprep.subr.mxu0 0.0
    %4504 = vmatpush1.msra.mxu0 0.0
    %4505 = vmatprep.subr.mxu0 0.0
    %4506 = vmatpush1.msra.mxu0 0.0
    %4507 = vmatprep.subr.mxu0 0.0
    %4508 = vmatpush1.msra.mxu0 0.0
    %4509 = vmatprep.subr.mxu0 0.0
    %4510 = vmatpush1.msra.mxu0 0.0
    %4511 = vmatprep.subr.mxu0 0.0
    %4512 = vmatpush1.msra.mxu0 0.0
    %4513 = vmatprep.subr.mxu0 0.0
    %4514 = vmatpush1.msra.mxu0 0.0
    %4515 = vmatprep.subr.mxu0 0.0
    %4516 = vmatpush1.msra.mxu0 0.0
    %4517 = vmatprep.subr.mxu0 0.0
    %4518 = vmatpush1.msra.mxu0 0.0
    %4519 = vmatprep.subr.mxu0 0.0
    %4520 = vmatpush1.msra.mxu0 0.0
    %4521 = vmatprep.subr.mxu0 0.0
    %4522 = vmatpush1.msra.mxu0 0.0
    %4523 = vmatprep.subr.mxu0 0.0
    %4524 = vmatpush1.msra.mxu0 0.0
    %4525 = vmatprep.subr.mxu0 0.0
    %4526 = vmatpush1.msra.mxu0 0.0
    %4527 = vmatprep.subr.mxu0 0.0
    %4528 = vmatpush1.msra.mxu0 0.0
    %4529 = vmatprep.subr.mxu0 0.0
    %4530 = vmatpush1.msra.mxu0 0.0
    %4531 = vmatprep.subr.mxu0 0.0
    %4532 = vmatpush1.msra.mxu0 0.0
    %4533 = vmatprep.subr.mxu0 0.0
    %4534 = vmatpush1.msra.mxu0 0.0
    %4535 = vmatprep.subr.mxu0 0.0
    %4536 = vmatpush1.msra.mxu0 0.0
    %4537 = vmatprep.subr.mxu0 0.0
    %4538 = vmatpush1.msra.mxu0 0.0
    %4539 = vmatprep.mubr.f32.mxu0 0.0
    %v4540 = vand.u32 %v4292, 4294901760
    %v4541 = vsub.f32 %v4292, %v4540
    %4542 = vmatmul.mubr.f32.gmra.mrb[0].mxu0 %v4541
    %v4543 = vpop.f32.mrb[0].mxu0
    %v4544 = vadd.f32 %v4462, %v4543
    %v4545 = vpop.f32.mrb[0].mxu0
    %4546 = vmatprep.mubr.f32.mxu0 0.0
    %v4547 = vand.u32 %v4295, 4294901760
    %v4548 = vsub.f32 %v4295, %v4547
    %4549 = vmatmul.mubr.f32.gmra.mrb[0].mxu0 %v4548
    %v4550 = vpop.f32.mrb[0].mxu0
    %v4551 = vadd.f32 %v4468, %v4550
    %v4552 = vpop.f32.mrb[0].mxu0
    %4553 = vdwg.mxu0
    %4554 = vmatprep.subr.mxu0 0.0
    %v4555 = vand.u32 %v1206, 4294901760
    %4556 = vmatpush1.msra.mxu0 %v4555
    %4557 = vmatprep.subr.mxu0 0.0
    %v4558 = vand.u32 %v1212, 4294901760
    %4559 = vmatpush1.msra.mxu0 %v4558
    %4560 = vmatprep.subr.mxu0 0.0
    %4561 = vmatpush1.msra.mxu0 0.0
    %4562 = vmatprep.subr.mxu0 0.0
    %4563 = vmatpush1.msra.mxu0 0.0
    %4564 = vmatprep.subr.mxu0 0.0
    %4565 = vmatpush1.msra.mxu0 0.0
    %4566 = vmatprep.subr.mxu0 0.0
    %4567 = vmatpush1.msra.mxu0 0.0
    %4568 = vmatprep.subr.mxu0 0.0
    %4569 = vmatpush1.msra.mxu0 0.0
    %4570 = vmatprep.subr.mxu0 0.0
    %4571 = vmatpush1.msra.mxu0 0.0
    %4572 = vmatprep.subr.mxu0 0.0
    %4573 = vmatpush1.msra.mxu0 0.0
    %4574 = vmatprep.subr.mxu0 0.0
    %4575 = vmatpush1.msra.mxu0 0.0
    %4576 = vmatprep.subr.mxu0 0.0
    %4577 = vmatpush1.msra.mxu0 0.0
    %4578 = vmatprep.subr.mxu0 0.0
    %4579 = vmatpush1.msra.mxu0 0.0
    %4580 = vmatprep.subr.mxu0 0.0
    %4581 = vmatpush1.msra.mxu0 0.0
    %4582 = vmatprep.subr.mxu0 0.0
    %4583 = vmatpush1.msra.mxu0 0.0
    %4584 = vmatprep.subr.mxu0 0.0
    %4585 = vmatpush1.msra.mxu0 0.0
    %4586 = vmatprep.subr.mxu0 0.0
    %4587 = vmatpush1.msra.mxu0 0.0
    %4588 = vmatprep.subr.mxu0 0.0
    %4589 = vmatpush1.msra.mxu0 0.0
    %4590 = vmatprep.subr.mxu0 0.0
    %4591 = vmatpush1.msra.mxu0 0.0
    %4592 = vmatprep.subr.mxu0 0.0
    %4593 = vmatpush1.msra.mxu0 0.0
    %4594 = vmatprep.subr.mxu0 0.0
    %4595 = vmatpush1.msra.mxu0 0.0
    %4596 = vmatprep.subr.mxu0 0.0
    %4597 = vmatpush1.msra.mxu0 0.0
    %4598 = vmatprep.subr.mxu0 0.0
    %4599 = vmatpush1.msra.mxu0 0.0
    %4600 = vmatprep.subr.mxu0 0.0
    %4601 = vmatpush1.msra.mxu0 0.0
    %4602 = vmatprep.subr.mxu0 0.0
    %4603 = vmatpush1.msra.mxu0 0.0
    %4604 = vmatprep.subr.mxu0 0.0
    %4605 = vmatpush1.msra.mxu0 0.0
    %4606 = vmatprep.subr.mxu0 0.0
    %4607 = vmatpush1.msra.mxu0 0.0
    %4608 = vmatprep.subr.mxu0 0.0
    %4609 = vmatpush1.msra.mxu0 0.0
    %4610 = vmatprep.subr.mxu0 0.0
    %4611 = vmatpush1.msra.mxu0 0.0
    %4612 = vmatprep.subr.mxu0 0.0
    %4613 = vmatpush1.msra.mxu0 0.0
    %4614 = vmatprep.subr.mxu0 0.0
    %4615 = vmatpush1.msra.mxu0 0.0
    %4616 = vmatprep.subr.mxu0 0.0
    %4617 = vmatpush1.msra.mxu0 0.0
    %4618 = vmatprep.subr.mxu0 0.0
    %4619 = vmatpush1.msra.mxu0 0.0
    %4620 = vmatprep.mubr.f32.mxu0 0.0
    %v4621 = vand.u32 %v4292, 4294901760
    %v4622 = vsub.f32 %v4292, %v4621
    %v4623 = vand.u32 %v4622, 4294901760
    %4624 = vmatmul.mubr.f32.gmra.mrb[0].mxu0 %v4623
    %v4625 = vpop.f32.mrb[0].mxu0
    %v4626 = vadd.f32 %v4544, %v4625
    %v4627 = vpop.f32.mrb[0].mxu0
    %4628 = vmatprep.mubr.f32.mxu0 0.0
    %v4629 = vand.u32 %v4295, 4294901760
    %v4630 = vsub.f32 %v4295, %v4629
    %v4631 = vand.u32 %v4630, 4294901760
    %4632 = vmatmul.mubr.f32.gmra.mrb[0].mxu0 %v4631
    %v4633 = vpop.f32.mrb[0].mxu0
    %v4634 = vadd.f32 %v4551, %v4633
    %v4635 = vpop.f32.mrb[0].mxu0
    %4636 = vdwg.mxu0
    %4637 = vmatprep.subr.mxu0 0.0
    %v4638 = vand.u32 %v1206, 4294901760
    %v4639 = vsub.f32 %v1206, %v4638
    %v4640 = vand.u32 %v4639, 4294901760
    %4641 = vmatpush1.msra.mxu0 %v4640
    %4642 = vmatprep.subr.mxu0 0.0
    %v4643 = vand.u32 %v1212, 4294901760
    %v4644 = vsub.f32 %v1212, %v4643
    %v4645 = vand.u32 %v4644, 4294901760
    %4646 = vmatpush1.msra.mxu0 %v4645
    %4647 = vmatprep.subr.mxu0 0.0
    %4648 = vmatpush1.msra.mxu0 0.0
    %4649 = vmatprep.subr.mxu0 0.0
    %4650 = vmatpush1.msra.mxu0 0.0
    %4651 = vmatprep.subr.mxu0 0.0
    %4652 = vmatpush1.msra.mxu0 0.0
    %4653 = vmatprep.subr.mxu0 0.0
    %4654 = vmatpush1.msra.mxu0 0.0
    %4655 = vmatprep.subr.mxu0 0.0
    %4656 = vmatpush1.msra.mxu0 0.0
    %4657 = vmatprep.subr.mxu0 0.0
    %4658 = vmatpush1.msra.mxu0 0.0
    %4659 = vmatprep.subr.mxu0 0.0
    %4660 = vmatpush1.msra.mxu0 0.0
    %4661 = vmatprep.subr.mxu0 0.0
    %4662 = vmatpush1.msra.mxu0 0.0
    %4663 = vmatprep.subr.mxu0 0.0
    %4664 = vmatpush1.msra.mxu0 0.0
    %4665 = vmatprep.subr.mxu0 0.0
    %4666 = vmatpush1.msra.mxu0 0.0
    %4667 = vmatprep.subr.mxu0 0.0
    %4668 = vmatpush1.msra.mxu0 0.0
    %4669 = vmatprep.subr.mxu0 0.0
    %4670 = vmatpush1.msra.mxu0 0.0
    %4671 = vmatprep.subr.mxu0 0.0
    %4672 = vmatpush1.msra.mxu0 0.0
    %4673 = vmatprep.subr.mxu0 0.0
    %4674 = vmatpush1.msra.mxu0 0.0
    %4675 = vmatprep.subr.mxu0 0.0
    %4676 = vmatpush1.msra.mxu0 0.0
    %4677 = vmatprep.subr.mxu0 0.0
    %4678 = vmatpush1.msra.mxu0 0.0
    %4679 = vmatprep.subr.mxu0 0.0
    %4680 = vmatpush1.msra.mxu0 0.0
    %4681 = vmatprep.subr.mxu0 0.0
    %4682 = vmatpush1.msra.mxu0 0.0
    %4683 = vmatprep.subr.mxu0 0.0
    %4684 = vmatpush1.msra.mxu0 0.0
    %4685 = vmatprep.subr.mxu0 0.0
    %4686 = vmatpush1.msra.mxu0 0.0
    %4687 = vmatprep.subr.mxu0 0.0
    %4688 = vmatpush1.msra.mxu0 0.0
    %4689 = vmatprep.subr.mxu0 0.0
    %4690 = vmatpush1.msra.mxu0 0.0
    %4691 = vmatprep.subr.mxu0 0.0
    %4692 = vmatpush1.msra.mxu0 0.0
    %4693 = vmatprep.subr.mxu0 0.0
    %4694 = vmatpush1.msra.mxu0 0.0
    %4695 = vmatprep.subr.mxu0 0.0
    %4696 = vmatpush1.msra.mxu0 0.0
    %4697 = vmatprep.subr.mxu0 0.0
    %4698 = vmatpush1.msra.mxu0 0.0
    %4699 = vmatprep.subr.mxu0 0.0
    %4700 = vmatpush1.msra.mxu0 0.0
    %4701 = vmatprep.subr.mxu0 0.0
    %4702 = vmatpush1.msra.mxu0 0.0
    %4703 = vmatprep.subr.mxu0 0.0
    %4704 = vmatpush1.msra.mxu0 0.0
    %4705 = vmatprep.subr.mxu0 0.0
    %4706 = vmatpush1.msra.mxu0 0.0
    %4707 = vmatprep.mubr.f32.mxu0 0.0
    %v4708 = vand.u32 %v4292, 4294901760
    %4709 = vmatmul.mubr.f32.gmra.mrb[0].mxu0 %v4708
    %v4710 = vpop.f32.mrb[0].mxu0
    %v4711 = vadd.f32 %v4626, %v4710
    %v4712 = vpop.f32.mrb[0].mxu0
    %4713 = vmatprep.mubr.f32.mxu0 0.0
    %v4714 = vand.u32 %v4295, 4294901760
    %4715 = vmatmul.mubr.f32.gmra.mrb[0].mxu0 %v4714
    %v4716 = vpop.f32.mrb[0].mxu0
    %v4717 = vadd.f32 %v4634, %v4716
    %v4718 = vpop.f32.mrb[0].mxu0
    %4719 = vdwg.mxu0
    %4720 = vmatprep.subr.mxu0 0.0
    %v4721 = vand.u32 %v1206, 4294901760
    %4722 = vmatpush1.msra.mxu0 %v4721
    %4723 = vmatprep.subr.mxu0 0.0
    %v4724 = vand.u32 %v1212, 4294901760
    %4725 = vmatpush1.msra.mxu0 %v4724
    %4726 = vmatprep.subr.mxu0 0.0
    %4727 = vmatpush1.msra.mxu0 0.0
    %4728 = vmatprep.subr.mxu0 0.0
    %4729 = vmatpush1.msra.mxu0 0.0
    %4730 = vmatprep.subr.mxu0 0.0
    %4731 = vmatpush1.msra.mxu0 0.0
    %4732 = vmatprep.subr.mxu0 0.0
    %4733 = vmatpush1.msra.mxu0 0.0
    %4734 = vmatprep.subr.mxu0 0.0
    %4735 = vmatpush1.msra.mxu0 0.0
    %4736 = vmatprep.subr.mxu0 0.0
    %4737 = vmatpush1.msra.mxu0 0.0
    %4738 = vmatprep.subr.mxu0 0.0
    %4739 = vmatpush1.msra.mxu0 0.0
    %4740 = vmatprep.subr.mxu0 0.0
    %4741 = vmatpush1.msra.mxu0 0.0
    %4742 = vmatprep.subr.mxu0 0.0
    %4743 = vmatpush1.msra.mxu0 0.0
    %4744 = vmatprep.subr.mxu0 0.0
    %4745 = vmatpush1.msra.mxu0 0.0
    %4746 = vmatprep.subr.mxu0 0.0
    %4747 = vmatpush1.msra.mxu0 0.0
    %4748 = vmatprep.subr.mxu0 0.0
    %4749 = vmatpush1.msra.mxu0 0.0
    %4750 = vmatprep.subr.mxu0 0.0
    %4751 = vmatpush1.msra.mxu0 0.0
    %4752 = vmatprep.subr.mxu0 0.0
    %4753 = vmatpush1.msra.mxu0 0.0
    %4754 = vmatprep.subr.mxu0 0.0
    %4755 = vmatpush1.msra.mxu0 0.0
    %4756 = vmatprep.subr.mxu0 0.0
    %4757 = vmatpush1.msra.mxu0 0.0
    %4758 = vmatprep.subr.mxu0 0.0
    %4759 = vmatpush1.msra.mxu0 0.0
    %4760 = vmatprep.subr.mxu0 0.0
    %4761 = vmatpush1.msra.mxu0 0.0
    %4762 = vmatprep.subr.mxu0 0.0
    %4763 = vmatpush1.msra.mxu0 0.0
    %4764 = vmatprep.subr.mxu0 0.0
    %4765 = vmatpush1.msra.mxu0 0.0
    %4766 = vmatprep.subr.mxu0 0.0
    %4767 = vmatpush1.msra.mxu0 0.0
    %4768 = vmatprep.subr.mxu0 0.0
    %4769 = vmatpush1.msra.mxu0 0.0
    %4770 = vmatprep.subr.mxu0 0.0
    %4771 = vmatpush1.msra.mxu0 0.0
    %4772 = vmatprep.subr.mxu0 0.0
    %4773 = vmatpush1.msra.mxu0 0.0
    %4774 = vmatprep.subr.mxu0 0.0
    %4775 = vmatpush1.msra.mxu0 0.0
    %4776 = vmatprep.subr.mxu0 0.0
    %4777 = vmatpush1.msra.mxu0 0.0
    %4778 = vmatprep.subr.mxu0 0.0
    %4779 = vmatpush1.msra.mxu0 0.0
    %4780 = vmatprep.subr.mxu0 0.0
    %4781 = vmatpush1.msra.mxu0 0.0
    %4782 = vmatprep.subr.mxu0 0.0
    %4783 = vmatpush1.msra.mxu0 0.0
    %4784 = vmatprep.subr.mxu0 0.0
    %4785 = vmatpush1.msra.mxu0 0.0
    %4786 = vmatprep.mubr.f32.mxu0 0.0
    %v4787 = vand.u32 %v4292, 4294901760
    %4788 = vmatmul.mubr.f32.gmra.mrb[0].mxu0 %v4787
    %v4789 = vpop.f32.mrb[0].mxu0
    %v4790 = vadd.f32 %v4711, %v4789
    %v4791 = vpop.f32.mrb[0].mxu0
    %4792 = vmatprep.mubr.f32.mxu0 0.0
    %v4793 = vand.u32 %v4295, 4294901760
    %4794 = vmatmul.mubr.f32.gmra.mrb[0].mxu0 %v4793
    %v4795 = vpop.f32.mrb[0].mxu0
    %v4796 = vadd.f32 %v4717, %v4795
    %v4797 = vpop.f32.mrb[0].mxu0
    %4798 = vdwg.mxu0
    %v4800 = vsel %vm74, %v1241, 0
    %v4803 = vsel %vm74, %v1242, 0
    %4805 = vmatprep.subr.mxu0 0.0
    %v4806 = vand.u32 %v1218, 4294901760
    %4807 = vmatpush1.msra.mxu0 %v4806
    %4808 = vmatprep.subr.mxu0 0.0
    %v4809 = vand.u32 %v1224, 4294901760
    %4810 = vmatpush1.msra.mxu0 %v4809
    %4811 = vmatprep.subr.mxu0 0.0
    %4812 = vmatpush1.msra.mxu0 0.0
    %4813 = vmatprep.subr.mxu0 0.0
    %4814 = vmatpush1.msra.mxu0 0.0
    %4815 = vmatprep.subr.mxu0 0.0
    %4816 = vmatpush1.msra.mxu0 0.0
    %4817 = vmatprep.subr.mxu0 0.0
    %4818 = vmatpush1.msra.mxu0 0.0
    %4819 = vmatprep.subr.mxu0 0.0
    %4820 = vmatpush1.msra.mxu0 0.0
    %4821 = vmatprep.subr.mxu0 0.0
    %4822 = vmatpush1.msra.mxu0 0.0
    %4823 = vmatprep.subr.mxu0 0.0
    %4824 = vmatpush1.msra.mxu0 0.0
    %4825 = vmatprep.subr.mxu0 0.0
    %4826 = vmatpush1.msra.mxu0 0.0
    %4827 = vmatprep.subr.mxu0 0.0
    %4828 = vmatpush1.msra.mxu0 0.0
    %4829 = vmatprep.subr.mxu0 0.0
    %4830 = vmatpush1.msra.mxu0 0.0
    %4831 = vmatprep.subr.mxu0 0.0
    %4832 = vmatpush1.msra.mxu0 0.0
    %4833 = vmatprep.subr.mxu0 0.0
    %4834 = vmatpush1.msra.mxu0 0.0
    %4835 = vmatprep.subr.mxu0 0.0
    %4836 = vmatpush1.msra.mxu0 0.0
    %4837 = vmatprep.subr.mxu0 0.0
    %4838 = vmatpush1.msra.mxu0 0.0
    %4839 = vmatprep.subr.mxu0 0.0
    %4840 = vmatpush1.msra.mxu0 0.0
    %4841 = vmatprep.subr.mxu0 0.0
    %4842 = vmatpush1.msra.mxu0 0.0
    %4843 = vmatprep.subr.mxu0 0.0
    %4844 = vmatpush1.msra.mxu0 0.0
    %4845 = vmatprep.subr.mxu0 0.0
    %4846 = vmatpush1.msra.mxu0 0.0
    %4847 = vmatprep.subr.mxu0 0.0
    %4848 = vmatpush1.msra.mxu0 0.0
    %4849 = vmatprep.subr.mxu0 0.0
    %4850 = vmatpush1.msra.mxu0 0.0
    %4851 = vmatprep.subr.mxu0 0.0
    %4852 = vmatpush1.msra.mxu0 0.0
    %4853 = vmatprep.subr.mxu0 0.0
    %4854 = vmatpush1.msra.mxu0 0.0
    %4855 = vmatprep.subr.mxu0 0.0
    %4856 = vmatpush1.msra.mxu0 0.0
    %4857 = vmatprep.subr.mxu0 0.0
    %4858 = vmatpush1.msra.mxu0 0.0
    %4859 = vmatprep.subr.mxu0 0.0
    %4860 = vmatpush1.msra.mxu0 0.0
    %4861 = vmatprep.subr.mxu0 0.0
    %4862 = vmatpush1.msra.mxu0 0.0
    %4863 = vmatprep.subr.mxu0 0.0
    %4864 = vmatpush1.msra.mxu0 0.0
    %4865 = vmatprep.subr.mxu0 0.0
    %4866 = vmatpush1.msra.mxu0 0.0
    %4867 = vmatprep.subr.mxu0 0.0
    %4868 = vmatpush1.msra.mxu0 0.0
    %4869 = vmatprep.subr.mxu0 0.0
    %4870 = vmatpush1.msra.mxu0 0.0
    %4871 = vmatprep.mubr.f32.mxu0 0.0
    %v4872 = vand.u32 %v4800, 4294901760
    %v4873 = vsub.f32 %v4800, %v4872
    %v4874 = vand.u32 %v4873, 4294901760
    %v4875 = vsub.f32 %v4873, %v4874
    %v4876 = vand.u32 %v4875, 4294901760
    %4877 = vmatmul.mubr.f32.gmra.mrb[0].mxu0 %v4876
    %v4878 = vpop.f32.mrb[0].mxu0
    %v4879 = vadd.f32 0.0, %v4878
    %v4880 = vpop.f32.mrb[0].mxu0
    %4881 = vmatprep.mubr.f32.mxu0 0.0
    %v4882 = vand.u32 %v4803, 4294901760
    %v4883 = vsub.f32 %v4803, %v4882
    %v4884 = vand.u32 %v4883, 4294901760
    %v4885 = vsub.f32 %v4883, %v4884
    %v4886 = vand.u32 %v4885, 4294901760
    %4887 = vmatmul.mubr.f32.gmra.mrb[0].mxu0 %v4886
    %v4888 = vpop.f32.mrb[0].mxu0
    %v4889 = vadd.f32 0.0, %v4888
    %v4890 = vpop.f32.mrb[0].mxu0
    %4891 = vdwg.mxu0
    %4892 = vmatprep.subr.mxu0 0.0
    %v4893 = vand.u32 %v1218, 4294901760
    %v4894 = vsub.f32 %v1218, %v4893
    %v4895 = vand.u32 %v4894, 4294901760
    %v4896 = vsub.f32 %v4894, %v4895
    %v4897 = vand.u32 %v4896, 4294901760
    %4898 = vmatpush1.msra.mxu0 %v4897
    %4899 = vmatprep.subr.mxu0 0.0
    %v4900 = vand.u32 %v1224, 4294901760
    %v4901 = vsub.f32 %v1224, %v4900
    %v4902 = vand.u32 %v4901, 4294901760
    %v4903 = vsub.f32 %v4901, %v4902
    %v4904 = vand.u32 %v4903, 4294901760
    %4905 = vmatpush1.msra.mxu0 %v4904
    %4906 = vmatprep.subr.mxu0 0.0
    %4907 = vmatpush1.msra.mxu0 0.0
    %4908 = vmatprep.subr.mxu0 0.0
    %4909 = vmatpush1.msra.mxu0 0.0
    %4910 = vmatprep.subr.mxu0 0.0
    %4911 = vmatpush1.msra.mxu0 0.0
    %4912 = vmatprep.subr.mxu0 0.0
    %4913 = vmatpush1.msra.mxu0 0.0
    %4914 = vmatprep.subr.mxu0 0.0
    %4915 = vmatpush1.msra.mxu0 0.0
    %4916 = vmatprep.subr.mxu0 0.0
    %4917 = vmatpush1.msra.mxu0 0.0
    %4918 = vmatprep.subr.mxu0 0.0
    %4919 = vmatpush1.msra.mxu0 0.0
    %4920 = vmatprep.subr.mxu0 0.0
    %4921 = vmatpush1.msra.mxu0 0.0
    %4922 = vmatprep.subr.mxu0 0.0
    %4923 = vmatpush1.msra.mxu0 0.0
    %4924 = vmatprep.subr.mxu0 0.0
    %4925 = vmatpush1.msra.mxu0 0.0
    %4926 = vmatprep.subr.mxu0 0.0
    %4927 = vmatpush1.msra.mxu0 0.0
    %4928 = vmatprep.subr.mxu0 0.0
    %4929 = vmatpush1.msra.mxu0 0.0
    %4930 = vmatprep.subr.mxu0 0.0
    %4931 = vmatpush1.msra.mxu0 0.0
    %4932 = vmatprep.subr.mxu0 0.0
    %4933 = vmatpush1.msra.mxu0 0.0
    %4934 = vmatprep.subr.mxu0 0.0
    %4935 = vmatpush1.msra.mxu0 0.0
    %4936 = vmatprep.subr.mxu0 0.0
    %4937 = vmatpush1.msra.mxu0 0.0
    %4938 = vmatprep.subr.mxu0 0.0
    %4939 = vmatpush1.msra.mxu0 0.0
    %4940 = vmatprep.subr.mxu0 0.0
    %4941 = vmatpush1.msra.mxu0 0.0
    %4942 = vmatprep.subr.mxu0 0.0
    %4943 = vmatpush1.msra.mxu0 0.0
    %4944 = vmatprep.subr.mxu0 0.0
    %4945 = vmatpush1.msra.mxu0 0.0
    %4946 = vmatprep.subr.mxu0 0.0
    %4947 = vmatpush1.msra.mxu0 0.0
    %4948 = vmatprep.subr.mxu0 0.0
    %4949 = vmatpush1.msra.mxu0 0.0
    %4950 = vmatprep.subr.mxu0 0.0
    %4951 = vmatpush1.msra.mxu0 0.0
    %4952 = vmatprep.subr.mxu0 0.0
    %4953 = vmatpush1.msra.mxu0 0.0
    %4954 = vmatprep.subr.mxu0 0.0
    %4955 = vmatpush1.msra.mxu0 0.0
    %4956 = vmatprep.subr.mxu0 0.0
    %4957 = vmatpush1.msra.mxu0 0.0
    %4958 = vmatprep.subr.mxu0 0.0
    %4959 = vmatpush1.msra.mxu0 0.0
    %4960 = vmatprep.subr.mxu0 0.0
    %4961 = vmatpush1.msra.mxu0 0.0
    %4962 = vmatprep.subr.mxu0 0.0
    %4963 = vmatpush1.msra.mxu0 0.0
    %4964 = vmatprep.subr.mxu0 0.0
    %4965 = vmatpush1.msra.mxu0 0.0
    %4966 = vmatprep.mubr.f32.mxu0 0.0
    %v4967 = vand.u32 %v4800, 4294901760
    %4968 = vmatmul.mubr.f32.gmra.mrb[0].mxu0 %v4967
    %v4969 = vpop.f32.mrb[0].mxu0
    %v4970 = vadd.f32 %v4879, %v4969
    %v4971 = vpop.f32.mrb[0].mxu0
    %4972 = vmatprep.mubr.f32.mxu0 0.0
    %v4973 = vand.u32 %v4803, 4294901760
    %4974 = vmatmul.mubr.f32.gmra.mrb[0].mxu0 %v4973
    %v4975 = vpop.f32.mrb[0].mxu0
    %v4976 = vadd.f32 %v4889, %v4975
    %v4977 = vpop.f32.mrb[0].mxu0
    %4978 = vdwg.mxu0
    %4979 = vmatprep.subr.mxu0 0.0
    %v4980 = vand.u32 %v1218, 4294901760
    %v4981 = vsub.f32 %v1218, %v4980
    %4982 = vmatpush1.msra.mxu0 %v4981
    %4983 = vmatprep.subr.mxu0 0.0
    %v4984 = vand.u32 %v1224, 4294901760
    %v4985 = vsub.f32 %v1224, %v4984
    %4986 = vmatpush1.msra.mxu0 %v4985
    %4987 = vmatprep.subr.mxu0 0.0
    %4988 = vmatpush1.msra.mxu0 0.0
    %4989 = vmatprep.subr.mxu0 0.0
    %4990 = vmatpush1.msra.mxu0 0.0
    %4991 = vmatprep.subr.mxu0 0.0
    %4992 = vmatpush1.msra.mxu0 0.0
    %4993 = vmatprep.subr.mxu0 0.0
    %4994 = vmatpush1.msra.mxu0 0.0
    %4995 = vmatprep.subr.mxu0 0.0
    %4996 = vmatpush1.msra.mxu0 0.0
    %4997 = vmatprep.subr.mxu0 0.0
    %4998 = vmatpush1.msra.mxu0 0.0
    %4999 = vmatprep.subr.mxu0 0.0
    %5000 = vmatpush1.msra.mxu0 0.0
    %5001 = vmatprep.subr.mxu0 0.0
    %5002 = vmatpush1.msra.mxu0 0.0
    %5003 = vmatprep.subr.mxu0 0.0
    %5004 = vmatpush1.msra.mxu0 0.0
    %5005 = vmatprep.subr.mxu0 0.0
    %5006 = vmatpush1.msra.mxu0 0.0
    %5007 = vmatprep.subr.mxu0 0.0
    %5008 = vmatpush1.msra.mxu0 0.0
    %5009 = vmatprep.subr.mxu0 0.0
    %5010 = vmatpush1.msra.mxu0 0.0
    %5011 = vmatprep.subr.mxu0 0.0
    %5012 = vmatpush1.msra.mxu0 0.0
    %5013 = vmatprep.subr.mxu0 0.0
    %5014 = vmatpush1.msra.mxu0 0.0
    %5015 = vmatprep.subr.mxu0 0.0
    %5016 = vmatpush1.msra.mxu0 0.0
    %5017 = vmatprep.subr.mxu0 0.0
    %5018 = vmatpush1.msra.mxu0 0.0
    %5019 = vmatprep.subr.mxu0 0.0
    %5020 = vmatpush1.msra.mxu0 0.0
    %5021 = vmatprep.subr.mxu0 0.0
    %5022 = vmatpush1.msra.mxu0 0.0
    %5023 = vmatprep.subr.mxu0 0.0
    %5024 = vmatpush1.msra.mxu0 0.0
    %5025 = vmatprep.subr.mxu0 0.0
    %5026 = vmatpush1.msra.mxu0 0.0
    %5027 = vmatprep.subr.mxu0 0.0
    %5028 = vmatpush1.msra.mxu0 0.0
    %5029 = vmatprep.subr.mxu0 0.0
    %5030 = vmatpush1.msra.mxu0 0.0
    %5031 = vmatprep.subr.mxu0 0.0
    %5032 = vmatpush1.msra.mxu0 0.0
    %5033 = vmatprep.subr.mxu0 0.0
    %5034 = vmatpush1.msra.mxu0 0.0
    %5035 = vmatprep.subr.mxu0 0.0
    %5036 = vmatpush1.msra.mxu0 0.0
    %5037 = vmatprep.subr.mxu0 0.0
    %5038 = vmatpush1.msra.mxu0 0.0
    %5039 = vmatprep.subr.mxu0 0.0
    %5040 = vmatpush1.msra.mxu0 0.0
    %5041 = vmatprep.subr.mxu0 0.0
    %5042 = vmatpush1.msra.mxu0 0.0
    %5043 = vmatprep.subr.mxu0 0.0
    %5044 = vmatpush1.msra.mxu0 0.0
    %5045 = vmatprep.subr.mxu0 0.0
    %5046 = vmatpush1.msra.mxu0 0.0
    %5047 = vmatprep.mubr.f32.mxu0 0.0
    %v5048 = vand.u32 %v4800, 4294901760
    %v5049 = vsub.f32 %v4800, %v5048
    %5050 = vmatmul.mubr.f32.gmra.mrb[0].mxu0 %v5049
    %v5051 = vpop.f32.mrb[0].mxu0
    %v5052 = vadd.f32 %v4970, %v5051
    %v5053 = vpop.f32.mrb[0].mxu0
    %5054 = vmatprep.mubr.f32.mxu0 0.0
    %v5055 = vand.u32 %v4803, 4294901760
    %v5056 = vsub.f32 %v4803, %v5055
    %5057 = vmatmul.mubr.f32.gmra.mrb[0].mxu0 %v5056
    %v5058 = vpop.f32.mrb[0].mxu0
    %v5059 = vadd.f32 %v4976, %v5058
    %v5060 = vpop.f32.mrb[0].mxu0
    %5061 = vdwg.mxu0
    %5062 = vmatprep.subr.mxu0 0.0
    %v5063 = vand.u32 %v1218, 4294901760
    %5064 = vmatpush1.msra.mxu0 %v5063
    %5065 = vmatprep.subr.mxu0 0.0
    %v5066 = vand.u32 %v1224, 4294901760
    %5067 = vmatpush1.msra.mxu0 %v5066
    %5068 = vmatprep.subr.mxu0 0.0
    %5069 = vmatpush1.msra.mxu0 0.0
    %5070 = vmatprep.subr.mxu0 0.0
    %5071 = vmatpush1.msra.mxu0 0.0
    %5072 = vmatprep.subr.mxu0 0.0
    %5073 = vmatpush1.msra.mxu0 0.0
    %5074 = vmatprep.subr.mxu0 0.0
    %5075 = vmatpush1.msra.mxu0 0.0
    %5076 = vmatprep.subr.mxu0 0.0
    %5077 = vmatpush1.msra.mxu0 0.0
    %5078 = vmatprep.subr.mxu0 0.0
    %5079 = vmatpush1.msra.mxu0 0.0
    %5080 = vmatprep.subr.mxu0 0.0
    %5081 = vmatpush1.msra.mxu0 0.0
    %5082 = vmatprep.subr.mxu0 0.0
    %5083 = vmatpush1.msra.mxu0 0.0
    %5084 = vmatprep.subr.mxu0 0.0
    %5085 = vmatpush1.msra.mxu0 0.0
    %5086 = vmatprep.subr.mxu0 0.0
    %5087 = vmatpush1.msra.mxu0 0.0
    %5088 = vmatprep.subr.mxu0 0.0
    %5089 = vmatpush1.msra.mxu0 0.0
    %5090 = vmatprep.subr.mxu0 0.0
    %5091 = vmatpush1.msra.mxu0 0.0
    %5092 = vmatprep.subr.mxu0 0.0
    %5093 = vmatpush1.msra.mxu0 0.0
    %5094 = vmatprep.subr.mxu0 0.0
    %5095 = vmatpush1.msra.mxu0 0.0
    %5096 = vmatprep.subr.mxu0 0.0
    %5097 = vmatpush1.msra.mxu0 0.0
    %5098 = vmatprep.subr.mxu0 0.0
    %5099 = vmatpush1.msra.mxu0 0.0
    %5100 = vmatprep.subr.mxu0 0.0
    %5101 = vmatpush1.msra.mxu0 0.0
    %5102 = vmatprep.subr.mxu0 0.0
    %5103 = vmatpush1.msra.mxu0 0.0
    %5104 = vmatprep.subr.mxu0 0.0
    %5105 = vmatpush1.msra.mxu0 0.0
    %5106 = vmatprep.subr.mxu0 0.0
    %5107 = vmatpush1.msra.mxu0 0.0
    %5108 = vmatprep.subr.mxu0 0.0
    %5109 = vmatpush1.msra.mxu0 0.0
    %5110 = vmatprep.subr.mxu0 0.0
    %5111 = vmatpush1.msra.mxu0 0.0
    %5112 = vmatprep.subr.mxu0 0.0
    %5113 = vmatpush1.msra.mxu0 0.0
    %5114 = vmatprep.subr.mxu0 0.0
    %5115 = vmatpush1.msra.mxu0 0.0
    %5116 = vmatprep.subr.mxu0 0.0
    %5117 = vmatpush1.msra.mxu0 0.0
    %5118 = vmatprep.subr.mxu0 0.0
    %5119 = vmatpush1.msra.mxu0 0.0
    %5120 = vmatprep.subr.mxu0 0.0
    %5121 = vmatpush1.msra.mxu0 0.0
    %5122 = vmatprep.subr.mxu0 0.0
    %5123 = vmatpush1.msra.mxu0 0.0
    %5124 = vmatprep.subr.mxu0 0.0
    %5125 = vmatpush1.msra.mxu0 0.0
    %5126 = vmatprep.subr.mxu0 0.0
    %5127 = vmatpush1.msra.mxu0 0.0
    %5128 = vmatprep.mubr.f32.mxu0 0.0
    %v5129 = vand.u32 %v4800, 4294901760
    %v5130 = vsub.f32 %v4800, %v5129
    %v5131 = vand.u32 %v5130, 4294901760
    %5132 = vmatmul.mubr.f32.gmra.mrb[0].mxu0 %v5131
    %v5133 = vpop.f32.mrb[0].mxu0
    %v5134 = vadd.f32 %v5052, %v5133
    %v5135 = vpop.f32.mrb[0].mxu0
    %5136 = vmatprep.mubr.f32.mxu0 0.0
    %v5137 = vand.u32 %v4803, 4294901760
    %v5138 = vsub.f32 %v4803, %v5137
    %v5139 = vand.u32 %v5138, 4294901760
    %5140 = vmatmul.mubr.f32.gmra.mrb[0].mxu0 %v5139
    %v5141 = vpop.f32.mrb[0].mxu0
    %v5142 = vadd.f32 %v5059, %v5141
    %v5143 = vpop.f32.mrb[0].mxu0
    %5144 = vdwg.mxu0
    %5145 = vmatprep.subr.mxu0 0.0
    %v5146 = vand.u32 %v1218, 4294901760
    %v5147 = vsub.f32 %v1218, %v5146
    %v5148 = vand.u32 %v5147, 4294901760
    %5149 = vmatpush1.msra.mxu0 %v5148
    %5150 = vmatprep.subr.mxu0 0.0
    %v5151 = vand.u32 %v1224, 4294901760
    %v5152 = vsub.f32 %v1224, %v5151
    %v5153 = vand.u32 %v5152, 4294901760
    %5154 = vmatpush1.msra.mxu0 %v5153
    %5155 = vmatprep.subr.mxu0 0.0
    %5156 = vmatpush1.msra.mxu0 0.0
    %5157 = vmatprep.subr.mxu0 0.0
    %5158 = vmatpush1.msra.mxu0 0.0
    %5159 = vmatprep.subr.mxu0 0.0
    %5160 = vmatpush1.msra.mxu0 0.0
    %5161 = vmatprep.subr.mxu0 0.0
    %5162 = vmatpush1.msra.mxu0 0.0
    %5163 = vmatprep.subr.mxu0 0.0
    %5164 = vmatpush1.msra.mxu0 0.0
    %5165 = vmatprep.subr.mxu0 0.0
    %5166 = vmatpush1.msra.mxu0 0.0
    %5167 = vmatprep.subr.mxu0 0.0
    %5168 = vmatpush1.msra.mxu0 0.0
    %5169 = vmatprep.subr.mxu0 0.0
    %5170 = vmatpush1.msra.mxu0 0.0
    %5171 = vmatprep.subr.mxu0 0.0
    %5172 = vmatpush1.msra.mxu0 0.0
    %5173 = vmatprep.subr.mxu0 0.0
    %5174 = vmatpush1.msra.mxu0 0.0
    %5175 = vmatprep.subr.mxu0 0.0
    %5176 = vmatpush1.msra.mxu0 0.0
    %5177 = vmatprep.subr.mxu0 0.0
    %5178 = vmatpush1.msra.mxu0 0.0
    %5179 = vmatprep.subr.mxu0 0.0
    %5180 = vmatpush1.msra.mxu0 0.0
    %5181 = vmatprep.subr.mxu0 0.0
    %5182 = vmatpush1.msra.mxu0 0.0
    %5183 = vmatprep.subr.mxu0 0.0
    %5184 = vmatpush1.msra.mxu0 0.0
    %5185 = vmatprep.subr.mxu0 0.0
    %5186 = vmatpush1.msra.mxu0 0.0
    %5187 = vmatprep.subr.mxu0 0.0
    %5188 = vmatpush1.msra.mxu0 0.0
    %5189 = vmatprep.subr.mxu0 0.0
    %5190 = vmatpush1.msra.mxu0 0.0
    %5191 = vmatprep.subr.mxu0 0.0
    %5192 = vmatpush1.msra.mxu0 0.0
    %5193 = vmatprep.subr.mxu0 0.0
    %5194 = vmatpush1.msra.mxu0 0.0
    %5195 = vmatprep.subr.mxu0 0.0
    %5196 = vmatpush1.msra.mxu0 0.0
    %5197 = vmatprep.subr.mxu0 0.0
    %5198 = vmatpush1.msra.mxu0 0.0
    %5199 = vmatprep.subr.mxu0 0.0
    %5200 = vmatpush1.msra.mxu0 0.0
    %5201 = vmatprep.subr.mxu0 0.0
    %5202 = vmatpush1.msra.mxu0 0.0
    %5203 = vmatprep.subr.mxu0 0.0
    %5204 = vmatpush1.msra.mxu0 0.0
    %5205 = vmatprep.subr.mxu0 0.0
    %5206 = vmatpush1.msra.mxu0 0.0
    %5207 = vmatprep.subr.mxu0 0.0
    %5208 = vmatpush1.msra.mxu0 0.0
    %5209 = vmatprep.subr.mxu0 0.0
    %5210 = vmatpush1.msra.mxu0 0.0
    %5211 = vmatprep.subr.mxu0 0.0
    %5212 = vmatpush1.msra.mxu0 0.0
    %5213 = vmatprep.subr.mxu0 0.0
    %5214 = vmatpush1.msra.mxu0 0.0
    %5215 = vmatprep.mubr.f32.mxu0 0.0
    %v5216 = vand.u32 %v4800, 4294901760
    %5217 = vmatmul.mubr.f32.gmra.mrb[0].mxu0 %v5216
    %v5218 = vpop.f32.mrb[0].mxu0
    %v5219 = vadd.f32 %v5134, %v5218
    %v5220 = vpop.f32.mrb[0].mxu0
    %5221 = vmatprep.mubr.f32.mxu0 0.0
    %v5222 = vand.u32 %v4803, 4294901760
    %5223 = vmatmul.mubr.f32.gmra.mrb[0].mxu0 %v5222
    %v5224 = vpop.f32.mrb[0].mxu0
    %v5225 = vadd.f32 %v5142, %v5224
    %v5226 = vpop.f32.mrb[0].mxu0
    %5227 = vdwg.mxu0
    %5228 = vmatprep.subr.mxu0 0.0
    %v5229 = vand.u32 %v1218, 4294901760
    %5230 = vmatpush1.msra.mxu0 %v5229
    %5231 = vmatprep.subr.mxu0 0.0
    %v5232 = vand.u32 %v1224, 4294901760
    %5233 = vmatpush1.msra.mxu0 %v5232
    %5234 = vmatprep.subr.mxu0 0.0
    %5235 = vmatpush1.msra.mxu0 0.0
    %5236 = vmatprep.subr.mxu0 0.0
    %5237 = vmatpush1.msra.mxu0 0.0
    %5238 = vmatprep.subr.mxu0 0.0
    %5239 = vmatpush1.msra.mxu0 0.0
    %5240 = vmatprep.subr.mxu0 0.0
    %5241 = vmatpush1.msra.mxu0 0.0
    %5242 = vmatprep.subr.mxu0 0.0
    %5243 = vmatpush1.msra.mxu0 0.0
    %5244 = vmatprep.subr.mxu0 0.0
    %5245 = vmatpush1.msra.mxu0 0.0
    %5246 = vmatprep.subr.mxu0 0.0
    %5247 = vmatpush1.msra.mxu0 0.0
    %5248 = vmatprep.subr.mxu0 0.0
    %5249 = vmatpush1.msra.mxu0 0.0
    %5250 = vmatprep.subr.mxu0 0.0
    %5251 = vmatpush1.msra.mxu0 0.0
    %5252 = vmatprep.subr.mxu0 0.0
    %5253 = vmatpush1.msra.mxu0 0.0
    %5254 = vmatprep.subr.mxu0 0.0
    %5255 = vmatpush1.msra.mxu0 0.0
    %5256 = vmatprep.subr.mxu0 0.0
    %5257 = vmatpush1.msra.mxu0 0.0
    %5258 = vmatprep.subr.mxu0 0.0
    %5259 = vmatpush1.msra.mxu0 0.0
    %5260 = vmatprep.subr.mxu0 0.0
    %5261 = vmatpush1.msra.mxu0 0.0
    %5262 = vmatprep.subr.mxu0 0.0
    %5263 = vmatpush1.msra.mxu0 0.0
    %5264 = vmatprep.subr.mxu0 0.0
    %5265 = vmatpush1.msra.mxu0 0.0
    %5266 = vmatprep.subr.mxu0 0.0
    %5267 = vmatpush1.msra.mxu0 0.0
    %5268 = vmatprep.subr.mxu0 0.0
    %5269 = vmatpush1.msra.mxu0 0.0
    %5270 = vmatprep.subr.mxu0 0.0
    %5271 = vmatpush1.msra.mxu0 0.0
    %5272 = vmatprep.subr.mxu0 0.0
    %5273 = vmatpush1.msra.mxu0 0.0
    %5274 = vmatprep.subr.mxu0 0.0
    %5275 = vmatpush1.msra.mxu0 0.0
    %5276 = vmatprep.subr.mxu0 0.0
    %5277 = vmatpush1.msra.mxu0 0.0
    %5278 = vmatprep.subr.mxu0 0.0
    %5279 = vmatpush1.msra.mxu0 0.0
    %5280 = vmatprep.subr.mxu0 0.0
    %5281 = vmatpush1.msra.mxu0 0.0
    %5282 = vmatprep.subr.mxu0 0.0
    %5283 = vmatpush1.msra.mxu0 0.0
    %5284 = vmatprep.subr.mxu0 0.0
    %5285 = vmatpush1.msra.mxu0 0.0
    %5286 = vmatprep.subr.mxu0 0.0
    %5287 = vmatpush1.msra.mxu0 0.0
    %5288 = vmatprep.subr.mxu0 0.0
    %5289 = vmatpush1.msra.mxu0 0.0
    %5290 = vmatprep.subr.mxu0 0.0
    %5291 = vmatpush1.msra.mxu0 0.0
    %5292 = vmatprep.subr.mxu0 0.0
    %5293 = vmatpush1.msra.mxu0 0.0
    %5294 = vmatprep.mubr.f32.mxu0 0.0
    %v5295 = vand.u32 %v4800, 4294901760
    %5296 = vmatmul.mubr.f32.gmra.mrb[0].mxu0 %v5295
    %v5297 = vpop.f32.mrb[0].mxu0
    %v5298 = vadd.f32 %v5219, %v5297
    %v5299 = vpop.f32.mrb[0].mxu0
    %5300 = vmatprep.mubr.f32.mxu0 0.0
    %v5301 = vand.u32 %v4803, 4294901760
    %5302 = vmatmul.mubr.f32.gmra.mrb[0].mxu0 %v5301
    %v5303 = vpop.f32.mrb[0].mxu0
    %v5304 = vadd.f32 %v5225, %v5303
    %v5305 = vpop.f32.mrb[0].mxu0
    %5306 = vdwg.mxu0
    %5307 = vst.msk [vmem:[#allocation8] sm:$0xff] %vm74, %v1742
    %5308 = vst.msk [vmem:[#allocation8 + $0x8] sm:$0xff] %vm74, %v1748
    %5309 = vst.msk [vmem:[#allocation8 + $0x10] sm:$0xff] %vm74, %v2250
    %5310 = vst.msk [vmem:[#allocation8 + $0x18] sm:$0xff] %vm74, %v2256
    %5311 = vst.msk [vmem:[#allocation8 + $0x20] sm:$0xff] %vm74, %v2758
    %5312 = vst.msk [vmem:[#allocation8 + $0x28] sm:$0xff] %vm74, %v2764
    %5313 = vst.msk [vmem:[#allocation8 + $0x30] sm:$0xff] %vm74, %v3266
    %5314 = vst.msk [vmem:[#allocation8 + $0x38] sm:$0xff] %vm74, %v3272
    %5315 = vst.msk [vmem:[#allocation8 + $0x40] sm:$0xff] %vm74, %v3774
    %5316 = vst.msk [vmem:[#allocation8 + $0x48] sm:$0xff] %vm74, %v3780
    %5317 = vst.msk [vmem:[#allocation8 + $0x50] sm:$0xff] %vm74, %v4282
    %5318 = vst.msk [vmem:[#allocation8 + $0x58] sm:$0xff] %vm74, %v4288
    %5319 = vst.msk [vmem:[#allocation8 + $0x60] sm:$0xff] %vm74, %v4790
    %5320 = vst.msk [vmem:[#allocation8 + $0x68] sm:$0xff] %vm74, %v4796
    %5321 = vst.msk [vmem:[#allocation8 + $0x70] sm:$0xff] %vm74, %v5298
    %5322 = vst.msk [vmem:[#allocation8 + $0x78] sm:$0xff] %vm74, %v5304
    // Predicated region
    $region26: #{tpu_custom_call.1} parent=1 // pred_check
      _
    $region27: #{tpu_custom_call.1} parent=1 // pred_check_branch
      %5324 = sbr.rel (0) target = $region29
    $region28: #{tpu_custom_call.1} parent=1 // pred_region
      %s5326 = ssub.s32 2048, 2048
      %5327 = vsyncadd [#allocation4], %s5326
      %s5328 = sshll.u32 [#allocation8], 4
      %s5329 = int_to_ptr.vmem [resolvable:$true] %s5328
      %5334 = dma.vmem_to_hbm [thread:$0]  %s5329, 2048, %s3, [#allocation4], 128, 128, 8
    $region29: #{tpu_custom_call.1} parent=1 // pred_fallthru
      _
    // Predicated region
    $region30: #{tpu_custom_call.1} parent=1 // pred_check
      _
    $region31: #{tpu_custom_call.1} parent=1 // pred_check_branch
      %5336 = sbr.rel (0) target = $region33
    $region32: #{tpu_custom_call.1} parent=1 // pred_region
      %5337 = dma.done [#allocation4], 2048
    $region33: #{tpu_custom_call.1} parent=1 // pred_fallthru
      _
    %5338 = vsyncpa [#allocation3], 1
    %5339 = vsyncpa [#allocation6], 1
    %5340 = vsyncpa [#allocation4], 1

</llo_original>
